<compile_context>
chip_gen: v7x
topology: tpu7x:2x2x1
jax: 0.10.0
libtpu: 0.0.40
codegen_flags: <defaults>
</compile_context>

<pallas_src>
import functools

import jax
import jax.numpy as jnp
from jax import lax
from jax.experimental import pallas as pl
from jax.experimental.pallas import tpu as pltpu


def _round_up(x, m):
    return ((x + m - 1) // m) * m


def _conv_block_kernel(mask_ref, x_ref, w1_ref, w2_ref, o_ref, z_ext_ref, *,
                       H, W, NB, C_in, C_out, Q, S, mxu_dtype):
    """Processes NB batch elements (one Q-lane slab each) per grid step.

    mask_ref : (1, P)             1.0 on true-interior pixels of the padded grid
    x_ref    : (C_in,  NB*Q)      halo-extended input slabs (channel-major)
    w1_ref   : (9, C_out, C_in)   conv1 weights, one (C_out, C_in) matrix per tap
    w2_ref   : (9, C_out, C_out)  conv2 weights
    o_ref    : (NB, C_out, P)     output on the padded flat grid (border junk
                                  is already zeroed; wrapper drops the border)
    z_ext_ref: (C_out, NB*Q)      VMEM scratch: conv1 activation in slab layout
    where Hp=H+2, Wp=W+2, P=Hp*Wp, S = lane-aligned per-slab halo (>= Wp+1).
    """
    Hp, Wp = H + 2, W + 2
    P = Hp * Wp
    L = (NB - 1) * Q + P               # lane span covering every slab's P pixels
    eps = 1e-5
    neg_slope = 0.2
    inv_n = 1.0 / (H * W)

    # Static lane offsets of the 9 taps relative to the output pixel.
    offs = [(dy - 1) * Wp + (dx - 1) for dy in range(3) for dx in range(3)]

    # Hoist the mask broadcast once; reused by both norms and every batch elem.
    maskb = jnp.broadcast_to(mask_ref[...], (C_out, P))

    def conv(src, w_ref):
        # 9 accumulated MXU matmuls over lane-shifted slices; covers all NB
        # batch elements in one push per tap (batch folded into lanes).
        acc = None
        for t, off in enumerate(offs):
            tap = src[:, S + off: S + off + L].astype(mxu_dtype)
            d = jnp.dot(w_ref[t].astype(mxu_dtype), tap,
                        preferred_element_type=jnp.float32)
            acc = d if acc is None else acc + d
        return acc                                      # (C_out, L) f32

    def inorm_lrelu(z_n):
        # Two-pass masked InstanceNorm2d + LeakyReLU(0.2).  `cen` is already
        # zero on the padded border, which doubles as conv2's zero padding.
        s1 = jnp.sum(z_n * maskb, axis=1, keepdims=True)          # (C_out, 1)
        mean = s1 * inv_n
        cen = (z_n - mean) * maskb
        var = jnp.sum(cen * cen, axis=1, keepdims=True) * inv_n   # biased
        y = cen * lax.rsqrt(var + eps)
        return jnp.where(y >= 0, y, neg_slope * y)

    # Dropout2d: identity in eval mode.
    # TODO(synk): training-mode (per-channel) Dropout2d would need pltpu.prng_*.

    # Halo regions of the scratch must be zero; interiors are overwritten below.
    # (Zeroed unconditionally so 'parallel' grid splitting stays safe.)
    z_ext_ref[...] = jnp.zeros_like(z_ext_ref)

    z1 = conv(x_ref[...], w1_ref)                       # (C_out, L)
    for n in range(NB):
        y1 = inorm_lrelu(z1[:, n * Q: n * Q + P])       # (C_out, P)
        # Lane-aligned interior store (n*Q + S is a multiple of 128).
        z_ext_ref[:, n * Q + S: n * Q + S + P] = y1

    z2 = conv(z_ext_ref[...], w2_ref)                   # (C_out, L)
    for n in range(NB):
        y2 = inorm_lrelu(z2[:, n * Q: n * Q + P])       # (C_out, P)
        o_ref[n] = y2.astype(o_ref.dtype)


def conv_block(x_nchw, w1_oihw, w2_oihw, *, batch_tile=8, mxu_dtype=jnp.float32):
    """ConvBlock forward.  x_nchw: (N, C_in, H, W) -> (N, C_out, H, W)."""
    N, C_in, H, W = x_nchw.shape
    C_out = w1_oihw.shape[0]
    Hp, Wp = H + 2, W + 2
    P = Hp * Wp
    B = Wp + 1                                  # max 3x3 tap reach on the flat axis
    S = _round_up(B, 128)                       # per-slab leading halo (lane aligned)
    Q = _round_up(S + P + B, 128)               # lane-aligned slab width per element

    NB = max(1, min(batch_tile, N))             # batch elements per grid step
    G = -(-N // NB)                             # grid size
    N_pad = G * NB

    # Channel-major, batch folded into the flat lane axis, one Q-lane slab per
    # batch element: [S zeros | padded Hp*Wp image | trailing zeros].
    # TODO(synk): at UNet scale build this halo in-kernel (manual DMA from an
    # unpadded pl.ANY input) instead of wrapper-side pads over HBM.
    xt = jnp.transpose(x_nchw.astype(jnp.float32), (1, 0, 2, 3))    # (C_in,N,H,W)
    xt = jnp.pad(xt, ((0, 0), (0, N_pad - N), (1, 1), (1, 1)))      # spatial pad
    xt = jnp.pad(xt.reshape(C_in, N_pad, P), ((0, 0), (0, 0), (S, Q - S - P)))
    x_flat = xt.reshape(C_in, N_pad * Q)

    # One (C_out, C) weight matrix per 3x3 tap (dy-major, dx-minor order).
    w1_taps = jnp.transpose(w1_oihw, (2, 3, 0, 1)).reshape(9, C_out, C_in)
    w2_taps = jnp.transpose(w2_oihw, (2, 3, 0, 1)).reshape(9, C_out, C_out)
    w1_taps = w1_taps.astype(mxu_dtype)
    w2_taps = w2_taps.astype(mxu_dtype)

    # Interior (true H x W pixels) mask over the flattened padded grid.
    rows = jnp.arange(Hp)
    cols = jnp.arange(Wp)
    m2 = (((rows >= 1) & (rows <= H))[:, None]
          & ((cols >= 1) & (cols <= W))[None, :])
    mask = m2.reshape(1, P).astype(jnp.float32)

    kernel = functools.partial(
        _conv_block_kernel, H=H, W=W, NB=NB, C_in=C_in, C_out=C_out,
        Q=Q, S=S, mxu_dtype=mxu_dtype)

    out_flat = pl.pallas_call(
        kernel,
        out_shape=jax.ShapeDtypeStruct((N_pad, C_out, P), jnp.float32),
        grid_spec=pltpu.PrefetchScalarGridSpec(
            num_scalar_prefetch=0,
            grid=(G,),
            in_specs=[
                pl.BlockSpec((1, P), lambda g: (0, 0)),               # mask
                pl.BlockSpec((C_in, NB * Q), lambda g: (0, g)),       # x slabs
                pl.BlockSpec((9, C_out, C_in), lambda g: (0, 0, 0)),  # w1 taps
                pl.BlockSpec((9, C_out, C_out), lambda g: (0, 0, 0)), # w2 taps
            ],
            out_specs=pl.BlockSpec((NB, C_out, P), lambda g: (g, 0, 0)),
            scratch_shapes=[pltpu.VMEM((C_out, NB * Q), jnp.float32)],
        ),
        compiler_params=pltpu.CompilerParams(
            dimension_semantics=("parallel",),
        ),
    )(mask, x_flat, w1_taps, w2_taps)

    # Drop padded batches / border and return NCHW.
    out = out_flat[:N].reshape(N, C_out, Hp, Wp)[:, :, 1:H + 1, 1:W + 1]
    return out


def _reference(x_nchw, w1_oihw, w2_oihw):
    """Pure-JAX reference matching PyTorch semantics (eval mode)."""
    eps = 1e-5

    def conv(x, w):
        return lax.conv_general_dilated(
            x, w, window_strides=(1, 1), padding=((1, 1), (1, 1)),
            dimension_numbers=("NCHW", "OIHW", "NCHW"),
            precision=lax.Precision.HIGHEST,
        )

    def inorm_lrelu(x):
        mean = jnp.mean(x, axis=(2, 3), keepdims=True)
        var = jnp.mean((x - mean) ** 2, axis=(2, 3), keepdims=True)
        y = (x - mean) * lax.rsqrt(var + eps)
        return jnp.where(y >= 0, y, 0.2 * y)

    h = inorm_lrelu(conv(x_nchw, w1_oihw))
    return inorm_lrelu(conv(h, w2_oihw))


if __name__ == "__main__":
    key = jax.random.PRNGKey(0)
    k_x, k_w1, k_w2 = jax.random.split(key, 3)

    N, C_in, C_out, H, W = 2, 4, 8, 16, 16
    drop_prob = 0.0  # Dropout2d is identity at inference

    x = jax.random.normal(k_x, (N, C_in, H, W), dtype=jnp.float32)
    # Deterministic synthetic weights (Conv2d kernel_size=3, bias=False).
    w1 = jax.random.normal(k_w1, (C_out, C_in, 3, 3), dtype=jnp.float32) * 0.1
    w2 = jax.random.normal(k_w2, (C_out, C_out, 3, 3), dtype=jnp.float32) * 0.1

    out = jax.block_until_ready(jax.jit(conv_block)(x, w1, w2))

    ref = jax.block_until_ready(_reference(x, w1, w2))
    assert out.shape == (N, C_out, H, W)
    max_err = float(jnp.max(jnp.abs(out - ref)))
    assert jnp.allclose(out, ref, atol=3e-4, rtol=3e-4), (
        f"mismatch vs reference (max abs err {max_err})")

    print("KERNEL_OK")
</pallas_src>

<mosaic_0001>
module attributes {stable_mosaic.version = 11 : i64} {
  func.func @_conv_block_kernel(%arg0: i32, %arg1: memref<1x324xf32, #tpu.memory_space<vmem>>, %arg2: memref<4x1024xf32, #tpu.memory_space<vmem>>, %arg3: memref<9x8x4xf32, #tpu.memory_space<vmem>>, %arg4: memref<9x8x8xf32, #tpu.memory_space<vmem>>, %arg5: memref<2x8x324xf32, #tpu.memory_space<vmem>>, %arg6: memref<8x1024xf32, #tpu.memory_space<vmem>>) attributes {dimension_semantics = [#tpu.dimension_semantics<parallel>], iteration_bounds = array<i64: 1>, scalar_prefetch = 0 : i64, scratch_operands = 1 : i64, tpu.core_type = #tpu.core_type<tc>, window_params = [{pipeline_mode = #tpu.pipeline_mode<synchronous>, transform_indices = @transform_0, window_bounds = array<i64: 1, 324>}, {transform_indices = @transform_1, window_bounds = array<i64: 4, 1024>}, {pipeline_mode = #tpu.pipeline_mode<synchronous>, transform_indices = @transform_2, window_bounds = array<i64: 9, 8, 4>}, {pipeline_mode = #tpu.pipeline_mode<synchronous>, transform_indices = @transform_3, window_bounds = array<i64: 9, 8, 8>}, {transform_indices = @transform_4, window_bounds = array<i64: 2, 8, 324>}]} {
    %c0 = arith.constant 0 : index
    %c0_0 = arith.constant 0 : index
    %0 = vector.load %arg1[%c0, %c0_0] : memref<1x324xf32, #tpu.memory_space<vmem>>, vector<1x324xf32>
    %1 = vector.shape_cast %0 : vector<1x324xf32> to vector<1x324xf32>
    %2 = vector.broadcast %1 : vector<1x324xf32> to vector<8x324xf32>
    %cst = arith.constant 0.000000e+00 : f32
    %3 = vector.broadcast %cst : f32 to vector<8x1024xf32>
    %c0_1 = arith.constant 0 : index
    %c0_2 = arith.constant 0 : index
    %4 = vector.load %arg6[%c0_1, %c0_2] : memref<8x1024xf32, #tpu.memory_space<vmem>>, vector<8x1024xf32>
    tpu.vector_store %arg6[%c0_1, %c0_2], %3 {strides = array<i32>} : memref<8x1024xf32, #tpu.memory_space<vmem>>, vector<8x1024xf32>,
    %c0_3 = arith.constant 0 : index
    %c0_4 = arith.constant 0 : index
    %5 = vector.load %arg2[%c0_3, %c0_4] : memref<4x1024xf32, #tpu.memory_space<vmem>>, vector<4x1024xf32>
    %6 = vector.extract_strided_slice %5 {offsets = [0, 109], sizes = [4, 836], strides = [1, 1]} : vector<4x1024xf32> to vector<4x836xf32>
    %c0_5 = arith.constant 0 : index
    %c0_6 = arith.constant 0 : index
    %c0_7 = arith.constant 0 : index
    %7 = vector.load %arg3[%c0_5, %c0_6, %c0_7] : memref<9x8x4xf32, #tpu.memory_space<vmem>>, vector<1x8x4xf32>
    %8 = vector.shape_cast %7 : vector<1x8x4xf32> to vector<8x4xf32>
    %cst_8 = arith.constant dense<0.000000e+00> : vector<8x836xf32>
    %9 = tpu.matmul %8, %6, %cst_8 {dimension_numbers = #tpu.dot_dimension_numbers<[1], [0], [0], [1], [0, 0, 1, 1], [], []>} : vector<8x4xf32>, vector<4x836xf32>, vector<8x836xf32> -> vector<8x836xf32>
    %10 = vector.extract_strided_slice %5 {offsets = [0, 110], sizes = [4, 836], strides = [1, 1]} : vector<4x1024xf32> to vector<4x836xf32>
    %c1 = arith.constant 1 : index
    %c0_9 = arith.constant 0 : index
    %c0_10 = arith.constant 0 : index
    %11 = vector.load %arg3[%c1, %c0_9, %c0_10] : memref<9x8x4xf32, #tpu.memory_space<vmem>>, vector<1x8x4xf32>
    %12 = vector.shape_cast %11 : vector<1x8x4xf32> to vector<8x4xf32>
    %cst_11 = arith.constant dense<0.000000e+00> : vector<8x836xf32>
    %13 = tpu.matmul %12, %10, %cst_11 {dimension_numbers = #tpu.dot_dimension_numbers<[1], [0], [0], [1], [0, 0, 1, 1], [], []>} : vector<8x4xf32>, vector<4x836xf32>, vector<8x836xf32> -> vector<8x836xf32>
    %14 = arith.addf %9, %13 : vector<8x836xf32>
    %15 = vector.extract_strided_slice %5 {offsets = [0, 111], sizes = [4, 836], strides = [1, 1]} : vector<4x1024xf32> to vector<4x836xf32>
    %c2 = arith.constant 2 : index
    %c0_12 = arith.constant 0 : index
    %c0_13 = arith.constant 0 : index
    %16 = vector.load %arg3[%c2, %c0_12, %c0_13] : memref<9x8x4xf32, #tpu.memory_space<vmem>>, vector<1x8x4xf32>
    %17 = vector.shape_cast %16 : vector<1x8x4xf32> to vector<8x4xf32>
    %cst_14 = arith.constant dense<0.000000e+00> : vector<8x836xf32>
    %18 = tpu.matmul %17, %15, %cst_14 {dimension_numbers = #tpu.dot_dimension_numbers<[1], [0], [0], [1], [0, 0, 1, 1], [], []>} : vector<8x4xf32>, vector<4x836xf32>, vector<8x836xf32> -> vector<8x836xf32>
    %19 = arith.addf %14, %18 : vector<8x836xf32>
    %20 = vector.extract_strided_slice %5 {offsets = [0, 127], sizes = [4, 836], strides = [1, 1]} : vector<4x1024xf32> to vector<4x836xf32>
    %c3 = arith.constant 3 : index
    %c0_15 = arith.constant 0 : index
    %c0_16 = arith.constant 0 : index
    %21 = vector.load %arg3[%c3, %c0_15, %c0_16] : memref<9x8x4xf32, #tpu.memory_space<vmem>>, vector<1x8x4xf32>
    %22 = vector.shape_cast %21 : vector<1x8x4xf32> to vector<8x4xf32>
    %cst_17 = arith.constant dense<0.000000e+00> : vector<8x836xf32>
    %23 = tpu.matmul %22, %20, %cst_17 {dimension_numbers = #tpu.dot_dimension_numbers<[1], [0], [0], [1], [0, 0, 1, 1], [], []>} : vector<8x4xf32>, vector<4x836xf32>, vector<8x836xf32> -> vector<8x836xf32>
    %24 = arith.addf %19, %23 : vector<8x836xf32>
    %25 = vector.extract_strided_slice %5 {offsets = [0, 128], sizes = [4, 836], strides = [1, 1]} : vector<4x1024xf32> to vector<4x836xf32>
    %c4 = arith.constant 4 : index
    %c0_18 = arith.constant 0 : index
    %c0_19 = arith.constant 0 : index
    %26 = vector.load %arg3[%c4, %c0_18, %c0_19] : memref<9x8x4xf32, #tpu.memory_space<vmem>>, vector<1x8x4xf32>
    %27 = vector.shape_cast %26 : vector<1x8x4xf32> to vector<8x4xf32>
    %cst_20 = arith.constant dense<0.000000e+00> : vector<8x836xf32>
    %28 = tpu.matmul %27, %25, %cst_20 {dimension_numbers = #tpu.dot_dimension_numbers<[1], [0], [0], [1], [0, 0, 1, 1], [], []>} : vector<8x4xf32>, vector<4x836xf32>, vector<8x836xf32> -> vector<8x836xf32>
    %29 = arith.addf %24, %28 : vector<8x836xf32>
    %30 = vector.extract_strided_slice %5 {offsets = [0, 129], sizes = [4, 836], strides = [1, 1]} : vector<4x1024xf32> to vector<4x836xf32>
    %c5 = arith.constant 5 : index
    %c0_21 = arith.constant 0 : index
    %c0_22 = arith.constant 0 : index
    %31 = vector.load %arg3[%c5, %c0_21, %c0_22] : memref<9x8x4xf32, #tpu.memory_space<vmem>>, vector<1x8x4xf32>
    %32 = vector.shape_cast %31 : vector<1x8x4xf32> to vector<8x4xf32>
    %cst_23 = arith.constant dense<0.000000e+00> : vector<8x836xf32>
    %33 = tpu.matmul %32, %30, %cst_23 {dimension_numbers = #tpu.dot_dimension_numbers<[1], [0], [0], [1], [0, 0, 1, 1], [], []>} : vector<8x4xf32>, vector<4x836xf32>, vector<8x836xf32> -> vector<8x836xf32>
    %34 = arith.addf %29, %33 : vector<8x836xf32>
    %35 = vector.extract_strided_slice %5 {offsets = [0, 145], sizes = [4, 836], strides = [1, 1]} : vector<4x1024xf32> to vector<4x836xf32>
    %c6 = arith.constant 6 : index
    %c0_24 = arith.constant 0 : index
    %c0_25 = arith.constant 0 : index
    %36 = vector.load %arg3[%c6, %c0_24, %c0_25] : memref<9x8x4xf32, #tpu.memory_space<vmem>>, vector<1x8x4xf32>
    %37 = vector.shape_cast %36 : vector<1x8x4xf32> to vector<8x4xf32>
    %cst_26 = arith.constant dense<0.000000e+00> : vector<8x836xf32>
    %38 = tpu.matmul %37, %35, %cst_26 {dimension_numbers = #tpu.dot_dimension_numbers<[1], [0], [0], [1], [0, 0, 1, 1], [], []>} : vector<8x4xf32>, vector<4x836xf32>, vector<8x836xf32> -> vector<8x836xf32>
    %39 = arith.addf %34, %38 : vector<8x836xf32>
    %40 = vector.extract_strided_slice %5 {offsets = [0, 146], sizes = [4, 836], strides = [1, 1]} : vector<4x1024xf32> to vector<4x836xf32>
    %c7 = arith.constant 7 : index
    %c0_27 = arith.constant 0 : index
    %c0_28 = arith.constant 0 : index
    %41 = vector.load %arg3[%c7, %c0_27, %c0_28] : memref<9x8x4xf32, #tpu.memory_space<vmem>>, vector<1x8x4xf32>
    %42 = vector.shape_cast %41 : vector<1x8x4xf32> to vector<8x4xf32>
    %cst_29 = arith.constant dense<0.000000e+00> : vector<8x836xf32>
    %43 = tpu.matmul %42, %40, %cst_29 {dimension_numbers = #tpu.dot_dimension_numbers<[1], [0], [0], [1], [0, 0, 1, 1], [], []>} : vector<8x4xf32>, vector<4x836xf32>, vector<8x836xf32> -> vector<8x836xf32>
    %44 = arith.addf %39, %43 : vector<8x836xf32>
    %45 = vector.extract_strided_slice %5 {offsets = [0, 147], sizes = [4, 836], strides = [1, 1]} : vector<4x1024xf32> to vector<4x836xf32>
    %c8 = arith.constant 8 : index
    %c0_30 = arith.constant 0 : index
    %c0_31 = arith.constant 0 : index
    %46 = vector.load %arg3[%c8, %c0_30, %c0_31] : memref<9x8x4xf32, #tpu.memory_space<vmem>>, vector<1x8x4xf32>
    %47 = vector.shape_cast %46 : vector<1x8x4xf32> to vector<8x4xf32>
    %cst_32 = arith.constant dense<0.000000e+00> : vector<8x836xf32>
    %48 = tpu.matmul %47, %45, %cst_32 {dimension_numbers = #tpu.dot_dimension_numbers<[1], [0], [0], [1], [0, 0, 1, 1], [], []>} : vector<8x4xf32>, vector<4x836xf32>, vector<8x836xf32> -> vector<8x836xf32>
    %49 = arith.addf %44, %48 : vector<8x836xf32>
    %50 = vector.extract_strided_slice %49 {offsets = [0, 0], sizes = [8, 324], strides = [1, 1]} : vector<8x836xf32> to vector<8x324xf32>
    %51 = arith.mulf %50, %2 : vector<8x324xf32>
    %cst_33 = arith.constant dense<0.000000e+00> : vector<8xf32>
    %52 = vector.multi_reduction <add>, %51, %cst_33 [1] : vector<8x324xf32> to vector<8xf32>
    %53 = vector.shape_cast %52 : vector<8xf32> to vector<8x1xf32>
    %cst_34 = arith.constant 3.906250e-03 : f32
    %54 = vector.broadcast %cst_34 : f32 to vector<8x1xf32>
    %55 = arith.mulf %53, %54 : vector<8x1xf32>
    %56 = vector.broadcast %55 : vector<8x1xf32> to vector<8x324xf32>
    %57 = arith.subf %50, %56 : vector<8x324xf32>
    %58 = arith.mulf %57, %2 : vector<8x324xf32>
    %59 = arith.mulf %58, %58 : vector<8x324xf32>
    %cst_35 = arith.constant dense<0.000000e+00> : vector<8xf32>
    %60 = vector.multi_reduction <add>, %59, %cst_35 [1] : vector<8x324xf32> to vector<8xf32>
    %61 = vector.shape_cast %60 : vector<8xf32> to vector<8x1xf32>
    %cst_36 = arith.constant 3.906250e-03 : f32
    %62 = vector.broadcast %cst_36 : f32 to vector<8x1xf32>
    %63 = arith.mulf %61, %62 : vector<8x1xf32>
    %cst_37 = arith.constant 9.99999974E-6 : f32
    %64 = vector.broadcast %cst_37 : f32 to vector<8x1xf32>
    %65 = arith.addf %63, %64 : vector<8x1xf32>
    %66 = math.rsqrt %65 : vector<8x1xf32>
    %67 = vector.broadcast %66 : vector<8x1xf32> to vector<8x324xf32>
    %68 = arith.mulf %58, %67 : vector<8x324xf32>
    %cst_38 = arith.constant 0.000000e+00 : f32
    %69 = vector.broadcast %cst_38 : f32 to vector<8x324xf32>
    %70 = arith.cmpf oge, %68, %69 : vector<8x324xf32>
    %cst_39 = arith.constant 2.000000e-01 : f32
    %71 = vector.broadcast %cst_39 : f32 to vector<8x324xf32>
    %72 = arith.mulf %71, %68 : vector<8x324xf32>
    %73 = arith.select %70, %68, %72 : vector<8x324xi1>, vector<8x324xf32>
    %c0_40 = arith.constant 0 : index
    %c128 = arith.constant 128 : index
    %74 = vector.load %arg6[%c0_40, %c128] : memref<8x1024xf32, #tpu.memory_space<vmem>>, vector<8x324xf32>
    tpu.vector_store %arg6[%c0_40, %c128], %73 {strides = array<i32>} : memref<8x1024xf32, #tpu.memory_space<vmem>>, vector<8x324xf32>,
    %75 = vector.extract_strided_slice %49 {offsets = [0, 512], sizes = [8, 324], strides = [1, 1]} : vector<8x836xf32> to vector<8x324xf32>
    %76 = arith.mulf %75, %2 : vector<8x324xf32>
    %cst_41 = arith.constant dense<0.000000e+00> : vector<8xf32>
    %77 = vector.multi_reduction <add>, %76, %cst_41 [1] : vector<8x324xf32> to vector<8xf32>
    %78 = vector.shape_cast %77 : vector<8xf32> to vector<8x1xf32>
    %cst_42 = arith.constant 3.906250e-03 : f32
    %79 = vector.broadcast %cst_42 : f32 to vector<8x1xf32>
    %80 = arith.mulf %78, %79 : vector<8x1xf32>
    %81 = vector.broadcast %80 : vector<8x1xf32> to vector<8x324xf32>
    %82 = arith.subf %75, %81 : vector<8x324xf32>
    %83 = arith.mulf %82, %2 : vector<8x324xf32>
    %84 = arith.mulf %83, %83 : vector<8x324xf32>
    %cst_43 = arith.constant dense<0.000000e+00> : vector<8xf32>
    %85 = vector.multi_reduction <add>, %84, %cst_43 [1] : vector<8x324xf32> to vector<8xf32>
    %86 = vector.shape_cast %85 : vector<8xf32> to vector<8x1xf32>
    %cst_44 = arith.constant 3.906250e-03 : f32
    %87 = vector.broadcast %cst_44 : f32 to vector<8x1xf32>
    %88 = arith.mulf %86, %87 : vector<8x1xf32>
    %cst_45 = arith.constant 9.99999974E-6 : f32
    %89 = vector.broadcast %cst_45 : f32 to vector<8x1xf32>
    %90 = arith.addf %88, %89 : vector<8x1xf32>
    %91 = math.rsqrt %90 : vector<8x1xf32>
    %92 = vector.broadcast %91 : vector<8x1xf32> to vector<8x324xf32>
    %93 = arith.mulf %83, %92 : vector<8x324xf32>
    %cst_46 = arith.constant 0.000000e+00 : f32
    %94 = vector.broadcast %cst_46 : f32 to vector<8x324xf32>
    %95 = arith.cmpf oge, %93, %94 : vector<8x324xf32>
    %cst_47 = arith.constant 2.000000e-01 : f32
    %96 = vector.broadcast %cst_47 : f32 to vector<8x324xf32>
    %97 = arith.mulf %96, %93 : vector<8x324xf32>
    %98 = arith.select %95, %93, %97 : vector<8x324xi1>, vector<8x324xf32>
    %c0_48 = arith.constant 0 : index
    %c640 = arith.constant 640 : index
    %99 = vector.load %arg6[%c0_48, %c640] : memref<8x1024xf32, #tpu.memory_space<vmem>>, vector<8x324xf32>
    tpu.vector_store %arg6[%c0_48, %c640], %98 {strides = array<i32>} : memref<8x1024xf32, #tpu.memory_space<vmem>>, vector<8x324xf32>,
    %c0_49 = arith.constant 0 : index
    %c0_50 = arith.constant 0 : index
    %100 = vector.load %arg6[%c0_49, %c0_50] : memref<8x1024xf32, #tpu.memory_space<vmem>>, vector<8x1024xf32>
    %101 = vector.extract_strided_slice %100 {offsets = [0, 109], sizes = [8, 836], strides = [1, 1]} : vector<8x1024xf32> to vector<8x836xf32>
    %c0_51 = arith.constant 0 : index
    %c0_52 = arith.constant 0 : index
    %c0_53 = arith.constant 0 : index
    %102 = vector.load %arg4[%c0_51, %c0_52, %c0_53] : memref<9x8x8xf32, #tpu.memory_space<vmem>>, vector<1x8x8xf32>
    %103 = vector.shape_cast %102 : vector<1x8x8xf32> to vector<8x8xf32>
    %cst_54 = arith.constant dense<0.000000e+00> : vector<8x836xf32>
    %104 = tpu.matmul %103, %101, %cst_54 {dimension_numbers = #tpu.dot_dimension_numbers<[1], [0], [0], [1], [0, 0, 1, 1], [], []>} : vector<8x8xf32>, vector<8x836xf32>, vector<8x836xf32> -> vector<8x836xf32>
    %105 = vector.extract_strided_slice %100 {offsets = [0, 110], sizes = [8, 836], strides = [1, 1]} : vector<8x1024xf32> to vector<8x836xf32>
    %c1_55 = arith.constant 1 : index
    %c0_56 = arith.constant 0 : index
    %c0_57 = arith.constant 0 : index
    %106 = vector.load %arg4[%c1_55, %c0_56, %c0_57] : memref<9x8x8xf32, #tpu.memory_space<vmem>>, vector<1x8x8xf32>
    %107 = vector.shape_cast %106 : vector<1x8x8xf32> to vector<8x8xf32>
    %cst_58 = arith.constant dense<0.000000e+00> : vector<8x836xf32>
    %108 = tpu.matmul %107, %105, %cst_58 {dimension_numbers = #tpu.dot_dimension_numbers<[1], [0], [0], [1], [0, 0, 1, 1], [], []>} : vector<8x8xf32>, vector<8x836xf32>, vector<8x836xf32> -> vector<8x836xf32>
    %109 = arith.addf %104, %108 : vector<8x836xf32>
    %110 = vector.extract_strided_slice %100 {offsets = [0, 111], sizes = [8, 836], strides = [1, 1]} : vector<8x1024xf32> to vector<8x836xf32>
    %c2_59 = arith.constant 2 : index
    %c0_60 = arith.constant 0 : index
    %c0_61 = arith.constant 0 : index
    %111 = vector.load %arg4[%c2_59, %c0_60, %c0_61] : memref<9x8x8xf32, #tpu.memory_space<vmem>>, vector<1x8x8xf32>
    %112 = vector.shape_cast %111 : vector<1x8x8xf32> to vector<8x8xf32>
    %cst_62 = arith.constant dense<0.000000e+00> : vector<8x836xf32>
    %113 = tpu.matmul %112, %110, %cst_62 {dimension_numbers = #tpu.dot_dimension_numbers<[1], [0], [0], [1], [0, 0, 1, 1], [], []>} : vector<8x8xf32>, vector<8x836xf32>, vector<8x836xf32> -> vector<8x836xf32>
    %114 = arith.addf %109, %113 : vector<8x836xf32>
    %115 = vector.extract_strided_slice %100 {offsets = [0, 127], sizes = [8, 836], strides = [1, 1]} : vector<8x1024xf32> to vector<8x836xf32>
    %c3_63 = arith.constant 3 : index
    %c0_64 = arith.constant 0 : index
    %c0_65 = arith.constant 0 : index
    %116 = vector.load %arg4[%c3_63, %c0_64, %c0_65] : memref<9x8x8xf32, #tpu.memory_space<vmem>>, vector<1x8x8xf32>
    %117 = vector.shape_cast %116 : vector<1x8x8xf32> to vector<8x8xf32>
    %cst_66 = arith.constant dense<0.000000e+00> : vector<8x836xf32>
    %118 = tpu.matmul %117, %115, %cst_66 {dimension_numbers = #tpu.dot_dimension_numbers<[1], [0], [0], [1], [0, 0, 1, 1], [], []>} : vector<8x8xf32>, vector<8x836xf32>, vector<8x836xf32> -> vector<8x836xf32>
    %119 = arith.addf %114, %118 : vector<8x836xf32>
    %120 = vector.extract_strided_slice %100 {offsets = [0, 128], sizes = [8, 836], strides = [1, 1]} : vector<8x1024xf32> to vector<8x836xf32>
    %c4_67 = arith.constant 4 : index
    %c0_68 = arith.constant 0 : index
    %c0_69 = arith.constant 0 : index
    %121 = vector.load %arg4[%c4_67, %c0_68, %c0_69] : memref<9x8x8xf32, #tpu.memory_space<vmem>>, vector<1x8x8xf32>
    %122 = vector.shape_cast %121 : vector<1x8x8xf32> to vector<8x8xf32>
    %cst_70 = arith.constant dense<0.000000e+00> : vector<8x836xf32>
    %123 = tpu.matmul %122, %120, %cst_70 {dimension_numbers = #tpu.dot_dimension_numbers<[1], [0], [0], [1], [0, 0, 1, 1], [], []>} : vector<8x8xf32>, vector<8x836xf32>, vector<8x836xf32> -> vector<8x836xf32>
    %124 = arith.addf %119, %123 : vector<8x836xf32>
    %125 = vector.extract_strided_slice %100 {offsets = [0, 129], sizes = [8, 836], strides = [1, 1]} : vector<8x1024xf32> to vector<8x836xf32>
    %c5_71 = arith.constant 5 : index
    %c0_72 = arith.constant 0 : index
    %c0_73 = arith.constant 0 : index
    %126 = vector.load %arg4[%c5_71, %c0_72, %c0_73] : memref<9x8x8xf32, #tpu.memory_space<vmem>>, vector<1x8x8xf32>
    %127 = vector.shape_cast %126 : vector<1x8x8xf32> to vector<8x8xf32>
    %cst_74 = arith.constant dense<0.000000e+00> : vector<8x836xf32>
    %128 = tpu.matmul %127, %125, %cst_74 {dimension_numbers = #tpu.dot_dimension_numbers<[1], [0], [0], [1], [0, 0, 1, 1], [], []>} : vector<8x8xf32>, vector<8x836xf32>, vector<8x836xf32> -> vector<8x836xf32>
    %129 = arith.addf %124, %128 : vector<8x836xf32>
    %130 = vector.extract_strided_slice %100 {offsets = [0, 145], sizes = [8, 836], strides = [1, 1]} : vector<8x1024xf32> to vector<8x836xf32>
    %c6_75 = arith.constant 6 : index
    %c0_76 = arith.constant 0 : index
    %c0_77 = arith.constant 0 : index
    %131 = vector.load %arg4[%c6_75, %c0_76, %c0_77] : memref<9x8x8xf32, #tpu.memory_space<vmem>>, vector<1x8x8xf32>
    %132 = vector.shape_cast %131 : vector<1x8x8xf32> to vector<8x8xf32>
    %cst_78 = arith.constant dense<0.000000e+00> : vector<8x836xf32>
    %133 = tpu.matmul %132, %130, %cst_78 {dimension_numbers = #tpu.dot_dimension_numbers<[1], [0], [0], [1], [0, 0, 1, 1], [], []>} : vector<8x8xf32>, vector<8x836xf32>, vector<8x836xf32> -> vector<8x836xf32>
    %134 = arith.addf %129, %133 : vector<8x836xf32>
    %135 = vector.extract_strided_slice %100 {offsets = [0, 146], sizes = [8, 836], strides = [1, 1]} : vector<8x1024xf32> to vector<8x836xf32>
    %c7_79 = arith.constant 7 : index
    %c0_80 = arith.constant 0 : index
    %c0_81 = arith.constant 0 : index
    %136 = vector.load %arg4[%c7_79, %c0_80, %c0_81] : memref<9x8x8xf32, #tpu.memory_space<vmem>>, vector<1x8x8xf32>
    %137 = vector.shape_cast %136 : vector<1x8x8xf32> to vector<8x8xf32>
    %cst_82 = arith.constant dense<0.000000e+00> : vector<8x836xf32>
    %138 = tpu.matmul %137, %135, %cst_82 {dimension_numbers = #tpu.dot_dimension_numbers<[1], [0], [0], [1], [0, 0, 1, 1], [], []>} : vector<8x8xf32>, vector<8x836xf32>, vector<8x836xf32> -> vector<8x836xf32>
    %139 = arith.addf %134, %138 : vector<8x836xf32>
    %140 = vector.extract_strided_slice %100 {offsets = [0, 147], sizes = [8, 836], strides = [1, 1]} : vector<8x1024xf32> to vector<8x836xf32>
    %c8_83 = arith.constant 8 : index
    %c0_84 = arith.constant 0 : index
    %c0_85 = arith.constant 0 : index
    %141 = vector.load %arg4[%c8_83, %c0_84, %c0_85] : memref<9x8x8xf32, #tpu.memory_space<vmem>>, vector<1x8x8xf32>
    %142 = vector.shape_cast %141 : vector<1x8x8xf32> to vector<8x8xf32>
    %cst_86 = arith.constant dense<0.000000e+00> : vector<8x836xf32>
    %143 = tpu.matmul %142, %140, %cst_86 {dimension_numbers = #tpu.dot_dimension_numbers<[1], [0], [0], [1], [0, 0, 1, 1], [], []>} : vector<8x8xf32>, vector<8x836xf32>, vector<8x836xf32> -> vector<8x836xf32>
    %144 = arith.addf %139, %143 : vector<8x836xf32>
    %145 = vector.extract_strided_slice %144 {offsets = [0, 0], sizes = [8, 324], strides = [1, 1]} : vector<8x836xf32> to vector<8x324xf32>
    %146 = arith.mulf %145, %2 : vector<8x324xf32>
    %cst_87 = arith.constant dense<0.000000e+00> : vector<8xf32>
    %147 = vector.multi_reduction <add>, %146, %cst_87 [1] : vector<8x324xf32> to vector<8xf32>
    %148 = vector.shape_cast %147 : vector<8xf32> to vector<8x1xf32>
    %cst_88 = arith.constant 3.906250e-03 : f32
    %149 = vector.broadcast %cst_88 : f32 to vector<8x1xf32>
    %150 = arith.mulf %148, %149 : vector<8x1xf32>
    %151 = vector.broadcast %150 : vector<8x1xf32> to vector<8x324xf32>
    %152 = arith.subf %145, %151 : vector<8x324xf32>
    %153 = arith.mulf %152, %2 : vector<8x324xf32>
    %154 = arith.mulf %153, %153 : vector<8x324xf32>
    %cst_89 = arith.constant dense<0.000000e+00> : vector<8xf32>
    %155 = vector.multi_reduction <add>, %154, %cst_89 [1] : vector<8x324xf32> to vector<8xf32>
    %156 = vector.shape_cast %155 : vector<8xf32> to vector<8x1xf32>
    %cst_90 = arith.constant 3.906250e-03 : f32
    %157 = vector.broadcast %cst_90 : f32 to vector<8x1xf32>
    %158 = arith.mulf %156, %157 : vector<8x1xf32>
    %cst_91 = arith.constant 9.99999974E-6 : f32
    %159 = vector.broadcast %cst_91 : f32 to vector<8x1xf32>
    %160 = arith.addf %158, %159 : vector<8x1xf32>
    %161 = math.rsqrt %160 : vector<8x1xf32>
    %162 = vector.broadcast %161 : vector<8x1xf32> to vector<8x324xf32>
    %163 = arith.mulf %153, %162 : vector<8x324xf32>
    %cst_92 = arith.constant 0.000000e+00 : f32
    %164 = vector.broadcast %cst_92 : f32 to vector<8x324xf32>
    %165 = arith.cmpf oge, %163, %164 : vector<8x324xf32>
    %cst_93 = arith.constant 2.000000e-01 : f32
    %166 = vector.broadcast %cst_93 : f32 to vector<8x324xf32>
    %167 = arith.mulf %166, %163 : vector<8x324xf32>
    %168 = arith.select %165, %163, %167 : vector<8x324xi1>, vector<8x324xf32>
    %c0_94 = arith.constant 0 : index
    %c0_95 = arith.constant 0 : index
    %c0_96 = arith.constant 0 : index
    %169 = vector.load %arg5[%c0_94, %c0_95, %c0_96] : memref<2x8x324xf32, #tpu.memory_space<vmem>>, vector<1x8x324xf32>
    %170 = vector.shape_cast %169 : vector<1x8x324xf32> to vector<8x324xf32>
    %171 = vector.shape_cast %168 : vector<8x324xf32> to vector<1x8x324xf32>
    tpu.vector_store %arg5[%c0_94, %c0_95, %c0_96], %171 {strides = array<i32>} : memref<2x8x324xf32, #tpu.memory_space<vmem>>, vector<1x8x324xf32>,
    %172 = vector.extract_strided_slice %144 {offsets = [0, 512], sizes = [8, 324], strides = [1, 1]} : vector<8x836xf32> to vector<8x324xf32>
    %173 = arith.mulf %172, %2 : vector<8x324xf32>
    %cst_97 = arith.constant dense<0.000000e+00> : vector<8xf32>
    %174 = vector.multi_reduction <add>, %173, %cst_97 [1] : vector<8x324xf32> to vector<8xf32>
    %175 = vector.shape_cast %174 : vector<8xf32> to vector<8x1xf32>
    %cst_98 = arith.constant 3.906250e-03 : f32
    %176 = vector.broadcast %cst_98 : f32 to vector<8x1xf32>
    %177 = arith.mulf %175, %176 : vector<8x1xf32>
    %178 = vector.broadcast %177 : vector<8x1xf32> to vector<8x324xf32>
    %179 = arith.subf %172, %178 : vector<8x324xf32>
    %180 = arith.mulf %179, %2 : vector<8x324xf32>
    %181 = arith.mulf %180, %180 : vector<8x324xf32>
    %cst_99 = arith.constant dense<0.000000e+00> : vector<8xf32>
    %182 = vector.multi_reduction <add>, %181, %cst_99 [1] : vector<8x324xf32> to vector<8xf32>
    %183 = vector.shape_cast %182 : vector<8xf32> to vector<8x1xf32>
    %cst_100 = arith.constant 3.906250e-03 : f32
    %184 = vector.broadcast %cst_100 : f32 to vector<8x1xf32>
    %185 = arith.mulf %183, %184 : vector<8x1xf32>
    %cst_101 = arith.constant 9.99999974E-6 : f32
    %186 = vector.broadcast %cst_101 : f32 to vector<8x1xf32>
    %187 = arith.addf %185, %186 : vector<8x1xf32>
    %188 = math.rsqrt %187 : vector<8x1xf32>
    %189 = vector.broadcast %188 : vector<8x1xf32> to vector<8x324xf32>
    %190 = arith.mulf %180, %189 : vector<8x324xf32>
    %cst_102 = arith.constant 0.000000e+00 : f32
    %191 = vector.broadcast %cst_102 : f32 to vector<8x324xf32>
    %192 = arith.cmpf oge, %190, %191 : vector<8x324xf32>
    %cst_103 = arith.constant 2.000000e-01 : f32
    %193 = vector.broadcast %cst_103 : f32 to vector<8x324xf32>
    %194 = arith.mulf %193, %190 : vector<8x324xf32>
    %195 = arith.select %192, %190, %194 : vector<8x324xi1>, vector<8x324xf32>
    %c1_104 = arith.constant 1 : index
    %c0_105 = arith.constant 0 : index
    %c0_106 = arith.constant 0 : index
    %196 = vector.load %arg5[%c1_104, %c0_105, %c0_106] : memref<2x8x324xf32, #tpu.memory_space<vmem>>, vector<1x8x324xf32>
    %197 = vector.shape_cast %196 : vector<1x8x324xf32> to vector<8x324xf32>
    %198 = vector.shape_cast %195 : vector<8x324xf32> to vector<1x8x324xf32>
    tpu.vector_store %arg5[%c1_104, %c0_105, %c0_106], %198 {strides = array<i32>} : memref<2x8x324xf32, #tpu.memory_space<vmem>>, vector<1x8x324xf32>,
    return
  }
  func.func @transform_0(%arg0: i32) -> (i32, i32) {
    %c0_i32 = arith.constant 0 : i32
    %c0_i32_0 = arith.constant 0 : i32
    %c0_i32_1 = arith.constant 0 : i32
    return %c0_i32, %c0_i32_0 : i32, i32
  }
  func.func @transform_1(%arg0: i32) -> (i32, i32) {
    %c0_i32 = arith.constant 0 : i32
    %c0_i32_0 = arith.constant 0 : i32
    return %c0_i32, %arg0 : i32, i32
  }
  func.func @transform_2(%arg0: i32) -> (i32, i32, i32) {
    %c0_i32 = arith.constant 0 : i32
    %c0_i32_0 = arith.constant 0 : i32
    %c0_i32_1 = arith.constant 0 : i32
    %c0_i32_2 = arith.constant 0 : i32
    return %c0_i32, %c0_i32_0, %c0_i32_1 : i32, i32, i32
  }
  func.func @transform_3(%arg0: i32) -> (i32, i32, i32) {
    %c0_i32 = arith.constant 0 : i32
    %c0_i32_0 = arith.constant 0 : i32
    %c0_i32_1 = arith.constant 0 : i32
    %c0_i32_2 = arith.constant 0 : i32
    return %c0_i32, %c0_i32_0, %c0_i32_1 : i32, i32, i32
  }
  func.func @transform_4(%arg0: i32) -> (i32, i32, i32) {
    %c0_i32 = arith.constant 0 : i32
    %c0_i32_0 = arith.constant 0 : i32
    %c0_i32_1 = arith.constant 0 : i32
    return %arg0, %c0_i32, %c0_i32_0 : i32, i32, i32
  }
}

</mosaic_0001>

<llo_original>
// kernel: conv_block.1
$region0: #{conv_block.1}
  #allocation0 [shape = 'u32[]', space=smem, size = 0x4, offset = 0x4, fixed_abs, tag = 'smem constant byte address 0x4 - core index']
  #allocation1 [shape = 'u32[144,128]{1,0:T(1,128)}', space=vmem, size = 0x12000, scoped, tag = 'internal scratch']
  #allocation2 [shape = 'f32[8,1024]{1,0:T(8,128)}', space=vmem, size = 0x8000, scoped, tag = 'scratch operand']
  %s0 = inlined_call_operand.vmem [shape: f32[1,324], index: 0, kind: input, shape index: {}]
  %s1 = inlined_call_operand.vmem [shape: f32[4,1024], index: 1, kind: input, shape index: {}]
  %s2 = inlined_call_operand.vmem [shape: f32[9,8,4], index: 2, kind: input, shape index: {}]
  %s3 = inlined_call_operand.vmem [shape: f32[9,8,8], index: 3, kind: input, shape index: {}]
  %s4 = inlined_call_operand.vmem [shape: f32[2,8,324], index: 4, kind: output, shape index: {}]
  %s5 = sld [smem:[#allocation0]]
  $region26: #{conv_block.1} parent=0
    _
  %s7 = ssub.s32 1, %s5
  %s8 = scalar_select 0, %s7, %s5
  // Predicated region
  $region2: #{conv_block.1} parent=0 // pred_check
    _
  $region3: #{conv_block.1} parent=0 // pred_check_branch
    %10 = sbr.rel (0) target = $region5
  $region4: #{conv_block.1} parent=0 // pred_region
    _
  $region5: #{conv_block.1} parent=0 // pred_fallthru
    _
  // Predicated region
  $region6: #{conv_block.1} parent=0 // pred_check
    _
  $region7: #{conv_block.1} parent=0 // pred_check_branch
    %12 = sbr.rel (0) target = $region9
  $region8: #{conv_block.1} parent=0 // pred_region
    _
  $region9: #{conv_block.1} parent=0 // pred_fallthru
    _
  // Predicated region
  $region10: #{conv_block.1} parent=0 // pred_check
    _
  $region11: #{conv_block.1} parent=0 // pred_check_branch
    %14 = sbr.rel (0) target = $region13
  $region12: #{conv_block.1} parent=0 // pred_region
    _
  $region13: #{conv_block.1} parent=0 // pred_fallthru
    _
  // Predicated region
  $region14: #{conv_block.1} parent=0 // pred_check
    _
  $region15: #{conv_block.1} parent=0 // pred_check_branch
    %16 = sbr.rel (0) target = $region17
  $region16: #{conv_block.1} parent=0 // pred_region
    _
  $region17: #{conv_block.1} parent=0 // pred_fallthru
    _
  %v17 = vld [vmem:[%s0] sm:$0x7]
  %v19 = vlaneseq
  %v20 = vshrl.u32 %v19, 7
  %v21 = vsub.s32 0, %v20
  %v22 = vrot.slane %v17, %v21
  %v23 = vlaneseq
  %v24 = vshrl.u32 %v23, 7
  %v25 = vsub.s32 1, %v24
  %v26 = vrot.slane %v17, %v25
  %v27 = vlaneseq
  %v28 = vshrl.u32 %v27, 7
  %v29 = vsub.s32 2, %v28
  %v30 = vrot.slane %v17, %v29
  %34 = vst [vmem:[#allocation2] sm:$0xff] 0.0
  %35 = vst [vmem:[#allocation2 + $0x8] sm:$0xff] 0.0
  %36 = vst [vmem:[#allocation2 + $0x10] sm:$0xff] 0.0
  %37 = vst [vmem:[#allocation2 + $0x18] sm:$0xff] 0.0
  %38 = vst [vmem:[#allocation2 + $0x20] sm:$0xff] 0.0
  %39 = vst [vmem:[#allocation2 + $0x28] sm:$0xff] 0.0
  %40 = vst [vmem:[#allocation2 + $0x30] sm:$0xff] 0.0
  %41 = vst [vmem:[#allocation2 + $0x38] sm:$0xff] 0.0
  %v42 = vld [vmem:[%s1] sm:$0xff]
  %v43 = vld [vmem:[%s1 + $0x8] sm:$0xff]
  %v44 = vld [vmem:[%s1 + $0x10] sm:$0xff]
  %v45 = vld [vmem:[%s1 + $0x18] sm:$0xff]
  %v46 = vld [vmem:[%s2] sm:$0xff]
  %s47 = scalar_lea.vmem %s2, 8
  %v48 = vld [vmem:[%s47] sm:$0xff]
  %v53 = vcombine.high %v42, %v42
  %v54 = vcombine.high %v43, %v43
  %v55 = vcombine.high %v44, %v44
  %v56 = vcombine.high %v45, %v45
  %57 = vrot.lane.b32.xlu0 %v42, 18
  %v58 = vpop.permute.xlu0 %57
  %59 = vrot.lane.b32.xlu0 %v53, 18
  %v60 = vpop.permute.xlu0 %59
  %61 = vrot.lane.b32.xlu0 %v43, 18
  %v62 = vpop.permute.xlu0 %61
  %63 = vrot.lane.b32.xlu0 %v54, 18
  %v64 = vpop.permute.xlu0 %63
  %65 = vrot.lane.b32.xlu0 %v44, 18
  %v66 = vpop.permute.xlu0 %65
  %67 = vrot.lane.b32.xlu0 %v55, 18
  %v68 = vpop.permute.xlu0 %67
  %69 = vrot.lane.b32.xlu0 %v45, 18
  %v70 = vpop.permute.xlu0 %69
  %71 = vrot.lane.b32.xlu0 %v56, 18
  %v72 = vpop.permute.xlu0 %71
  %vm73 = vcmask 146432
  %v74 = vsel %vm73, %v58, %v60
  %v75 = vsel %vm73, %v60, %v62
  %v76 = vsel %vm73, %v62, %v64
  %v77 = vsel %vm73, %v64, %v66
  %v78 = vsel %vm73, %v66, %v68
  %v79 = vsel %vm73, %v68, %v70
  %v80 = vsel %vm73, %v70, %v72
  %vm81 = vcmask 31744
  %v83 = vsel %vm81, %v48, 0
  %vm85 = vcmask 1043456
  %v86 = vsel %vm85, %v74, 0
  %v88 = vsel %vm85, %v75, 0
  %v90 = vsel %vm85, %v76, 0
  %v92 = vsel %vm85, %v77, 0
  %v94 = vsel %vm85, %v78, 0
  %v96 = vsel %vm85, %v79, 0
  %v98 = vsel %vm85, %v80, 0
  %100 = vmatprep.subr.mxu0 %v88
  %101 = vmatpush1.msra.mxu0 %v86
  %102 = vmatprep.subr.mxu0 0.0
  %103 = vmatpush1.msra.mxu0 0.0
  %104 = vmatprep.subr.mxu0 0.0
  %105 = vmatpush1.msra.mxu0 0.0
  %106 = vmatprep.subr.mxu0 0.0
  %107 = vmatpush1.msra.mxu0 0.0
  %108 = vmatprep.subr.mxu0 0.0
  %109 = vmatpush1.msra.mxu0 0.0
  %110 = vmatprep.subr.mxu0 0.0
  %111 = vmatpush1.msra.mxu0 0.0
  %112 = vmatprep.subr.mxu0 0.0
  %113 = vmatpush1.msra.mxu0 0.0
  %114 = vmatprep.subr.mxu0 0.0
  %115 = vmatpush1.msra.mxu0 0.0
  %116 = vmatprep.subr.mxu0 0.0
  %117 = vmatpush1.msra.mxu0 0.0
  %118 = vmatprep.subr.mxu0 0.0
  %119 = vmatpush1.msra.mxu0 0.0
  %120 = vmatprep.subr.mxu0 0.0
  %121 = vmatpush1.msra.mxu0 0.0
  %122 = vmatprep.subr.mxu0 0.0
  %123 = vmatpush1.msra.mxu0 0.0
  %124 = vmatprep.subr.mxu0 0.0
  %125 = vmatpush1.msra.mxu0 0.0
  %126 = vmatprep.subr.mxu0 0.0
  %127 = vmatpush1.msra.mxu0 0.0
  %128 = vmatprep.subr.mxu0 0.0
  %129 = vmatpush1.msra.mxu0 0.0
  %130 = vmatprep.subr.mxu0 0.0
  %131 = vmatpush1.msra.mxu0 0.0
  %132 = vmatprep.subr.mxu0 0.0
  %133 = vmatpush1.msra.mxu0 0.0
  %134 = vmatprep.subr.mxu0 0.0
  %135 = vmatpush1.msra.mxu0 0.0
  %136 = vmatprep.subr.mxu0 0.0
  %137 = vmatpush1.msra.mxu0 0.0
  %138 = vmatprep.subr.mxu0 0.0
  %139 = vmatpush1.msra.mxu0 0.0
  %140 = vmatprep.subr.mxu0 0.0
  %141 = vmatpush1.msra.mxu0 0.0
  %142 = vmatprep.subr.mxu0 0.0
  %143 = vmatpush1.msra.mxu0 0.0
  %144 = vmatprep.subr.mxu0 0.0
  %145 = vmatpush1.msra.mxu0 0.0
  %146 = vmatprep.subr.mxu0 0.0
  %147 = vmatpush1.msra.mxu0 0.0
  %148 = vmatprep.subr.mxu0 0.0
  %149 = vmatpush1.msra.mxu0 0.0
  %150 = vmatprep.subr.mxu0 0.0
  %151 = vmatpush1.msra.mxu0 0.0
  %152 = vmatprep.subr.mxu0 0.0
  %153 = vmatpush1.msra.mxu0 0.0
  %154 = vmatprep.subr.mxu0 0.0
  %155 = vmatpush1.msra.mxu0 0.0
  %156 = vmatprep.subr.mxu0 0.0
  %157 = vmatpush1.msra.mxu0 0.0
  %158 = vmatprep.subr.mxu0 0.0
  %159 = vmatpush1.msra.mxu0 0.0
  %160 = vmatprep.subr.mxu0 0.0
  %161 = vmatpush1.msra.mxu0 0.0
  %162 = vmatprep.subr.mxu0 0.0
  %163 = vmatpush1.msra.mxu0 0.0
  %164 = vmatprep.mubr.f32.mxu0 0.0
  %165 = vmatmul.mubr.f32.gmra.mrb[0].mxu0 %v83
  %v166 = vpop.f32.mrb[0].mxu0
  %v167 = vadd.f32 0.0, %v166
  %v168 = vpop.f32.mrb[0].mxu0
  %v169 = vadd.f32 0.0, %v168
  %170 = vdwg.mxu0
  %171 = vmatprep.subr.mxu0 %v92
  %172 = vmatpush1.msra.mxu0 %v90
  %173 = vmatprep.subr.mxu0 0.0
  %174 = vmatpush1.msra.mxu0 0.0
  %175 = vmatprep.subr.mxu0 0.0
  %176 = vmatpush1.msra.mxu0 0.0
  %177 = vmatprep.subr.mxu0 0.0
  %178 = vmatpush1.msra.mxu0 0.0
  %179 = vmatprep.subr.mxu0 0.0
  %180 = vmatpush1.msra.mxu0 0.0
  %181 = vmatprep.subr.mxu0 0.0
  %182 = vmatpush1.msra.mxu0 0.0
  %183 = vmatprep.subr.mxu0 0.0
  %184 = vmatpush1.msra.mxu0 0.0
  %185 = vmatprep.subr.mxu0 0.0
  %186 = vmatpush1.msra.mxu0 0.0
  %187 = vmatprep.subr.mxu0 0.0
  %188 = vmatpush1.msra.mxu0 0.0
  %189 = vmatprep.subr.mxu0 0.0
  %190 = vmatpush1.msra.mxu0 0.0
  %191 = vmatprep.subr.mxu0 0.0
  %192 = vmatpush1.msra.mxu0 0.0
  %193 = vmatprep.subr.mxu0 0.0
  %194 = vmatpush1.msra.mxu0 0.0
  %195 = vmatprep.subr.mxu0 0.0
  %196 = vmatpush1.msra.mxu0 0.0
  %197 = vmatprep.subr.mxu0 0.0
  %198 = vmatpush1.msra.mxu0 0.0
  %199 = vmatprep.subr.mxu0 0.0
  %200 = vmatpush1.msra.mxu0 0.0
  %201 = vmatprep.subr.mxu0 0.0
  %202 = vmatpush1.msra.mxu0 0.0
  %203 = vmatprep.subr.mxu0 0.0
  %204 = vmatpush1.msra.mxu0 0.0
  %205 = vmatprep.subr.mxu0 0.0
  %206 = vmatpush1.msra.mxu0 0.0
  %207 = vmatprep.subr.mxu0 0.0
  %208 = vmatpush1.msra.mxu0 0.0
  %209 = vmatprep.subr.mxu0 0.0
  %210 = vmatpush1.msra.mxu0 0.0
  %211 = vmatprep.subr.mxu0 0.0
  %212 = vmatpush1.msra.mxu0 0.0
  %213 = vmatprep.subr.mxu0 0.0
  %214 = vmatpush1.msra.mxu0 0.0
  %215 = vmatprep.subr.mxu0 0.0
  %216 = vmatpush1.msra.mxu0 0.0
  %217 = vmatprep.subr.mxu0 0.0
  %218 = vmatpush1.msra.mxu0 0.0
  %219 = vmatprep.subr.mxu0 0.0
  %220 = vmatpush1.msra.mxu0 0.0
  %221 = vmatprep.subr.mxu0 0.0
  %222 = vmatpush1.msra.mxu0 0.0
  %223 = vmatprep.subr.mxu0 0.0
  %224 = vmatpush1.msra.mxu0 0.0
  %225 = vmatprep.subr.mxu0 0.0
  %226 = vmatpush1.msra.mxu0 0.0
  %227 = vmatprep.subr.mxu0 0.0
  %228 = vmatpush1.msra.mxu0 0.0
  %229 = vmatprep.subr.mxu0 0.0
  %230 = vmatpush1.msra.mxu0 0.0
  %231 = vmatprep.subr.mxu0 0.0
  %232 = vmatpush1.msra.mxu0 0.0
  %233 = vmatprep.subr.mxu0 0.0
  %234 = vmatpush1.msra.mxu0 0.0
  %235 = vmatprep.mubr.f32.mxu0 0.0
  %236 = vmatmul.mubr.f32.gmra.mrb[0].mxu0 %v83
  %v237 = vpop.f32.mrb[0].mxu0
  %v238 = vadd.f32 0.0, %v237
  %v239 = vpop.f32.mrb[0].mxu0
  %240 = vdwg.mxu0
  %241 = vmatprep.subr.mxu0 %v96
  %242 = vmatpush1.msra.mxu0 %v94
  %243 = vmatprep.subr.mxu0 0.0
  %244 = vmatpush1.msra.mxu0 0.0
  %245 = vmatprep.subr.mxu0 0.0
  %246 = vmatpush1.msra.mxu0 0.0
  %247 = vmatprep.subr.mxu0 0.0
  %248 = vmatpush1.msra.mxu0 0.0
  %249 = vmatprep.subr.mxu0 0.0
  %250 = vmatpush1.msra.mxu0 0.0
  %251 = vmatprep.subr.mxu0 0.0
  %252 = vmatpush1.msra.mxu0 0.0
  %253 = vmatprep.subr.mxu0 0.0
  %254 = vmatpush1.msra.mxu0 0.0
  %255 = vmatprep.subr.mxu0 0.0
  %256 = vmatpush1.msra.mxu0 0.0
  %257 = vmatprep.subr.mxu0 0.0
  %258 = vmatpush1.msra.mxu0 0.0
  %259 = vmatprep.subr.mxu0 0.0
  %260 = vmatpush1.msra.mxu0 0.0
  %261 = vmatprep.subr.mxu0 0.0
  %262 = vmatpush1.msra.mxu0 0.0
  %263 = vmatprep.subr.mxu0 0.0
  %264 = vmatpush1.msra.mxu0 0.0
  %265 = vmatprep.subr.mxu0 0.0
  %266 = vmatpush1.msra.mxu0 0.0
  %267 = vmatprep.subr.mxu0 0.0
  %268 = vmatpush1.msra.mxu0 0.0
  %269 = vmatprep.subr.mxu0 0.0
  %270 = vmatpush1.msra.mxu0 0.0
  %271 = vmatprep.subr.mxu0 0.0
  %272 = vmatpush1.msra.mxu0 0.0
  %273 = vmatprep.subr.mxu0 0.0
  %274 = vmatpush1.msra.mxu0 0.0
  %275 = vmatprep.subr.mxu0 0.0
  %276 = vmatpush1.msra.mxu0 0.0
  %277 = vmatprep.subr.mxu0 0.0
  %278 = vmatpush1.msra.mxu0 0.0
  %279 = vmatprep.subr.mxu0 0.0
  %280 = vmatpush1.msra.mxu0 0.0
  %281 = vmatprep.subr.mxu0 0.0
  %282 = vmatpush1.msra.mxu0 0.0
  %283 = vmatprep.subr.mxu0 0.0
  %284 = vmatpush1.msra.mxu0 0.0
  %285 = vmatprep.subr.mxu0 0.0
  %286 = vmatpush1.msra.mxu0 0.0
  %287 = vmatprep.subr.mxu0 0.0
  %288 = vmatpush1.msra.mxu0 0.0
  %289 = vmatprep.subr.mxu0 0.0
  %290 = vmatpush1.msra.mxu0 0.0
  %291 = vmatprep.subr.mxu0 0.0
  %292 = vmatpush1.msra.mxu0 0.0
  %293 = vmatprep.subr.mxu0 0.0
  %294 = vmatpush1.msra.mxu0 0.0
  %295 = vmatprep.subr.mxu0 0.0
  %296 = vmatpush1.msra.mxu0 0.0
  %297 = vmatprep.subr.mxu0 0.0
  %298 = vmatpush1.msra.mxu0 0.0
  %299 = vmatprep.subr.mxu0 0.0
  %300 = vmatpush1.msra.mxu0 0.0
  %301 = vmatprep.subr.mxu0 0.0
  %302 = vmatpush1.msra.mxu0 0.0
  %303 = vmatprep.subr.mxu0 0.0
  %304 = vmatpush1.msra.mxu0 0.0
  %305 = vmatprep.mubr.f32.mxu0 0.0
  %306 = vmatmul.mubr.f32.gmra.mrb[0].mxu0 %v83
  %v307 = vpop.f32.mrb[0].mxu0
  %v308 = vadd.f32 0.0, %v307
  %v309 = vpop.f32.mrb[0].mxu0
  %v310 = vadd.f32 0.0, %v309
  %311 = vdwg.mxu0
  %312 = vmatprep.subr.mxu0 0.0
  %313 = vmatpush1.msra.mxu0 %v98
  %314 = vmatprep.subr.mxu0 0.0
  %315 = vmatpush1.msra.mxu0 0.0
  %316 = vmatprep.subr.mxu0 0.0
  %317 = vmatpush1.msra.mxu0 0.0
  %318 = vmatprep.subr.mxu0 0.0
  %319 = vmatpush1.msra.mxu0 0.0
  %320 = vmatprep.subr.mxu0 0.0
  %321 = vmatpush1.msra.mxu0 0.0
  %322 = vmatprep.subr.mxu0 0.0
  %323 = vmatpush1.msra.mxu0 0.0
  %324 = vmatprep.subr.mxu0 0.0
  %325 = vmatpush1.msra.mxu0 0.0
  %326 = vmatprep.subr.mxu0 0.0
  %327 = vmatpush1.msra.mxu0 0.0
  %328 = vmatprep.subr.mxu0 0.0
  %329 = vmatpush1.msra.mxu0 0.0
  %330 = vmatprep.subr.mxu0 0.0
  %331 = vmatpush1.msra.mxu0 0.0
  %332 = vmatprep.subr.mxu0 0.0
  %333 = vmatpush1.msra.mxu0 0.0
  %334 = vmatprep.subr.mxu0 0.0
  %335 = vmatpush1.msra.mxu0 0.0
  %336 = vmatprep.subr.mxu0 0.0
  %337 = vmatpush1.msra.mxu0 0.0
  %338 = vmatprep.subr.mxu0 0.0
  %339 = vmatpush1.msra.mxu0 0.0
  %340 = vmatprep.subr.mxu0 0.0
  %341 = vmatpush1.msra.mxu0 0.0
  %342 = vmatprep.subr.mxu0 0.0
  %343 = vmatpush1.msra.mxu0 0.0
  %344 = vmatprep.subr.mxu0 0.0
  %345 = vmatpush1.msra.mxu0 0.0
  %346 = vmatprep.subr.mxu0 0.0
  %347 = vmatpush1.msra.mxu0 0.0
  %348 = vmatprep.subr.mxu0 0.0
  %349 = vmatpush1.msra.mxu0 0.0
  %350 = vmatprep.subr.mxu0 0.0
  %351 = vmatpush1.msra.mxu0 0.0
  %352 = vmatprep.subr.mxu0 0.0
  %353 = vmatpush1.msra.mxu0 0.0
  %354 = vmatprep.subr.mxu0 0.0
  %355 = vmatpush1.msra.mxu0 0.0
  %356 = vmatprep.subr.mxu0 0.0
  %357 = vmatpush1.msra.mxu0 0.0
  %358 = vmatprep.subr.mxu0 0.0
  %359 = vmatpush1.msra.mxu0 0.0
  %360 = vmatprep.subr.mxu0 0.0
  %361 = vmatpush1.msra.mxu0 0.0
  %362 = vmatprep.subr.mxu0 0.0
  %363 = vmatpush1.msra.mxu0 0.0
  %364 = vmatprep.subr.mxu0 0.0
  %365 = vmatpush1.msra.mxu0 0.0
  %366 = vmatprep.subr.mxu0 0.0
  %367 = vmatpush1.msra.mxu0 0.0
  %368 = vmatprep.subr.mxu0 0.0
  %369 = vmatpush1.msra.mxu0 0.0
  %370 = vmatprep.subr.mxu0 0.0
  %371 = vmatpush1.msra.mxu0 0.0
  %372 = vmatprep.subr.mxu0 0.0
  %373 = vmatpush1.msra.mxu0 0.0
  %374 = vmatprep.subr.mxu0 0.0
  %375 = vmatpush1.msra.mxu0 0.0
  %376 = vmatprep.mubr.f32.mxu0 0.0
  %377 = vmatmul.mubr.f32.gmra.mrb[0].mxu0 %v83
  %v378 = vpop.f32.mrb[0].mxu0
  %v379 = vadd.f32 0.0, %v378
  %v380 = vpop.f32.mrb[0].mxu0
  %381 = vdwg.mxu0
  %382 = vrot.lane.b32.xlu0 %v42, 19
  %v383 = vpop.permute.xlu0 %382
  %384 = vrot.lane.b32.xlu0 %v53, 19
  %v385 = vpop.permute.xlu0 %384
  %386 = vrot.lane.b32.xlu0 %v43, 19
  %v387 = vpop.permute.xlu0 %386
  %388 = vrot.lane.b32.xlu0 %v54, 19
  %v389 = vpop.permute.xlu0 %388
  %390 = vrot.lane.b32.xlu0 %v44, 19
  %v391 = vpop.permute.xlu0 %390
  %392 = vrot.lane.b32.xlu0 %v55, 19
  %v393 = vpop.permute.xlu0 %392
  %394 = vrot.lane.b32.xlu0 %v45, 19
  %v395 = vpop.permute.xlu0 %394
  %396 = vrot.lane.b32.xlu0 %v56, 19
  %v397 = vpop.permute.xlu0 %396
  %vm398 = vcmask 154624
  %v399 = vsel %vm398, %v383, %v385
  %v400 = vsel %vm398, %v385, %v387
  %v401 = vsel %vm398, %v387, %v389
  %v402 = vsel %vm398, %v389, %v391
  %v403 = vsel %vm398, %v391, %v393
  %v404 = vsel %vm398, %v393, %v395
  %v405 = vsel %vm398, %v395, %v397
  %v407 = vsel %vm81, %v46, 0
  %v409 = vsel %vm85, %v399, 0
  %v411 = vsel %vm85, %v400, 0
  %v413 = vsel %vm85, %v401, 0
  %v415 = vsel %vm85, %v402, 0
  %v417 = vsel %vm85, %v403, 0
  %v419 = vsel %vm85, %v404, 0
  %v421 = vsel %vm85, %v405, 0
  %423 = vmatprep.subr.mxu0 %v411
  %424 = vmatpush1.msra.mxu0 %v409
  %425 = vmatprep.subr.mxu0 0.0
  %426 = vmatpush1.msra.mxu0 0.0
  %427 = vmatprep.subr.mxu0 0.0
  %428 = vmatpush1.msra.mxu0 0.0
  %429 = vmatprep.subr.mxu0 0.0
  %430 = vmatpush1.msra.mxu0 0.0
  %431 = vmatprep.subr.mxu0 0.0
  %432 = vmatpush1.msra.mxu0 0.0
  %433 = vmatprep.subr.mxu0 0.0
  %434 = vmatpush1.msra.mxu0 0.0
  %435 = vmatprep.subr.mxu0 0.0
  %436 = vmatpush1.msra.mxu0 0.0
  %437 = vmatprep.subr.mxu0 0.0
  %438 = vmatpush1.msra.mxu0 0.0
  %439 = vmatprep.subr.mxu0 0.0
  %440 = vmatpush1.msra.mxu0 0.0
  %441 = vmatprep.subr.mxu0 0.0
  %442 = vmatpush1.msra.mxu0 0.0
  %443 = vmatprep.subr.mxu0 0.0
  %444 = vmatpush1.msra.mxu0 0.0
  %445 = vmatprep.subr.mxu0 0.0
  %446 = vmatpush1.msra.mxu0 0.0
  %447 = vmatprep.subr.mxu0 0.0
  %448 = vmatpush1.msra.mxu0 0.0
  %449 = vmatprep.subr.mxu0 0.0
  %450 = vmatpush1.msra.mxu0 0.0
  %451 = vmatprep.subr.mxu0 0.0
  %452 = vmatpush1.msra.mxu0 0.0
  %453 = vmatprep.subr.mxu0 0.0
  %454 = vmatpush1.msra.mxu0 0.0
  %455 = vmatprep.subr.mxu0 0.0
  %456 = vmatpush1.msra.mxu0 0.0
  %457 = vmatprep.subr.mxu0 0.0
  %458 = vmatpush1.msra.mxu0 0.0
  %459 = vmatprep.subr.mxu0 0.0
  %460 = vmatpush1.msra.mxu0 0.0
  %461 = vmatprep.subr.mxu0 0.0
  %462 = vmatpush1.msra.mxu0 0.0
  %463 = vmatprep.subr.mxu0 0.0
  %464 = vmatpush1.msra.mxu0 0.0
  %465 = vmatprep.subr.mxu0 0.0
  %466 = vmatpush1.msra.mxu0 0.0
  %467 = vmatprep.subr.mxu0 0.0
  %468 = vmatpush1.msra.mxu0 0.0
  %469 = vmatprep.subr.mxu0 0.0
  %470 = vmatpush1.msra.mxu0 0.0
  %471 = vmatprep.subr.mxu0 0.0
  %472 = vmatpush1.msra.mxu0 0.0
  %473 = vmatprep.subr.mxu0 0.0
  %474 = vmatpush1.msra.mxu0 0.0
  %475 = vmatprep.subr.mxu0 0.0
  %476 = vmatpush1.msra.mxu0 0.0
  %477 = vmatprep.subr.mxu0 0.0
  %478 = vmatpush1.msra.mxu0 0.0
  %479 = vmatprep.subr.mxu0 0.0
  %480 = vmatpush1.msra.mxu0 0.0
  %481 = vmatprep.subr.mxu0 0.0
  %482 = vmatpush1.msra.mxu0 0.0
  %483 = vmatprep.subr.mxu0 0.0
  %484 = vmatpush1.msra.mxu0 0.0
  %485 = vmatprep.subr.mxu0 0.0
  %486 = vmatpush1.msra.mxu0 0.0
  %487 = vmatprep.mubr.f32.mxu0 0.0
  %488 = vmatmul.mubr.f32.gmra.mrb[0].mxu0 %v407
  %v489 = vpop.f32.mrb[0].mxu0
  %v490 = vadd.f32 %v167, %v489
  %v491 = vpop.f32.mrb[0].mxu0
  %v492 = vadd.f32 %v169, %v491
  %493 = vdwg.mxu0
  %494 = vmatprep.subr.mxu0 %v415
  %495 = vmatpush1.msra.mxu0 %v413
  %496 = vmatprep.subr.mxu0 0.0
  %497 = vmatpush1.msra.mxu0 0.0
  %498 = vmatprep.subr.mxu0 0.0
  %499 = vmatpush1.msra.mxu0 0.0
  %500 = vmatprep.subr.mxu0 0.0
  %501 = vmatpush1.msra.mxu0 0.0
  %502 = vmatprep.subr.mxu0 0.0
  %503 = vmatpush1.msra.mxu0 0.0
  %504 = vmatprep.subr.mxu0 0.0
  %505 = vmatpush1.msra.mxu0 0.0
  %506 = vmatprep.subr.mxu0 0.0
  %507 = vmatpush1.msra.mxu0 0.0
  %508 = vmatprep.subr.mxu0 0.0
  %509 = vmatpush1.msra.mxu0 0.0
  %510 = vmatprep.subr.mxu0 0.0
  %511 = vmatpush1.msra.mxu0 0.0
  %512 = vmatprep.subr.mxu0 0.0
  %513 = vmatpush1.msra.mxu0 0.0
  %514 = vmatprep.subr.mxu0 0.0
  %515 = vmatpush1.msra.mxu0 0.0
  %516 = vmatprep.subr.mxu0 0.0
  %517 = vmatpush1.msra.mxu0 0.0
  %518 = vmatprep.subr.mxu0 0.0
  %519 = vmatpush1.msra.mxu0 0.0
  %520 = vmatprep.subr.mxu0 0.0
  %521 = vmatpush1.msra.mxu0 0.0
  %522 = vmatprep.subr.mxu0 0.0
  %523 = vmatpush1.msra.mxu0 0.0
  %524 = vmatprep.subr.mxu0 0.0
  %525 = vmatpush1.msra.mxu0 0.0
  %526 = vmatprep.subr.mxu0 0.0
  %527 = vmatpush1.msra.mxu0 0.0
  %528 = vmatprep.subr.mxu0 0.0
  %529 = vmatpush1.msra.mxu0 0.0
  %530 = vmatprep.subr.mxu0 0.0
  %531 = vmatpush1.msra.mxu0 0.0
  %532 = vmatprep.subr.mxu0 0.0
  %533 = vmatpush1.msra.mxu0 0.0
  %534 = vmatprep.subr.mxu0 0.0
  %535 = vmatpush1.msra.mxu0 0.0
  %536 = vmatprep.subr.mxu0 0.0
  %537 = vmatpush1.msra.mxu0 0.0
  %538 = vmatprep.subr.mxu0 0.0
  %539 = vmatpush1.msra.mxu0 0.0
  %540 = vmatprep.subr.mxu0 0.0
  %541 = vmatpush1.msra.mxu0 0.0
  %542 = vmatprep.subr.mxu0 0.0
  %543 = vmatpush1.msra.mxu0 0.0
  %544 = vmatprep.subr.mxu0 0.0
  %545 = vmatpush1.msra.mxu0 0.0
  %546 = vmatprep.subr.mxu0 0.0
  %547 = vmatpush1.msra.mxu0 0.0
  %548 = vmatprep.subr.mxu0 0.0
  %549 = vmatpush1.msra.mxu0 0.0
  %550 = vmatprep.subr.mxu0 0.0
  %551 = vmatpush1.msra.mxu0 0.0
  %552 = vmatprep.subr.mxu0 0.0
  %553 = vmatpush1.msra.mxu0 0.0
  %554 = vmatprep.subr.mxu0 0.0
  %555 = vmatpush1.msra.mxu0 0.0
  %556 = vmatprep.subr.mxu0 0.0
  %557 = vmatpush1.msra.mxu0 0.0
  %558 = vmatprep.mubr.f32.mxu0 0.0
  %559 = vmatmul.mubr.f32.gmra.mrb[0].mxu0 %v407
  %v560 = vpop.f32.mrb[0].mxu0
  %v561 = vadd.f32 %v238, %v560
  %v562 = vpop.f32.mrb[0].mxu0
  %563 = vdwg.mxu0
  %564 = vmatprep.subr.mxu0 %v419
  %565 = vmatpush1.msra.mxu0 %v417
  %566 = vmatprep.subr.mxu0 0.0
  %567 = vmatpush1.msra.mxu0 0.0
  %568 = vmatprep.subr.mxu0 0.0
  %569 = vmatpush1.msra.mxu0 0.0
  %570 = vmatprep.subr.mxu0 0.0
  %571 = vmatpush1.msra.mxu0 0.0
  %572 = vmatprep.subr.mxu0 0.0
  %573 = vmatpush1.msra.mxu0 0.0
  %574 = vmatprep.subr.mxu0 0.0
  %575 = vmatpush1.msra.mxu0 0.0
  %576 = vmatprep.subr.mxu0 0.0
  %577 = vmatpush1.msra.mxu0 0.0
  %578 = vmatprep.subr.mxu0 0.0
  %579 = vmatpush1.msra.mxu0 0.0
  %580 = vmatprep.subr.mxu0 0.0
  %581 = vmatpush1.msra.mxu0 0.0
  %582 = vmatprep.subr.mxu0 0.0
  %583 = vmatpush1.msra.mxu0 0.0
  %584 = vmatprep.subr.mxu0 0.0
  %585 = vmatpush1.msra.mxu0 0.0
  %586 = vmatprep.subr.mxu0 0.0
  %587 = vmatpush1.msra.mxu0 0.0
  %588 = vmatprep.subr.mxu0 0.0
  %589 = vmatpush1.msra.mxu0 0.0
  %590 = vmatprep.subr.mxu0 0.0
  %591 = vmatpush1.msra.mxu0 0.0
  %592 = vmatprep.subr.mxu0 0.0
  %593 = vmatpush1.msra.mxu0 0.0
  %594 = vmatprep.subr.mxu0 0.0
  %595 = vmatpush1.msra.mxu0 0.0
  %596 = vmatprep.subr.mxu0 0.0
  %597 = vmatpush1.msra.mxu0 0.0
  %598 = vmatprep.subr.mxu0 0.0
  %599 = vmatpush1.msra.mxu0 0.0
  %600 = vmatprep.subr.mxu0 0.0
  %601 = vmatpush1.msra.mxu0 0.0
  %602 = vmatprep.subr.mxu0 0.0
  %603 = vmatpush1.msra.mxu0 0.0
  %604 = vmatprep.subr.mxu0 0.0
  %605 = vmatpush1.msra.mxu0 0.0
  %606 = vmatprep.subr.mxu0 0.0
  %607 = vmatpush1.msra.mxu0 0.0
  %608 = vmatprep.subr.mxu0 0.0
  %609 = vmatpush1.msra.mxu0 0.0
  %610 = vmatprep.subr.mxu0 0.0
  %611 = vmatpush1.msra.mxu0 0.0
  %612 = vmatprep.subr.mxu0 0.0
  %613 = vmatpush1.msra.mxu0 0.0
  %614 = vmatprep.subr.mxu0 0.0
  %615 = vmatpush1.msra.mxu0 0.0
  %616 = vmatprep.subr.mxu0 0.0
  %617 = vmatpush1.msra.mxu0 0.0
  %618 = vmatprep.subr.mxu0 0.0
  %619 = vmatpush1.msra.mxu0 0.0
  %620 = vmatprep.subr.mxu0 0.0
  %621 = vmatpush1.msra.mxu0 0.0
  %622 = vmatprep.subr.mxu0 0.0
  %623 = vmatpush1.msra.mxu0 0.0
  %624 = vmatprep.subr.mxu0 0.0
  %625 = vmatpush1.msra.mxu0 0.0
  %626 = vmatprep.subr.mxu0 0.0
  %627 = vmatpush1.msra.mxu0 0.0
  %628 = vmatprep.mubr.f32.mxu0 0.0
  %629 = vmatmul.mubr.f32.gmra.mrb[0].mxu0 %v407
  %v630 = vpop.f32.mrb[0].mxu0
  %v631 = vadd.f32 %v308, %v630
  %v632 = vpop.f32.mrb[0].mxu0
  %v633 = vadd.f32 %v310, %v632
  %634 = vdwg.mxu0
  %635 = vmatprep.subr.mxu0 0.0
  %636 = vmatpush1.msra.mxu0 %v421
  %637 = vmatprep.subr.mxu0 0.0
  %638 = vmatpush1.msra.mxu0 0.0
  %639 = vmatprep.subr.mxu0 0.0
  %640 = vmatpush1.msra.mxu0 0.0
  %641 = vmatprep.subr.mxu0 0.0
  %642 = vmatpush1.msra.mxu0 0.0
  %643 = vmatprep.subr.mxu0 0.0
  %644 = vmatpush1.msra.mxu0 0.0
  %645 = vmatprep.subr.mxu0 0.0
  %646 = vmatpush1.msra.mxu0 0.0
  %647 = vmatprep.subr.mxu0 0.0
  %648 = vmatpush1.msra.mxu0 0.0
  %649 = vmatprep.subr.mxu0 0.0
  %650 = vmatpush1.msra.mxu0 0.0
  %651 = vmatprep.subr.mxu0 0.0
  %652 = vmatpush1.msra.mxu0 0.0
  %653 = vmatprep.subr.mxu0 0.0
  %654 = vmatpush1.msra.mxu0 0.0
  %655 = vmatprep.subr.mxu0 0.0
  %656 = vmatpush1.msra.mxu0 0.0
  %657 = vmatprep.subr.mxu0 0.0
  %658 = vmatpush1.msra.mxu0 0.0
  %659 = vmatprep.subr.mxu0 0.0
  %660 = vmatpush1.msra.mxu0 0.0
  %661 = vmatprep.subr.mxu0 0.0
  %662 = vmatpush1.msra.mxu0 0.0
  %663 = vmatprep.subr.mxu0 0.0
  %664 = vmatpush1.msra.mxu0 0.0
  %665 = vmatprep.subr.mxu0 0.0
  %666 = vmatpush1.msra.mxu0 0.0
  %667 = vmatprep.subr.mxu0 0.0
  %668 = vmatpush1.msra.mxu0 0.0
  %669 = vmatprep.subr.mxu0 0.0
  %670 = vmatpush1.msra.mxu0 0.0
  %671 = vmatprep.subr.mxu0 0.0
  %672 = vmatpush1.msra.mxu0 0.0
  %673 = vmatprep.subr.mxu0 0.0
  %674 = vmatpush1.msra.mxu0 0.0
  %675 = vmatprep.subr.mxu0 0.0
  %676 = vmatpush1.msra.mxu0 0.0
  %677 = vmatprep.subr.mxu0 0.0
  %678 = vmatpush1.msra.mxu0 0.0
  %679 = vmatprep.subr.mxu0 0.0
  %680 = vmatpush1.msra.mxu0 0.0
  %681 = vmatprep.subr.mxu0 0.0
  %682 = vmatpush1.msra.mxu0 0.0
  %683 = vmatprep.subr.mxu0 0.0
  %684 = vmatpush1.msra.mxu0 0.0
  %685 = vmatprep.subr.mxu0 0.0
  %686 = vmatpush1.msra.mxu0 0.0
  %687 = vmatprep.subr.mxu0 0.0
  %688 = vmatpush1.msra.mxu0 0.0
  %689 = vmatprep.subr.mxu0 0.0
  %690 = vmatpush1.msra.mxu0 0.0
  %691 = vmatprep.subr.mxu0 0.0
  %692 = vmatpush1.msra.mxu0 0.0
  %693 = vmatprep.subr.mxu0 0.0
  %694 = vmatpush1.msra.mxu0 0.0
  %695 = vmatprep.subr.mxu0 0.0
  %696 = vmatpush1.msra.mxu0 0.0
  %697 = vmatprep.subr.mxu0 0.0
  %698 = vmatpush1.msra.mxu0 0.0
  %699 = vmatprep.mubr.f32.mxu0 0.0
  %700 = vmatmul.mubr.f32.gmra.mrb[0].mxu0 %v407
  %v701 = vpop.f32.mrb[0].mxu0
  %v702 = vadd.f32 %v379, %v701
  %v703 = vpop.f32.mrb[0].mxu0
  %704 = vdwg.mxu0
  %s705 = scalar_lea.vmem %s2, 16
  %v706 = vld [vmem:[%s705] sm:$0xff]
  %707 = vrot.lane.b32.xlu0 %v42, 17
  %v708 = vpop.permute.xlu0 %707
  %709 = vrot.lane.b32.xlu0 %v53, 17
  %v710 = vpop.permute.xlu0 %709
  %711 = vrot.lane.b32.xlu0 %v43, 17
  %v712 = vpop.permute.xlu0 %711
  %713 = vrot.lane.b32.xlu0 %v54, 17
  %v714 = vpop.permute.xlu0 %713
  %715 = vrot.lane.b32.xlu0 %v44, 17
  %v716 = vpop.permute.xlu0 %715
  %717 = vrot.lane.b32.xlu0 %v55, 17
  %v718 = vpop.permute.xlu0 %717
  %719 = vrot.lane.b32.xlu0 %v45, 17
  %v720 = vpop.permute.xlu0 %719
  %721 = vrot.lane.b32.xlu0 %v56, 17
  %v722 = vpop.permute.xlu0 %721
  %vm723 = vcmask 138240
  %v724 = vsel %vm723, %v708, %v710
  %v725 = vsel %vm723, %v710, %v712
  %v726 = vsel %vm723, %v712, %v714
  %v727 = vsel %vm723, %v714, %v716
  %v728 = vsel %vm723, %v716, %v718
  %v729 = vsel %vm723, %v718, %v720
  %v730 = vsel %vm723, %v720, %v722
  %v732 = vsel %vm81, %v706, 0
  %v734 = vsel %vm85, %v724, 0
  %v736 = vsel %vm85, %v725, 0
  %v738 = vsel %vm85, %v726, 0
  %v740 = vsel %vm85, %v727, 0
  %v742 = vsel %vm85, %v728, 0
  %v744 = vsel %vm85, %v729, 0
  %v746 = vsel %vm85, %v730, 0
  %748 = vmatprep.subr.mxu0 %v736
  %749 = vmatpush1.msra.mxu0 %v734
  %750 = vmatprep.subr.mxu0 0.0
  %751 = vmatpush1.msra.mxu0 0.0
  %752 = vmatprep.subr.mxu0 0.0
  %753 = vmatpush1.msra.mxu0 0.0
  %754 = vmatprep.subr.mxu0 0.0
  %755 = vmatpush1.msra.mxu0 0.0
  %756 = vmatprep.subr.mxu0 0.0
  %757 = vmatpush1.msra.mxu0 0.0
  %758 = vmatprep.subr.mxu0 0.0
  %759 = vmatpush1.msra.mxu0 0.0
  %760 = vmatprep.subr.mxu0 0.0
  %761 = vmatpush1.msra.mxu0 0.0
  %762 = vmatprep.subr.mxu0 0.0
  %763 = vmatpush1.msra.mxu0 0.0
  %764 = vmatprep.subr.mxu0 0.0
  %765 = vmatpush1.msra.mxu0 0.0
  %766 = vmatprep.subr.mxu0 0.0
  %767 = vmatpush1.msra.mxu0 0.0
  %768 = vmatprep.subr.mxu0 0.0
  %769 = vmatpush1.msra.mxu0 0.0
  %770 = vmatprep.subr.mxu0 0.0
  %771 = vmatpush1.msra.mxu0 0.0
  %772 = vmatprep.subr.mxu0 0.0
  %773 = vmatpush1.msra.mxu0 0.0
  %774 = vmatprep.subr.mxu0 0.0
  %775 = vmatpush1.msra.mxu0 0.0
  %776 = vmatprep.subr.mxu0 0.0
  %777 = vmatpush1.msra.mxu0 0.0
  %778 = vmatprep.subr.mxu0 0.0
  %779 = vmatpush1.msra.mxu0 0.0
  %780 = vmatprep.subr.mxu0 0.0
  %781 = vmatpush1.msra.mxu0 0.0
  %782 = vmatprep.subr.mxu0 0.0
  %783 = vmatpush1.msra.mxu0 0.0
  %784 = vmatprep.subr.mxu0 0.0
  %785 = vmatpush1.msra.mxu0 0.0
  %786 = vmatprep.subr.mxu0 0.0
  %787 = vmatpush1.msra.mxu0 0.0
  %788 = vmatprep.subr.mxu0 0.0
  %789 = vmatpush1.msra.mxu0 0.0
  %790 = vmatprep.subr.mxu0 0.0
  %791 = vmatpush1.msra.mxu0 0.0
  %792 = vmatprep.subr.mxu0 0.0
  %793 = vmatpush1.msra.mxu0 0.0
  %794 = vmatprep.subr.mxu0 0.0
  %795 = vmatpush1.msra.mxu0 0.0
  %796 = vmatprep.subr.mxu0 0.0
  %797 = vmatpush1.msra.mxu0 0.0
  %798 = vmatprep.subr.mxu0 0.0
  %799 = vmatpush1.msra.mxu0 0.0
  %800 = vmatprep.subr.mxu0 0.0
  %801 = vmatpush1.msra.mxu0 0.0
  %802 = vmatprep.subr.mxu0 0.0
  %803 = vmatpush1.msra.mxu0 0.0
  %804 = vmatprep.subr.mxu0 0.0
  %805 = vmatpush1.msra.mxu0 0.0
  %806 = vmatprep.subr.mxu0 0.0
  %807 = vmatpush1.msra.mxu0 0.0
  %808 = vmatprep.subr.mxu0 0.0
  %809 = vmatpush1.msra.mxu0 0.0
  %810 = vmatprep.subr.mxu0 0.0
  %811 = vmatpush1.msra.mxu0 0.0
  %812 = vmatprep.mubr.f32.mxu0 0.0
  %813 = vmatmul.mubr.f32.gmra.mrb[0].mxu0 %v732
  %v814 = vpop.f32.mrb[0].mxu0
  %v815 = vadd.f32 0.0, %v814
  %v816 = vpop.f32.mrb[0].mxu0
  %v817 = vadd.f32 0.0, %v816
  %818 = vdwg.mxu0
  %819 = vmatprep.subr.mxu0 %v740
  %820 = vmatpush1.msra.mxu0 %v738
  %821 = vmatprep.subr.mxu0 0.0
  %822 = vmatpush1.msra.mxu0 0.0
  %823 = vmatprep.subr.mxu0 0.0
  %824 = vmatpush1.msra.mxu0 0.0
  %825 = vmatprep.subr.mxu0 0.0
  %826 = vmatpush1.msra.mxu0 0.0
  %827 = vmatprep.subr.mxu0 0.0
  %828 = vmatpush1.msra.mxu0 0.0
  %829 = vmatprep.subr.mxu0 0.0
  %830 = vmatpush1.msra.mxu0 0.0
  %831 = vmatprep.subr.mxu0 0.0
  %832 = vmatpush1.msra.mxu0 0.0
  %833 = vmatprep.subr.mxu0 0.0
  %834 = vmatpush1.msra.mxu0 0.0
  %835 = vmatprep.subr.mxu0 0.0
  %836 = vmatpush1.msra.mxu0 0.0
  %837 = vmatprep.subr.mxu0 0.0
  %838 = vmatpush1.msra.mxu0 0.0
  %839 = vmatprep.subr.mxu0 0.0
  %840 = vmatpush1.msra.mxu0 0.0
  %841 = vmatprep.subr.mxu0 0.0
  %842 = vmatpush1.msra.mxu0 0.0
  %843 = vmatprep.subr.mxu0 0.0
  %844 = vmatpush1.msra.mxu0 0.0
  %845 = vmatprep.subr.mxu0 0.0
  %846 = vmatpush1.msra.mxu0 0.0
  %847 = vmatprep.subr.mxu0 0.0
  %848 = vmatpush1.msra.mxu0 0.0
  %849 = vmatprep.subr.mxu0 0.0
  %850 = vmatpush1.msra.mxu0 0.0
  %851 = vmatprep.subr.mxu0 0.0
  %852 = vmatpush1.msra.mxu0 0.0
  %853 = vmatprep.subr.mxu0 0.0
  %854 = vmatpush1.msra.mxu0 0.0
  %855 = vmatprep.subr.mxu0 0.0
  %856 = vmatpush1.msra.mxu0 0.0
  %857 = vmatprep.subr.mxu0 0.0
  %858 = vmatpush1.msra.mxu0 0.0
  %859 = vmatprep.subr.mxu0 0.0
  %860 = vmatpush1.msra.mxu0 0.0
  %861 = vmatprep.subr.mxu0 0.0
  %862 = vmatpush1.msra.mxu0 0.0
  %863 = vmatprep.subr.mxu0 0.0
  %864 = vmatpush1.msra.mxu0 0.0
  %865 = vmatprep.subr.mxu0 0.0
  %866 = vmatpush1.msra.mxu0 0.0
  %867 = vmatprep.subr.mxu0 0.0
  %868 = vmatpush1.msra.mxu0 0.0
  %869 = vmatprep.subr.mxu0 0.0
  %870 = vmatpush1.msra.mxu0 0.0
  %871 = vmatprep.subr.mxu0 0.0
  %872 = vmatpush1.msra.mxu0 0.0
  %873 = vmatprep.subr.mxu0 0.0
  %874 = vmatpush1.msra.mxu0 0.0
  %875 = vmatprep.subr.mxu0 0.0
  %876 = vmatpush1.msra.mxu0 0.0
  %877 = vmatprep.subr.mxu0 0.0
  %878 = vmatpush1.msra.mxu0 0.0
  %879 = vmatprep.subr.mxu0 0.0
  %880 = vmatpush1.msra.mxu0 0.0
  %881 = vmatprep.subr.mxu0 0.0
  %882 = vmatpush1.msra.mxu0 0.0
  %883 = vmatprep.mubr.f32.mxu0 0.0
  %884 = vmatmul.mubr.f32.gmra.mrb[0].mxu0 %v732
  %v885 = vpop.f32.mrb[0].mxu0
  %v886 = vadd.f32 0.0, %v885
  %v887 = vpop.f32.mrb[0].mxu0
  %888 = vdwg.mxu0
  %889 = vmatprep.subr.mxu0 %v744
  %890 = vmatpush1.msra.mxu0 %v742
  %891 = vmatprep.subr.mxu0 0.0
  %892 = vmatpush1.msra.mxu0 0.0
  %893 = vmatprep.subr.mxu0 0.0
  %894 = vmatpush1.msra.mxu0 0.0
  %895 = vmatprep.subr.mxu0 0.0
  %896 = vmatpush1.msra.mxu0 0.0
  %897 = vmatprep.subr.mxu0 0.0
  %898 = vmatpush1.msra.mxu0 0.0
  %899 = vmatprep.subr.mxu0 0.0
  %900 = vmatpush1.msra.mxu0 0.0
  %901 = vmatprep.subr.mxu0 0.0
  %902 = vmatpush1.msra.mxu0 0.0
  %903 = vmatprep.subr.mxu0 0.0
  %904 = vmatpush1.msra.mxu0 0.0
  %905 = vmatprep.subr.mxu0 0.0
  %906 = vmatpush1.msra.mxu0 0.0
  %907 = vmatprep.subr.mxu0 0.0
  %908 = vmatpush1.msra.mxu0 0.0
  %909 = vmatprep.subr.mxu0 0.0
  %910 = vmatpush1.msra.mxu0 0.0
  %911 = vmatprep.subr.mxu0 0.0
  %912 = vmatpush1.msra.mxu0 0.0
  %913 = vmatprep.subr.mxu0 0.0
  %914 = vmatpush1.msra.mxu0 0.0
  %915 = vmatprep.subr.mxu0 0.0
  %916 = vmatpush1.msra.mxu0 0.0
  %917 = vmatprep.subr.mxu0 0.0
  %918 = vmatpush1.msra.mxu0 0.0
  %919 = vmatprep.subr.mxu0 0.0
  %920 = vmatpush1.msra.mxu0 0.0
  %921 = vmatprep.subr.mxu0 0.0
  %922 = vmatpush1.msra.mxu0 0.0
  %923 = vmatprep.subr.mxu0 0.0
  %924 = vmatpush1.msra.mxu0 0.0
  %925 = vmatprep.subr.mxu0 0.0
  %926 = vmatpush1.msra.mxu0 0.0
  %927 = vmatprep.subr.mxu0 0.0
  %928 = vmatpush1.msra.mxu0 0.0
  %929 = vmatprep.subr.mxu0 0.0
  %930 = vmatpush1.msra.mxu0 0.0
  %931 = vmatprep.subr.mxu0 0.0
  %932 = vmatpush1.msra.mxu0 0.0
  %933 = vmatprep.subr.mxu0 0.0
  %934 = vmatpush1.msra.mxu0 0.0
  %935 = vmatprep.subr.mxu0 0.0
  %936 = vmatpush1.msra.mxu0 0.0
  %937 = vmatprep.subr.mxu0 0.0
  %938 = vmatpush1.msra.mxu0 0.0
  %939 = vmatprep.subr.mxu0 0.0
  %940 = vmatpush1.msra.mxu0 0.0
  %941 = vmatprep.subr.mxu0 0.0
  %942 = vmatpush1.msra.mxu0 0.0
  %943 = vmatprep.subr.mxu0 0.0
  %944 = vmatpush1.msra.mxu0 0.0
  %945 = vmatprep.subr.mxu0 0.0
  %946 = vmatpush1.msra.mxu0 0.0
  %947 = vmatprep.subr.mxu0 0.0
  %948 = vmatpush1.msra.mxu0 0.0
  %949 = vmatprep.subr.mxu0 0.0
  %950 = vmatpush1.msra.mxu0 0.0
  %951 = vmatprep.subr.mxu0 0.0
  %952 = vmatpush1.msra.mxu0 0.0
  %953 = vmatprep.mubr.f32.mxu0 0.0
  %954 = vmatmul.mubr.f32.gmra.mrb[0].mxu0 %v732
  %v955 = vpop.f32.mrb[0].mxu0
  %v956 = vadd.f32 0.0, %v955
  %v957 = vpop.f32.mrb[0].mxu0
  %v958 = vadd.f32 0.0, %v957
  %959 = vdwg.mxu0
  %960 = vmatprep.subr.mxu0 0.0
  %961 = vmatpush1.msra.mxu0 %v746
  %962 = vmatprep.subr.mxu0 0.0
  %963 = vmatpush1.msra.mxu0 0.0
  %964 = vmatprep.subr.mxu0 0.0
  %965 = vmatpush1.msra.mxu0 0.0
  %966 = vmatprep.subr.mxu0 0.0
  %967 = vmatpush1.msra.mxu0 0.0
  %968 = vmatprep.subr.mxu0 0.0
  %969 = vmatpush1.msra.mxu0 0.0
  %970 = vmatprep.subr.mxu0 0.0
  %971 = vmatpush1.msra.mxu0 0.0
  %972 = vmatprep.subr.mxu0 0.0
  %973 = vmatpush1.msra.mxu0 0.0
  %974 = vmatprep.subr.mxu0 0.0
  %975 = vmatpush1.msra.mxu0 0.0
  %976 = vmatprep.subr.mxu0 0.0
  %977 = vmatpush1.msra.mxu0 0.0
  %978 = vmatprep.subr.mxu0 0.0
  %979 = vmatpush1.msra.mxu0 0.0
  %980 = vmatprep.subr.mxu0 0.0
  %981 = vmatpush1.msra.mxu0 0.0
  %982 = vmatprep.subr.mxu0 0.0
  %983 = vmatpush1.msra.mxu0 0.0
  %984 = vmatprep.subr.mxu0 0.0
  %985 = vmatpush1.msra.mxu0 0.0
  %986 = vmatprep.subr.mxu0 0.0
  %987 = vmatpush1.msra.mxu0 0.0
  %988 = vmatprep.subr.mxu0 0.0
  %989 = vmatpush1.msra.mxu0 0.0
  %990 = vmatprep.subr.mxu0 0.0
  %991 = vmatpush1.msra.mxu0 0.0
  %992 = vmatprep.subr.mxu0 0.0
  %993 = vmatpush1.msra.mxu0 0.0
  %994 = vmatprep.subr.mxu0 0.0
  %995 = vmatpush1.msra.mxu0 0.0
  %996 = vmatprep.subr.mxu0 0.0
  %997 = vmatpush1.msra.mxu0 0.0
  %998 = vmatprep.subr.mxu0 0.0
  %999 = vmatpush1.msra.mxu0 0.0
  %1000 = vmatprep.subr.mxu0 0.0
  %1001 = vmatpush1.msra.mxu0 0.0
  %1002 = vmatprep.subr.mxu0 0.0
  %1003 = vmatpush1.msra.mxu0 0.0
  %1004 = vmatprep.subr.mxu0 0.0
  %1005 = vmatpush1.msra.mxu0 0.0
  %1006 = vmatprep.subr.mxu0 0.0
  %1007 = vmatpush1.msra.mxu0 0.0
  %1008 = vmatprep.subr.mxu0 0.0
  %1009 = vmatpush1.msra.mxu0 0.0
  %1010 = vmatprep.subr.mxu0 0.0
  %1011 = vmatpush1.msra.mxu0 0.0
  %1012 = vmatprep.subr.mxu0 0.0
  %1013 = vmatpush1.msra.mxu0 0.0
  %1014 = vmatprep.subr.mxu0 0.0
  %1015 = vmatpush1.msra.mxu0 0.0
  %1016 = vmatprep.subr.mxu0 0.0
  %1017 = vmatpush1.msra.mxu0 0.0
  %1018 = vmatprep.subr.mxu0 0.0
  %1019 = vmatpush1.msra.mxu0 0.0
  %1020 = vmatprep.subr.mxu0 0.0
  %1021 = vmatpush1.msra.mxu0 0.0
  %1022 = vmatprep.subr.mxu0 0.0
  %1023 = vmatpush1.msra.mxu0 0.0
  %1024 = vmatprep.mubr.f32.mxu0 0.0
  %1025 = vmatmul.mubr.f32.gmra.mrb[0].mxu0 %v732
  %v1026 = vpop.f32.mrb[0].mxu0
  %v1027 = vadd.f32 0.0, %v1026
  %v1028 = vpop.f32.mrb[0].mxu0
  %1029 = vdwg.mxu0
  %v1030 = vadd.f32 %v490, %v815
  %v1031 = vadd.f32 %v492, %v817
  %v1032 = vadd.f32 %v561, %v886
  %v1033 = vadd.f32 %v631, %v956
  %v1034 = vadd.f32 %v633, %v958
  %v1035 = vadd.f32 %v702, %v1027
  %s1036 = scalar_lea.vmem %s2, 24
  %v1037 = vld [vmem:[%s1036] sm:$0xff]
  %1038 = vrot.lane.b32.xlu0 %v42, 1
  %v1039 = vpop.permute.xlu0 %1038
  %1040 = vrot.lane.b32.xlu0 %v53, 1
  %v1041 = vpop.permute.xlu0 %1040
  %1042 = vrot.lane.b32.xlu0 %v43, 1
  %v1043 = vpop.permute.xlu0 %1042
  %1044 = vrot.lane.b32.xlu0 %v54, 1
  %v1045 = vpop.permute.xlu0 %1044
  %1046 = vrot.lane.b32.xlu0 %v44, 1
  %v1047 = vpop.permute.xlu0 %1046
  %1048 = vrot.lane.b32.xlu0 %v55, 1
  %v1049 = vpop.permute.xlu0 %1048
  %1050 = vrot.lane.b32.xlu0 %v45, 1
  %v1051 = vpop.permute.xlu0 %1050
  %1052 = vrot.lane.b32.xlu0 %v56, 1
  %v1053 = vpop.permute.xlu0 %1052
  %vm1054 = vcmask 7168
  %v1055 = vsel %vm1054, %v1039, %v1041
  %v1056 = vsel %vm1054, %v1041, %v1043
  %v1057 = vsel %vm1054, %v1043, %v1045
  %v1058 = vsel %vm1054, %v1045, %v1047
  %v1059 = vsel %vm1054, %v1047, %v1049
  %v1060 = vsel %vm1054, %v1049, %v1051
  %v1061 = vsel %vm1054, %v1051, %v1053
  %v1063 = vsel %vm81, %v1037, 0
  %v1065 = vsel %vm85, %v1055, 0
  %v1067 = vsel %vm85, %v1056, 0
  %v1069 = vsel %vm85, %v1057, 0
  %v1071 = vsel %vm85, %v1058, 0
  %v1073 = vsel %vm85, %v1059, 0
  %v1075 = vsel %vm85, %v1060, 0
  %v1077 = vsel %vm85, %v1061, 0
  %1079 = vmatprep.subr.mxu0 %v1067
  %1080 = vmatpush1.msra.mxu0 %v1065
  %1081 = vmatprep.subr.mxu0 0.0
  %1082 = vmatpush1.msra.mxu0 0.0
  %1083 = vmatprep.subr.mxu0 0.0
  %1084 = vmatpush1.msra.mxu0 0.0
  %1085 = vmatprep.subr.mxu0 0.0
  %1086 = vmatpush1.msra.mxu0 0.0
  %1087 = vmatprep.subr.mxu0 0.0
  %1088 = vmatpush1.msra.mxu0 0.0
  %1089 = vmatprep.subr.mxu0 0.0
  %1090 = vmatpush1.msra.mxu0 0.0
  %1091 = vmatprep.subr.mxu0 0.0
  %1092 = vmatpush1.msra.mxu0 0.0
  %1093 = vmatprep.subr.mxu0 0.0
  %1094 = vmatpush1.msra.mxu0 0.0
  %1095 = vmatprep.subr.mxu0 0.0
  %1096 = vmatpush1.msra.mxu0 0.0
  %1097 = vmatprep.subr.mxu0 0.0
  %1098 = vmatpush1.msra.mxu0 0.0
  %1099 = vmatprep.subr.mxu0 0.0
  %1100 = vmatpush1.msra.mxu0 0.0
  %1101 = vmatprep.subr.mxu0 0.0
  %1102 = vmatpush1.msra.mxu0 0.0
  %1103 = vmatprep.subr.mxu0 0.0
  %1104 = vmatpush1.msra.mxu0 0.0
  %1105 = vmatprep.subr.mxu0 0.0
  %1106 = vmatpush1.msra.mxu0 0.0
  %1107 = vmatprep.subr.mxu0 0.0
  %1108 = vmatpush1.msra.mxu0 0.0
  %1109 = vmatprep.subr.mxu0 0.0
  %1110 = vmatpush1.msra.mxu0 0.0
  %1111 = vmatprep.subr.mxu0 0.0
  %1112 = vmatpush1.msra.mxu0 0.0
  %1113 = vmatprep.subr.mxu0 0.0
  %1114 = vmatpush1.msra.mxu0 0.0
  %1115 = vmatprep.subr.mxu0 0.0
  %1116 = vmatpush1.msra.mxu0 0.0
  %1117 = vmatprep.subr.mxu0 0.0
  %1118 = vmatpush1.msra.mxu0 0.0
  %1119 = vmatprep.subr.mxu0 0.0
  %1120 = vmatpush1.msra.mxu0 0.0
  %1121 = vmatprep.subr.mxu0 0.0
  %1122 = vmatpush1.msra.mxu0 0.0
  %1123 = vmatprep.subr.mxu0 0.0
  %1124 = vmatpush1.msra.mxu0 0.0
  %1125 = vmatprep.subr.mxu0 0.0
  %1126 = vmatpush1.msra.mxu0 0.0
  %1127 = vmatprep.subr.mxu0 0.0
  %1128 = vmatpush1.msra.mxu0 0.0
  %1129 = vmatprep.subr.mxu0 0.0
  %1130 = vmatpush1.msra.mxu0 0.0
  %1131 = vmatprep.subr.mxu0 0.0
  %1132 = vmatpush1.msra.mxu0 0.0
  %1133 = vmatprep.subr.mxu0 0.0
  %1134 = vmatpush1.msra.mxu0 0.0
  %1135 = vmatprep.subr.mxu0 0.0
  %1136 = vmatpush1.msra.mxu0 0.0
  %1137 = vmatprep.subr.mxu0 0.0
  %1138 = vmatpush1.msra.mxu0 0.0
  %1139 = vmatprep.subr.mxu0 0.0
  %1140 = vmatpush1.msra.mxu0 0.0
  %1141 = vmatprep.subr.mxu0 0.0
  %1142 = vmatpush1.msra.mxu0 0.0
  %1143 = vmatprep.mubr.f32.mxu0 0.0
  %1144 = vmatmul.mubr.f32.gmra.mrb[0].mxu0 %v1063
  %v1145 = vpop.f32.mrb[0].mxu0
  %v1146 = vadd.f32 0.0, %v1145
  %v1147 = vpop.f32.mrb[0].mxu0
  %v1148 = vadd.f32 0.0, %v1147
  %1149 = vdwg.mxu0
  %1150 = vmatprep.subr.mxu0 %v1071
  %1151 = vmatpush1.msra.mxu0 %v1069
  %1152 = vmatprep.subr.mxu0 0.0
  %1153 = vmatpush1.msra.mxu0 0.0
  %1154 = vmatprep.subr.mxu0 0.0
  %1155 = vmatpush1.msra.mxu0 0.0
  %1156 = vmatprep.subr.mxu0 0.0
  %1157 = vmatpush1.msra.mxu0 0.0
  %1158 = vmatprep.subr.mxu0 0.0
  %1159 = vmatpush1.msra.mxu0 0.0
  %1160 = vmatprep.subr.mxu0 0.0
  %1161 = vmatpush1.msra.mxu0 0.0
  %1162 = vmatprep.subr.mxu0 0.0
  %1163 = vmatpush1.msra.mxu0 0.0
  %1164 = vmatprep.subr.mxu0 0.0
  %1165 = vmatpush1.msra.mxu0 0.0
  %1166 = vmatprep.subr.mxu0 0.0
  %1167 = vmatpush1.msra.mxu0 0.0
  %1168 = vmatprep.subr.mxu0 0.0
  %1169 = vmatpush1.msra.mxu0 0.0
  %1170 = vmatprep.subr.mxu0 0.0
  %1171 = vmatpush1.msra.mxu0 0.0
  %1172 = vmatprep.subr.mxu0 0.0
  %1173 = vmatpush1.msra.mxu0 0.0
  %1174 = vmatprep.subr.mxu0 0.0
  %1175 = vmatpush1.msra.mxu0 0.0
  %1176 = vmatprep.subr.mxu0 0.0
  %1177 = vmatpush1.msra.mxu0 0.0
  %1178 = vmatprep.subr.mxu0 0.0
  %1179 = vmatpush1.msra.mxu0 0.0
  %1180 = vmatprep.subr.mxu0 0.0
  %1181 = vmatpush1.msra.mxu0 0.0
  %1182 = vmatprep.subr.mxu0 0.0
  %1183 = vmatpush1.msra.mxu0 0.0
  %1184 = vmatprep.subr.mxu0 0.0
  %1185 = vmatpush1.msra.mxu0 0.0
  %1186 = vmatprep.subr.mxu0 0.0
  %1187 = vmatpush1.msra.mxu0 0.0
  %1188 = vmatprep.subr.mxu0 0.0
  %1189 = vmatpush1.msra.mxu0 0.0
  %1190 = vmatprep.subr.mxu0 0.0
  %1191 = vmatpush1.msra.mxu0 0.0
  %1192 = vmatprep.subr.mxu0 0.0
  %1193 = vmatpush1.msra.mxu0 0.0
  %1194 = vmatprep.subr.mxu0 0.0
  %1195 = vmatpush1.msra.mxu0 0.0
  %1196 = vmatprep.subr.mxu0 0.0
  %1197 = vmatpush1.msra.mxu0 0.0
  %1198 = vmatprep.subr.mxu0 0.0
  %1199 = vmatpush1.msra.mxu0 0.0
  %1200 = vmatprep.subr.mxu0 0.0
  %1201 = vmatpush1.msra.mxu0 0.0
  %1202 = vmatprep.subr.mxu0 0.0
  %1203 = vmatpush1.msra.mxu0 0.0
  %1204 = vmatprep.subr.mxu0 0.0
  %1205 = vmatpush1.msra.mxu0 0.0
  %1206 = vmatprep.subr.mxu0 0.0
  %1207 = vmatpush1.msra.mxu0 0.0
  %1208 = vmatprep.subr.mxu0 0.0
  %1209 = vmatpush1.msra.mxu0 0.0
  %1210 = vmatprep.subr.mxu0 0.0
  %1211 = vmatpush1.msra.mxu0 0.0
  %1212 = vmatprep.subr.mxu0 0.0
  %1213 = vmatpush1.msra.mxu0 0.0
  %1214 = vmatprep.mubr.f32.mxu0 0.0
  %1215 = vmatmul.mubr.f32.gmra.mrb[0].mxu0 %v1063
  %v1216 = vpop.f32.mrb[0].mxu0
  %v1217 = vadd.f32 0.0, %v1216
  %v1218 = vpop.f32.mrb[0].mxu0
  %1219 = vdwg.mxu0
  %1220 = vmatprep.subr.mxu0 %v1075
  %1221 = vmatpush1.msra.mxu0 %v1073
  %1222 = vmatprep.subr.mxu0 0.0
  %1223 = vmatpush1.msra.mxu0 0.0
  %1224 = vmatprep.subr.mxu0 0.0
  %1225 = vmatpush1.msra.mxu0 0.0
  %1226 = vmatprep.subr.mxu0 0.0
  %1227 = vmatpush1.msra.mxu0 0.0
  %1228 = vmatprep.subr.mxu0 0.0
  %1229 = vmatpush1.msra.mxu0 0.0
  %1230 = vmatprep.subr.mxu0 0.0
  %1231 = vmatpush1.msra.mxu0 0.0
  %1232 = vmatprep.subr.mxu0 0.0
  %1233 = vmatpush1.msra.mxu0 0.0
  %1234 = vmatprep.subr.mxu0 0.0
  %1235 = vmatpush1.msra.mxu0 0.0
  %1236 = vmatprep.subr.mxu0 0.0
  %1237 = vmatpush1.msra.mxu0 0.0
  %1238 = vmatprep.subr.mxu0 0.0
  %1239 = vmatpush1.msra.mxu0 0.0
  %1240 = vmatprep.subr.mxu0 0.0
  %1241 = vmatpush1.msra.mxu0 0.0
  %1242 = vmatprep.subr.mxu0 0.0
  %1243 = vmatpush1.msra.mxu0 0.0
  %1244 = vmatprep.subr.mxu0 0.0
  %1245 = vmatpush1.msra.mxu0 0.0
  %1246 = vmatprep.subr.mxu0 0.0
  %1247 = vmatpush1.msra.mxu0 0.0
  %1248 = vmatprep.subr.mxu0 0.0
  %1249 = vmatpush1.msra.mxu0 0.0
  %1250 = vmatprep.subr.mxu0 0.0
  %1251 = vmatpush1.msra.mxu0 0.0
  %1252 = vmatprep.subr.mxu0 0.0
  %1253 = vmatpush1.msra.mxu0 0.0
  %1254 = vmatprep.subr.mxu0 0.0
  %1255 = vmatpush1.msra.mxu0 0.0
  %1256 = vmatprep.subr.mxu0 0.0
  %1257 = vmatpush1.msra.mxu0 0.0
  %1258 = vmatprep.subr.mxu0 0.0
  %1259 = vmatpush1.msra.mxu0 0.0
  %1260 = vmatprep.subr.mxu0 0.0
  %1261 = vmatpush1.msra.mxu0 0.0
  %1262 = vmatprep.subr.mxu0 0.0
  %1263 = vmatpush1.msra.mxu0 0.0
  %1264 = vmatprep.subr.mxu0 0.0
  %1265 = vmatpush1.msra.mxu0 0.0
  %1266 = vmatprep.subr.mxu0 0.0
  %1267 = vmatpush1.msra.mxu0 0.0
  %1268 = vmatprep.subr.mxu0 0.0
  %1269 = vmatpush1.msra.mxu0 0.0
  %1270 = vmatprep.subr.mxu0 0.0
  %1271 = vmatpush1.msra.mxu0 0.0
  %1272 = vmatprep.subr.mxu0 0.0
  %1273 = vmatpush1.msra.mxu0 0.0
  %1274 = vmatprep.subr.mxu0 0.0
  %1275 = vmatpush1.msra.mxu0 0.0
  %1276 = vmatprep.subr.mxu0 0.0
  %1277 = vmatpush1.msra.mxu0 0.0
  %1278 = vmatprep.subr.mxu0 0.0
  %1279 = vmatpush1.msra.mxu0 0.0
  %1280 = vmatprep.subr.mxu0 0.0
  %1281 = vmatpush1.msra.mxu0 0.0
  %1282 = vmatprep.subr.mxu0 0.0
  %1283 = vmatpush1.msra.mxu0 0.0
  %1284 = vmatprep.mubr.f32.mxu0 0.0
  %1285 = vmatmul.mubr.f32.gmra.mrb[0].mxu0 %v1063
  %v1286 = vpop.f32.mrb[0].mxu0
  %v1287 = vadd.f32 0.0, %v1286
  %v1288 = vpop.f32.mrb[0].mxu0
  %v1289 = vadd.f32 0.0, %v1288
  %1290 = vdwg.mxu0
  %1291 = vmatprep.subr.mxu0 0.0
  %1292 = vmatpush1.msra.mxu0 %v1077
  %1293 = vmatprep.subr.mxu0 0.0
  %1294 = vmatpush1.msra.mxu0 0.0
  %1295 = vmatprep.subr.mxu0 0.0
  %1296 = vmatpush1.msra.mxu0 0.0
  %1297 = vmatprep.subr.mxu0 0.0
  %1298 = vmatpush1.msra.mxu0 0.0
  %1299 = vmatprep.subr.mxu0 0.0
  %1300 = vmatpush1.msra.mxu0 0.0
  %1301 = vmatprep.subr.mxu0 0.0
  %1302 = vmatpush1.msra.mxu0 0.0
  %1303 = vmatprep.subr.mxu0 0.0
  %1304 = vmatpush1.msra.mxu0 0.0
  %1305 = vmatprep.subr.mxu0 0.0
  %1306 = vmatpush1.msra.mxu0 0.0
  %1307 = vmatprep.subr.mxu0 0.0
  %1308 = vmatpush1.msra.mxu0 0.0
  %1309 = vmatprep.subr.mxu0 0.0
  %1310 = vmatpush1.msra.mxu0 0.0
  %1311 = vmatprep.subr.mxu0 0.0
  %1312 = vmatpush1.msra.mxu0 0.0
  %1313 = vmatprep.subr.mxu0 0.0
  %1314 = vmatpush1.msra.mxu0 0.0
  %1315 = vmatprep.subr.mxu0 0.0
  %1316 = vmatpush1.msra.mxu0 0.0
  %1317 = vmatprep.subr.mxu0 0.0
  %1318 = vmatpush1.msra.mxu0 0.0
  %1319 = vmatprep.subr.mxu0 0.0
  %1320 = vmatpush1.msra.mxu0 0.0
  %1321 = vmatprep.subr.mxu0 0.0
  %1322 = vmatpush1.msra.mxu0 0.0
  %1323 = vmatprep.subr.mxu0 0.0
  %1324 = vmatpush1.msra.mxu0 0.0
  %1325 = vmatprep.subr.mxu0 0.0
  %1326 = vmatpush1.msra.mxu0 0.0
  %1327 = vmatprep.subr.mxu0 0.0
  %1328 = vmatpush1.msra.mxu0 0.0
  %1329 = vmatprep.subr.mxu0 0.0
  %1330 = vmatpush1.msra.mxu0 0.0
  %1331 = vmatprep.subr.mxu0 0.0
  %1332 = vmatpush1.msra.mxu0 0.0
  %1333 = vmatprep.subr.mxu0 0.0
  %1334 = vmatpush1.msra.mxu0 0.0
  %1335 = vmatprep.subr.mxu0 0.0
  %1336 = vmatpush1.msra.mxu0 0.0
  %1337 = vmatprep.subr.mxu0 0.0
  %1338 = vmatpush1.msra.mxu0 0.0
  %1339 = vmatprep.subr.mxu0 0.0
  %1340 = vmatpush1.msra.mxu0 0.0
  %1341 = vmatprep.subr.mxu0 0.0
  %1342 = vmatpush1.msra.mxu0 0.0
  %1343 = vmatprep.subr.mxu0 0.0
  %1344 = vmatpush1.msra.mxu0 0.0
  %1345 = vmatprep.subr.mxu0 0.0
  %1346 = vmatpush1.msra.mxu0 0.0
  %1347 = vmatprep.subr.mxu0 0.0
  %1348 = vmatpush1.msra.mxu0 0.0
  %1349 = vmatprep.subr.mxu0 0.0
  %1350 = vmatpush1.msra.mxu0 0.0
  %1351 = vmatprep.subr.mxu0 0.0
  %1352 = vmatpush1.msra.mxu0 0.0
  %1353 = vmatprep.subr.mxu0 0.0
  %1354 = vmatpush1.msra.mxu0 0.0
  %1355 = vmatprep.mubr.f32.mxu0 0.0
  %1356 = vmatmul.mubr.f32.gmra.mrb[0].mxu0 %v1063
  %v1357 = vpop.f32.mrb[0].mxu0
  %v1358 = vadd.f32 0.0, %v1357
  %v1359 = vpop.f32.mrb[0].mxu0
  %1360 = vdwg.mxu0
  %v1361 = vadd.f32 %v1030, %v1146
  %v1362 = vadd.f32 %v1031, %v1148
  %v1363 = vadd.f32 %v1032, %v1217
  %v1364 = vadd.f32 %v1033, %v1287
  %v1365 = vadd.f32 %v1034, %v1289
  %v1366 = vadd.f32 %v1035, %v1358
  %s1367 = scalar_lea.vmem %s2, 32
  %v1368 = vld [vmem:[%s1367] sm:$0xff]
  %v1370 = vsel %vm81, %v1368, 0
  %v1372 = vsel %vm85, %v53, 0
  %v1374 = vsel %vm85, %v43, 0
  %v1376 = vsel %vm85, %v54, 0
  %v1378 = vsel %vm85, %v44, 0
  %v1380 = vsel %vm85, %v55, 0
  %v1382 = vsel %vm85, %v45, 0
  %v1384 = vsel %vm85, %v56, 0
  %1386 = vmatprep.subr.mxu0 %v1374
  %1387 = vmatpush1.msra.mxu0 %v1372
  %1388 = vmatprep.subr.mxu0 0.0
  %1389 = vmatpush1.msra.mxu0 0.0
  %1390 = vmatprep.subr.mxu0 0.0
  %1391 = vmatpush1.msra.mxu0 0.0
  %1392 = vmatprep.subr.mxu0 0.0
  %1393 = vmatpush1.msra.mxu0 0.0
  %1394 = vmatprep.subr.mxu0 0.0
  %1395 = vmatpush1.msra.mxu0 0.0
  %1396 = vmatprep.subr.mxu0 0.0
  %1397 = vmatpush1.msra.mxu0 0.0
  %1398 = vmatprep.subr.mxu0 0.0
  %1399 = vmatpush1.msra.mxu0 0.0
  %1400 = vmatprep.subr.mxu0 0.0
  %1401 = vmatpush1.msra.mxu0 0.0
  %1402 = vmatprep.subr.mxu0 0.0
  %1403 = vmatpush1.msra.mxu0 0.0
  %1404 = vmatprep.subr.mxu0 0.0
  %1405 = vmatpush1.msra.mxu0 0.0
  %1406 = vmatprep.subr.mxu0 0.0
  %1407 = vmatpush1.msra.mxu0 0.0
  %1408 = vmatprep.subr.mxu0 0.0
  %1409 = vmatpush1.msra.mxu0 0.0
  %1410 = vmatprep.subr.mxu0 0.0
  %1411 = vmatpush1.msra.mxu0 0.0
  %1412 = vmatprep.subr.mxu0 0.0
  %1413 = vmatpush1.msra.mxu0 0.0
  %1414 = vmatprep.subr.mxu0 0.0
  %1415 = vmatpush1.msra.mxu0 0.0
  %1416 = vmatprep.subr.mxu0 0.0
  %1417 = vmatpush1.msra.mxu0 0.0
  %1418 = vmatprep.subr.mxu0 0.0
  %1419 = vmatpush1.msra.mxu0 0.0
  %1420 = vmatprep.subr.mxu0 0.0
  %1421 = vmatpush1.msra.mxu0 0.0
  %1422 = vmatprep.subr.mxu0 0.0
  %1423 = vmatpush1.msra.mxu0 0.0
  %1424 = vmatprep.subr.mxu0 0.0
  %1425 = vmatpush1.msra.mxu0 0.0
  %1426 = vmatprep.subr.mxu0 0.0
  %1427 = vmatpush1.msra.mxu0 0.0
  %1428 = vmatprep.subr.mxu0 0.0
  %1429 = vmatpush1.msra.mxu0 0.0
  %1430 = vmatprep.subr.mxu0 0.0
  %1431 = vmatpush1.msra.mxu0 0.0
  %1432 = vmatprep.subr.mxu0 0.0
  %1433 = vmatpush1.msra.mxu0 0.0
  %1434 = vmatprep.subr.mxu0 0.0
  %1435 = vmatpush1.msra.mxu0 0.0
  %1436 = vmatprep.subr.mxu0 0.0
  %1437 = vmatpush1.msra.mxu0 0.0
  %1438 = vmatprep.subr.mxu0 0.0
  %1439 = vmatpush1.msra.mxu0 0.0
  %1440 = vmatprep.subr.mxu0 0.0
  %1441 = vmatpush1.msra.mxu0 0.0
  %1442 = vmatprep.subr.mxu0 0.0
  %1443 = vmatpush1.msra.mxu0 0.0
  %1444 = vmatprep.subr.mxu0 0.0
  %1445 = vmatpush1.msra.mxu0 0.0
  %1446 = vmatprep.subr.mxu0 0.0
  %1447 = vmatpush1.msra.mxu0 0.0
  %1448 = vmatprep.subr.mxu0 0.0
  %1449 = vmatpush1.msra.mxu0 0.0
  %1450 = vmatprep.mubr.f32.mxu0 0.0
  %1451 = vmatmul.mubr.f32.gmra.mrb[0].mxu0 %v1370
  %v1452 = vpop.f32.mrb[0].mxu0
  %v1453 = vadd.f32 0.0, %v1452
  %v1454 = vpop.f32.mrb[0].mxu0
  %v1455 = vadd.f32 0.0, %v1454
  %1456 = vdwg.mxu0
  %1457 = vmatprep.subr.mxu0 %v1378
  %1458 = vmatpush1.msra.mxu0 %v1376
  %1459 = vmatprep.subr.mxu0 0.0
  %1460 = vmatpush1.msra.mxu0 0.0
  %1461 = vmatprep.subr.mxu0 0.0
  %1462 = vmatpush1.msra.mxu0 0.0
  %1463 = vmatprep.subr.mxu0 0.0
  %1464 = vmatpush1.msra.mxu0 0.0
  %1465 = vmatprep.subr.mxu0 0.0
  %1466 = vmatpush1.msra.mxu0 0.0
  %1467 = vmatprep.subr.mxu0 0.0
  %1468 = vmatpush1.msra.mxu0 0.0
  %1469 = vmatprep.subr.mxu0 0.0
  %1470 = vmatpush1.msra.mxu0 0.0
  %1471 = vmatprep.subr.mxu0 0.0
  %1472 = vmatpush1.msra.mxu0 0.0
  %1473 = vmatprep.subr.mxu0 0.0
  %1474 = vmatpush1.msra.mxu0 0.0
  %1475 = vmatprep.subr.mxu0 0.0
  %1476 = vmatpush1.msra.mxu0 0.0
  %1477 = vmatprep.subr.mxu0 0.0
  %1478 = vmatpush1.msra.mxu0 0.0
  %1479 = vmatprep.subr.mxu0 0.0
  %1480 = vmatpush1.msra.mxu0 0.0
  %1481 = vmatprep.subr.mxu0 0.0
  %1482 = vmatpush1.msra.mxu0 0.0
  %1483 = vmatprep.subr.mxu0 0.0
  %1484 = vmatpush1.msra.mxu0 0.0
  %1485 = vmatprep.subr.mxu0 0.0
  %1486 = vmatpush1.msra.mxu0 0.0
  %1487 = vmatprep.subr.mxu0 0.0
  %1488 = vmatpush1.msra.mxu0 0.0
  %1489 = vmatprep.subr.mxu0 0.0
  %1490 = vmatpush1.msra.mxu0 0.0
  %1491 = vmatprep.subr.mxu0 0.0
  %1492 = vmatpush1.msra.mxu0 0.0
  %1493 = vmatprep.subr.mxu0 0.0
  %1494 = vmatpush1.msra.mxu0 0.0
  %1495 = vmatprep.subr.mxu0 0.0
  %1496 = vmatpush1.msra.mxu0 0.0
  %1497 = vmatprep.subr.mxu0 0.0
  %1498 = vmatpush1.msra.mxu0 0.0
  %1499 = vmatprep.subr.mxu0 0.0
  %1500 = vmatpush1.msra.mxu0 0.0
  %1501 = vmatprep.subr.mxu0 0.0
  %1502 = vmatpush1.msra.mxu0 0.0
  %1503 = vmatprep.subr.mxu0 0.0
  %1504 = vmatpush1.msra.mxu0 0.0
  %1505 = vmatprep.subr.mxu0 0.0
  %1506 = vmatpush1.msra.mxu0 0.0
  %1507 = vmatprep.subr.mxu0 0.0
  %1508 = vmatpush1.msra.mxu0 0.0
  %1509 = vmatprep.subr.mxu0 0.0
  %1510 = vmatpush1.msra.mxu0 0.0
  %1511 = vmatprep.subr.mxu0 0.0
  %1512 = vmatpush1.msra.mxu0 0.0
  %1513 = vmatprep.subr.mxu0 0.0
  %1514 = vmatpush1.msra.mxu0 0.0
  %1515 = vmatprep.subr.mxu0 0.0
  %1516 = vmatpush1.msra.mxu0 0.0
  %1517 = vmatprep.subr.mxu0 0.0
  %1518 = vmatpush1.msra.mxu0 0.0
  %1519 = vmatprep.subr.mxu0 0.0
  %1520 = vmatpush1.msra.mxu0 0.0
  %1521 = vmatprep.mubr.f32.mxu0 0.0
  %1522 = vmatmul.mubr.f32.gmra.mrb[0].mxu0 %v1370
  %v1523 = vpop.f32.mrb[0].mxu0
  %v1524 = vadd.f32 0.0, %v1523
  %v1525 = vpop.f32.mrb[0].mxu0
  %1526 = vdwg.mxu0
  %1527 = vmatprep.subr.mxu0 %v1382
  %1528 = vmatpush1.msra.mxu0 %v1380
  %1529 = vmatprep.subr.mxu0 0.0
  %1530 = vmatpush1.msra.mxu0 0.0
  %1531 = vmatprep.subr.mxu0 0.0
  %1532 = vmatpush1.msra.mxu0 0.0
  %1533 = vmatprep.subr.mxu0 0.0
  %1534 = vmatpush1.msra.mxu0 0.0
  %1535 = vmatprep.subr.mxu0 0.0
  %1536 = vmatpush1.msra.mxu0 0.0
  %1537 = vmatprep.subr.mxu0 0.0
  %1538 = vmatpush1.msra.mxu0 0.0
  %1539 = vmatprep.subr.mxu0 0.0
  %1540 = vmatpush1.msra.mxu0 0.0
  %1541 = vmatprep.subr.mxu0 0.0
  %1542 = vmatpush1.msra.mxu0 0.0
  %1543 = vmatprep.subr.mxu0 0.0
  %1544 = vmatpush1.msra.mxu0 0.0
  %1545 = vmatprep.subr.mxu0 0.0
  %1546 = vmatpush1.msra.mxu0 0.0
  %1547 = vmatprep.subr.mxu0 0.0
  %1548 = vmatpush1.msra.mxu0 0.0
  %1549 = vmatprep.subr.mxu0 0.0
  %1550 = vmatpush1.msra.mxu0 0.0
  %1551 = vmatprep.subr.mxu0 0.0
  %1552 = vmatpush1.msra.mxu0 0.0
  %1553 = vmatprep.subr.mxu0 0.0
  %1554 = vmatpush1.msra.mxu0 0.0
  %1555 = vmatprep.subr.mxu0 0.0
  %1556 = vmatpush1.msra.mxu0 0.0
  %1557 = vmatprep.subr.mxu0 0.0
  %1558 = vmatpush1.msra.mxu0 0.0
  %1559 = vmatprep.subr.mxu0 0.0
  %1560 = vmatpush1.msra.mxu0 0.0
  %1561 = vmatprep.subr.mxu0 0.0
  %1562 = vmatpush1.msra.mxu0 0.0
  %1563 = vmatprep.subr.mxu0 0.0
  %1564 = vmatpush1.msra.mxu0 0.0
  %1565 = vmatprep.subr.mxu0 0.0
  %1566 = vmatpush1.msra.mxu0 0.0
  %1567 = vmatprep.subr.mxu0 0.0
  %1568 = vmatpush1.msra.mxu0 0.0
  %1569 = vmatprep.subr.mxu0 0.0
  %1570 = vmatpush1.msra.mxu0 0.0
  %1571 = vmatprep.subr.mxu0 0.0
  %1572 = vmatpush1.msra.mxu0 0.0
  %1573 = vmatprep.subr.mxu0 0.0
  %1574 = vmatpush1.msra.mxu0 0.0
  %1575 = vmatprep.subr.mxu0 0.0
  %1576 = vmatpush1.msra.mxu0 0.0
  %1577 = vmatprep.subr.mxu0 0.0
  %1578 = vmatpush1.msra.mxu0 0.0
  %1579 = vmatprep.subr.mxu0 0.0
  %1580 = vmatpush1.msra.mxu0 0.0
  %1581 = vmatprep.subr.mxu0 0.0
  %1582 = vmatpush1.msra.mxu0 0.0
  %1583 = vmatprep.subr.mxu0 0.0
  %1584 = vmatpush1.msra.mxu0 0.0
  %1585 = vmatprep.subr.mxu0 0.0
  %1586 = vmatpush1.msra.mxu0 0.0
  %1587 = vmatprep.subr.mxu0 0.0
  %1588 = vmatpush1.msra.mxu0 0.0
  %1589 = vmatprep.subr.mxu0 0.0
  %1590 = vmatpush1.msra.mxu0 0.0
  %1591 = vmatprep.mubr.f32.mxu0 0.0
  %1592 = vmatmul.mubr.f32.gmra.mrb[0].mxu0 %v1370
  %v1593 = vpop.f32.mrb[0].mxu0
  %v1594 = vadd.f32 0.0, %v1593
  %v1595 = vpop.f32.mrb[0].mxu0
  %v1596 = vadd.f32 0.0, %v1595
  %1597 = vdwg.mxu0
  %1598 = vmatprep.subr.mxu0 0.0
  %1599 = vmatpush1.msra.mxu0 %v1384
  %1600 = vmatprep.subr.mxu0 0.0
  %1601 = vmatpush1.msra.mxu0 0.0
  %1602 = vmatprep.subr.mxu0 0.0
  %1603 = vmatpush1.msra.mxu0 0.0
  %1604 = vmatprep.subr.mxu0 0.0
  %1605 = vmatpush1.msra.mxu0 0.0
  %1606 = vmatprep.subr.mxu0 0.0
  %1607 = vmatpush1.msra.mxu0 0.0
  %1608 = vmatprep.subr.mxu0 0.0
  %1609 = vmatpush1.msra.mxu0 0.0
  %1610 = vmatprep.subr.mxu0 0.0
  %1611 = vmatpush1.msra.mxu0 0.0
  %1612 = vmatprep.subr.mxu0 0.0
  %1613 = vmatpush1.msra.mxu0 0.0
  %1614 = vmatprep.subr.mxu0 0.0
  %1615 = vmatpush1.msra.mxu0 0.0
  %1616 = vmatprep.subr.mxu0 0.0
  %1617 = vmatpush1.msra.mxu0 0.0
  %1618 = vmatprep.subr.mxu0 0.0
  %1619 = vmatpush1.msra.mxu0 0.0
  %1620 = vmatprep.subr.mxu0 0.0
  %1621 = vmatpush1.msra.mxu0 0.0
  %1622 = vmatprep.subr.mxu0 0.0
  %1623 = vmatpush1.msra.mxu0 0.0
  %1624 = vmatprep.subr.mxu0 0.0
  %1625 = vmatpush1.msra.mxu0 0.0
  %1626 = vmatprep.subr.mxu0 0.0
  %1627 = vmatpush1.msra.mxu0 0.0
  %1628 = vmatprep.subr.mxu0 0.0
  %1629 = vmatpush1.msra.mxu0 0.0
  %1630 = vmatprep.subr.mxu0 0.0
  %1631 = vmatpush1.msra.mxu0 0.0
  %1632 = vmatprep.subr.mxu0 0.0
  %1633 = vmatpush1.msra.mxu0 0.0
  %1634 = vmatprep.subr.mxu0 0.0
  %1635 = vmatpush1.msra.mxu0 0.0
  %1636 = vmatprep.subr.mxu0 0.0
  %1637 = vmatpush1.msra.mxu0 0.0
  %1638 = vmatprep.subr.mxu0 0.0
  %1639 = vmatpush1.msra.mxu0 0.0
  %1640 = vmatprep.subr.mxu0 0.0
  %1641 = vmatpush1.msra.mxu0 0.0
  %1642 = vmatprep.subr.mxu0 0.0
  %1643 = vmatpush1.msra.mxu0 0.0
  %1644 = vmatprep.subr.mxu0 0.0
  %1645 = vmatpush1.msra.mxu0 0.0
  %1646 = vmatprep.subr.mxu0 0.0
  %1647 = vmatpush1.msra.mxu0 0.0
  %1648 = vmatprep.subr.mxu0 0.0
  %1649 = vmatpush1.msra.mxu0 0.0
  %1650 = vmatprep.subr.mxu0 0.0
  %1651 = vmatpush1.msra.mxu0 0.0
  %1652 = vmatprep.subr.mxu0 0.0
  %1653 = vmatpush1.msra.mxu0 0.0
  %1654 = vmatprep.subr.mxu0 0.0
  %1655 = vmatpush1.msra.mxu0 0.0
  %1656 = vmatprep.subr.mxu0 0.0
  %1657 = vmatpush1.msra.mxu0 0.0
  %1658 = vmatprep.subr.mxu0 0.0
  %1659 = vmatpush1.msra.mxu0 0.0
  %1660 = vmatprep.subr.mxu0 0.0
  %1661 = vmatpush1.msra.mxu0 0.0
  %1662 = vmatprep.mubr.f32.mxu0 0.0
  %1663 = vmatmul.mubr.f32.gmra.mrb[0].mxu0 %v1370
  %v1664 = vpop.f32.mrb[0].mxu0
  %v1665 = vadd.f32 0.0, %v1664
  %v1666 = vpop.f32.mrb[0].mxu0
  %1667 = vdwg.mxu0
  %v1668 = vadd.f32 %v1361, %v1453
  %v1669 = vadd.f32 %v1362, %v1455
  %v1670 = vadd.f32 %v1363, %v1524
  %v1671 = vadd.f32 %v1364, %v1594
  %v1672 = vadd.f32 %v1365, %v1596
  %v1673 = vadd.f32 %v1366, %v1665
  %s1674 = scalar_lea.vmem %s2, 40
  %v1675 = vld [vmem:[%s1674] sm:$0xff]
  %1676 = vrot.lane.b32.xlu0 %v53, 127
  %v1677 = vpop.permute.xlu0 %1676
  %1678 = vrot.lane.b32.xlu0 %v43, 127
  %v1679 = vpop.permute.xlu0 %1678
  %1680 = vrot.lane.b32.xlu0 %v54, 127
  %v1681 = vpop.permute.xlu0 %1680
  %1682 = vrot.lane.b32.xlu0 %v44, 127
  %v1683 = vpop.permute.xlu0 %1682
  %1684 = vrot.lane.b32.xlu0 %v55, 127
  %v1685 = vpop.permute.xlu0 %1684
  %1686 = vrot.lane.b32.xlu0 %v45, 127
  %v1687 = vpop.permute.xlu0 %1686
  %1688 = vrot.lane.b32.xlu0 %v56, 127
  %v1689 = vpop.permute.xlu0 %1688
  %vm1690 = vcmask 1039360
  %v1691 = vsel %vm1690, %v1677, %v1679
  %v1692 = vsel %vm1690, %v1679, %v1681
  %v1693 = vsel %vm1690, %v1681, %v1683
  %v1694 = vsel %vm1690, %v1683, %v1685
  %v1695 = vsel %vm1690, %v1685, %v1687
  %v1696 = vsel %vm1690, %v1687, %v1689
  %v1698 = vsel %vm81, %v1675, 0
  %v1700 = vsel %vm85, %v1691, 0
  %v1702 = vsel %vm85, %v1692, 0
  %v1704 = vsel %vm85, %v1693, 0
  %v1706 = vsel %vm85, %v1694, 0
  %v1708 = vsel %vm85, %v1695, 0
  %v1710 = vsel %vm85, %v1696, 0
  %v1712 = vsel %vm85, %v1689, 0
  %1714 = vmatprep.subr.mxu0 %v1702
  %1715 = vmatpush1.msra.mxu0 %v1700
  %1716 = vmatprep.subr.mxu0 0.0
  %1717 = vmatpush1.msra.mxu0 0.0
  %1718 = vmatprep.subr.mxu0 0.0
  %1719 = vmatpush1.msra.mxu0 0.0
  %1720 = vmatprep.subr.mxu0 0.0
  %1721 = vmatpush1.msra.mxu0 0.0
  %1722 = vmatprep.subr.mxu0 0.0
  %1723 = vmatpush1.msra.mxu0 0.0
  %1724 = vmatprep.subr.mxu0 0.0
  %1725 = vmatpush1.msra.mxu0 0.0
  %1726 = vmatprep.subr.mxu0 0.0
  %1727 = vmatpush1.msra.mxu0 0.0
  %1728 = vmatprep.subr.mxu0 0.0
  %1729 = vmatpush1.msra.mxu0 0.0
  %1730 = vmatprep.subr.mxu0 0.0
  %1731 = vmatpush1.msra.mxu0 0.0
  %1732 = vmatprep.subr.mxu0 0.0
  %1733 = vmatpush1.msra.mxu0 0.0
  %1734 = vmatprep.subr.mxu0 0.0
  %1735 = vmatpush1.msra.mxu0 0.0
  %1736 = vmatprep.subr.mxu0 0.0
  %1737 = vmatpush1.msra.mxu0 0.0
  %1738 = vmatprep.subr.mxu0 0.0
  %1739 = vmatpush1.msra.mxu0 0.0
  %1740 = vmatprep.subr.mxu0 0.0
  %1741 = vmatpush1.msra.mxu0 0.0
  %1742 = vmatprep.subr.mxu0 0.0
  %1743 = vmatpush1.msra.mxu0 0.0
  %1744 = vmatprep.subr.mxu0 0.0
  %1745 = vmatpush1.msra.mxu0 0.0
  %1746 = vmatprep.subr.mxu0 0.0
  %1747 = vmatpush1.msra.mxu0 0.0
  %1748 = vmatprep.subr.mxu0 0.0
  %1749 = vmatpush1.msra.mxu0 0.0
  %1750 = vmatprep.subr.mxu0 0.0
  %1751 = vmatpush1.msra.mxu0 0.0
  %1752 = vmatprep.subr.mxu0 0.0
  %1753 = vmatpush1.msra.mxu0 0.0
  %1754 = vmatprep.subr.mxu0 0.0
  %1755 = vmatpush1.msra.mxu0 0.0
  %1756 = vmatprep.subr.mxu0 0.0
  %1757 = vmatpush1.msra.mxu0 0.0
  %1758 = vmatprep.subr.mxu0 0.0
  %1759 = vmatpush1.msra.mxu0 0.0
  %1760 = vmatprep.subr.mxu0 0.0
  %1761 = vmatpush1.msra.mxu0 0.0
  %1762 = vmatprep.subr.mxu0 0.0
  %1763 = vmatpush1.msra.mxu0 0.0
  %1764 = vmatprep.subr.mxu0 0.0
  %1765 = vmatpush1.msra.mxu0 0.0
  %1766 = vmatprep.subr.mxu0 0.0
  %1767 = vmatpush1.msra.mxu0 0.0
  %1768 = vmatprep.subr.mxu0 0.0
  %1769 = vmatpush1.msra.mxu0 0.0
  %1770 = vmatprep.subr.mxu0 0.0
  %1771 = vmatpush1.msra.mxu0 0.0
  %1772 = vmatprep.subr.mxu0 0.0
  %1773 = vmatpush1.msra.mxu0 0.0
  %1774 = vmatprep.subr.mxu0 0.0
  %1775 = vmatpush1.msra.mxu0 0.0
  %1776 = vmatprep.subr.mxu0 0.0
  %1777 = vmatpush1.msra.mxu0 0.0
  %1778 = vmatprep.mubr.f32.mxu0 0.0
  %1779 = vmatmul.mubr.f32.gmra.mrb[0].mxu0 %v1698
  %v1780 = vpop.f32.mrb[0].mxu0
  %v1781 = vadd.f32 0.0, %v1780
  %v1782 = vpop.f32.mrb[0].mxu0
  %v1783 = vadd.f32 0.0, %v1782
  %1784 = vdwg.mxu0
  %1785 = vmatprep.subr.mxu0 %v1706
  %1786 = vmatpush1.msra.mxu0 %v1704
  %1787 = vmatprep.subr.mxu0 0.0
  %1788 = vmatpush1.msra.mxu0 0.0
  %1789 = vmatprep.subr.mxu0 0.0
  %1790 = vmatpush1.msra.mxu0 0.0
  %1791 = vmatprep.subr.mxu0 0.0
  %1792 = vmatpush1.msra.mxu0 0.0
  %1793 = vmatprep.subr.mxu0 0.0
  %1794 = vmatpush1.msra.mxu0 0.0
  %1795 = vmatprep.subr.mxu0 0.0
  %1796 = vmatpush1.msra.mxu0 0.0
  %1797 = vmatprep.subr.mxu0 0.0
  %1798 = vmatpush1.msra.mxu0 0.0
  %1799 = vmatprep.subr.mxu0 0.0
  %1800 = vmatpush1.msra.mxu0 0.0
  %1801 = vmatprep.subr.mxu0 0.0
  %1802 = vmatpush1.msra.mxu0 0.0
  %1803 = vmatprep.subr.mxu0 0.0
  %1804 = vmatpush1.msra.mxu0 0.0
  %1805 = vmatprep.subr.mxu0 0.0
  %1806 = vmatpush1.msra.mxu0 0.0
  %1807 = vmatprep.subr.mxu0 0.0
  %1808 = vmatpush1.msra.mxu0 0.0
  %1809 = vmatprep.subr.mxu0 0.0
  %1810 = vmatpush1.msra.mxu0 0.0
  %1811 = vmatprep.subr.mxu0 0.0
  %1812 = vmatpush1.msra.mxu0 0.0
  %1813 = vmatprep.subr.mxu0 0.0
  %1814 = vmatpush1.msra.mxu0 0.0
  %1815 = vmatprep.subr.mxu0 0.0
  %1816 = vmatpush1.msra.mxu0 0.0
  %1817 = vmatprep.subr.mxu0 0.0
  %1818 = vmatpush1.msra.mxu0 0.0
  %1819 = vmatprep.subr.mxu0 0.0
  %1820 = vmatpush1.msra.mxu0 0.0
  %1821 = vmatprep.subr.mxu0 0.0
  %1822 = vmatpush1.msra.mxu0 0.0
  %1823 = vmatprep.subr.mxu0 0.0
  %1824 = vmatpush1.msra.mxu0 0.0
  %1825 = vmatprep.subr.mxu0 0.0
  %1826 = vmatpush1.msra.mxu0 0.0
  %1827 = vmatprep.subr.mxu0 0.0
  %1828 = vmatpush1.msra.mxu0 0.0
  %1829 = vmatprep.subr.mxu0 0.0
  %1830 = vmatpush1.msra.mxu0 0.0
  %1831 = vmatprep.subr.mxu0 0.0
  %1832 = vmatpush1.msra.mxu0 0.0
  %1833 = vmatprep.subr.mxu0 0.0
  %1834 = vmatpush1.msra.mxu0 0.0
  %1835 = vmatprep.subr.mxu0 0.0
  %1836 = vmatpush1.msra.mxu0 0.0
  %1837 = vmatprep.subr.mxu0 0.0
  %1838 = vmatpush1.msra.mxu0 0.0
  %1839 = vmatprep.subr.mxu0 0.0
  %1840 = vmatpush1.msra.mxu0 0.0
  %1841 = vmatprep.subr.mxu0 0.0
  %1842 = vmatpush1.msra.mxu0 0.0
  %1843 = vmatprep.subr.mxu0 0.0
  %1844 = vmatpush1.msra.mxu0 0.0
  %1845 = vmatprep.subr.mxu0 0.0
  %1846 = vmatpush1.msra.mxu0 0.0
  %1847 = vmatprep.subr.mxu0 0.0
  %1848 = vmatpush1.msra.mxu0 0.0
  %1849 = vmatprep.mubr.f32.mxu0 0.0
  %1850 = vmatmul.mubr.f32.gmra.mrb[0].mxu0 %v1698
  %v1851 = vpop.f32.mrb[0].mxu0
  %v1852 = vadd.f32 0.0, %v1851
  %v1853 = vpop.f32.mrb[0].mxu0
  %1854 = vdwg.mxu0
  %1855 = vmatprep.subr.mxu0 %v1710
  %1856 = vmatpush1.msra.mxu0 %v1708
  %1857 = vmatprep.subr.mxu0 0.0
  %1858 = vmatpush1.msra.mxu0 0.0
  %1859 = vmatprep.subr.mxu0 0.0
  %1860 = vmatpush1.msra.mxu0 0.0
  %1861 = vmatprep.subr.mxu0 0.0
  %1862 = vmatpush1.msra.mxu0 0.0
  %1863 = vmatprep.subr.mxu0 0.0
  %1864 = vmatpush1.msra.mxu0 0.0
  %1865 = vmatprep.subr.mxu0 0.0
  %1866 = vmatpush1.msra.mxu0 0.0
  %1867 = vmatprep.subr.mxu0 0.0
  %1868 = vmatpush1.msra.mxu0 0.0
  %1869 = vmatprep.subr.mxu0 0.0
  %1870 = vmatpush1.msra.mxu0 0.0
  %1871 = vmatprep.subr.mxu0 0.0
  %1872 = vmatpush1.msra.mxu0 0.0
  %1873 = vmatprep.subr.mxu0 0.0
  %1874 = vmatpush1.msra.mxu0 0.0
  %1875 = vmatprep.subr.mxu0 0.0
  %1876 = vmatpush1.msra.mxu0 0.0
  %1877 = vmatprep.subr.mxu0 0.0
  %1878 = vmatpush1.msra.mxu0 0.0
  %1879 = vmatprep.subr.mxu0 0.0
  %1880 = vmatpush1.msra.mxu0 0.0
  %1881 = vmatprep.subr.mxu0 0.0
  %1882 = vmatpush1.msra.mxu0 0.0
  %1883 = vmatprep.subr.mxu0 0.0
  %1884 = vmatpush1.msra.mxu0 0.0
  %1885 = vmatprep.subr.mxu0 0.0
  %1886 = vmatpush1.msra.mxu0 0.0
  %1887 = vmatprep.subr.mxu0 0.0
  %1888 = vmatpush1.msra.mxu0 0.0
  %1889 = vmatprep.subr.mxu0 0.0
  %1890 = vmatpush1.msra.mxu0 0.0
  %1891 = vmatprep.subr.mxu0 0.0
  %1892 = vmatpush1.msra.mxu0 0.0
  %1893 = vmatprep.subr.mxu0 0.0
  %1894 = vmatpush1.msra.mxu0 0.0
  %1895 = vmatprep.subr.mxu0 0.0
  %1896 = vmatpush1.msra.mxu0 0.0
  %1897 = vmatprep.subr.mxu0 0.0
  %1898 = vmatpush1.msra.mxu0 0.0
  %1899 = vmatprep.subr.mxu0 0.0
  %1900 = vmatpush1.msra.mxu0 0.0
  %1901 = vmatprep.subr.mxu0 0.0
  %1902 = vmatpush1.msra.mxu0 0.0
  %1903 = vmatprep.subr.mxu0 0.0
  %1904 = vmatpush1.msra.mxu0 0.0
  %1905 = vmatprep.subr.mxu0 0.0
  %1906 = vmatpush1.msra.mxu0 0.0
  %1907 = vmatprep.subr.mxu0 0.0
  %1908 = vmatpush1.msra.mxu0 0.0
  %1909 = vmatprep.subr.mxu0 0.0
  %1910 = vmatpush1.msra.mxu0 0.0
  %1911 = vmatprep.subr.mxu0 0.0
  %1912 = vmatpush1.msra.mxu0 0.0
  %1913 = vmatprep.subr.mxu0 0.0
  %1914 = vmatpush1.msra.mxu0 0.0
  %1915 = vmatprep.subr.mxu0 0.0
  %1916 = vmatpush1.msra.mxu0 0.0
  %1917 = vmatprep.subr.mxu0 0.0
  %1918 = vmatpush1.msra.mxu0 0.0
  %1919 = vmatprep.mubr.f32.mxu0 0.0
  %1920 = vmatmul.mubr.f32.gmra.mrb[0].mxu0 %v1698
  %v1921 = vpop.f32.mrb[0].mxu0
  %v1922 = vadd.f32 0.0, %v1921
  %v1923 = vpop.f32.mrb[0].mxu0
  %v1924 = vadd.f32 0.0, %v1923
  %1925 = vdwg.mxu0
  %1926 = vmatprep.subr.mxu0 0.0
  %1927 = vmatpush1.msra.mxu0 %v1712
  %1928 = vmatprep.subr.mxu0 0.0
  %1929 = vmatpush1.msra.mxu0 0.0
  %1930 = vmatprep.subr.mxu0 0.0
  %1931 = vmatpush1.msra.mxu0 0.0
  %1932 = vmatprep.subr.mxu0 0.0
  %1933 = vmatpush1.msra.mxu0 0.0
  %1934 = vmatprep.subr.mxu0 0.0
  %1935 = vmatpush1.msra.mxu0 0.0
  %1936 = vmatprep.subr.mxu0 0.0
  %1937 = vmatpush1.msra.mxu0 0.0
  %1938 = vmatprep.subr.mxu0 0.0
  %1939 = vmatpush1.msra.mxu0 0.0
  %1940 = vmatprep.subr.mxu0 0.0
  %1941 = vmatpush1.msra.mxu0 0.0
  %1942 = vmatprep.subr.mxu0 0.0
  %1943 = vmatpush1.msra.mxu0 0.0
  %1944 = vmatprep.subr.mxu0 0.0
  %1945 = vmatpush1.msra.mxu0 0.0
  %1946 = vmatprep.subr.mxu0 0.0
  %1947 = vmatpush1.msra.mxu0 0.0
  %1948 = vmatprep.subr.mxu0 0.0
  %1949 = vmatpush1.msra.mxu0 0.0
  %1950 = vmatprep.subr.mxu0 0.0
  %1951 = vmatpush1.msra.mxu0 0.0
  %1952 = vmatprep.subr.mxu0 0.0
  %1953 = vmatpush1.msra.mxu0 0.0
  %1954 = vmatprep.subr.mxu0 0.0
  %1955 = vmatpush1.msra.mxu0 0.0
  %1956 = vmatprep.subr.mxu0 0.0
  %1957 = vmatpush1.msra.mxu0 0.0
  %1958 = vmatprep.subr.mxu0 0.0
  %1959 = vmatpush1.msra.mxu0 0.0
  %1960 = vmatprep.subr.mxu0 0.0
  %1961 = vmatpush1.msra.mxu0 0.0
  %1962 = vmatprep.subr.mxu0 0.0
  %1963 = vmatpush1.msra.mxu0 0.0
  %1964 = vmatprep.subr.mxu0 0.0
  %1965 = vmatpush1.msra.mxu0 0.0
  %1966 = vmatprep.subr.mxu0 0.0
  %1967 = vmatpush1.msra.mxu0 0.0
  %1968 = vmatprep.subr.mxu0 0.0
  %1969 = vmatpush1.msra.mxu0 0.0
  %1970 = vmatprep.subr.mxu0 0.0
  %1971 = vmatpush1.msra.mxu0 0.0
  %1972 = vmatprep.subr.mxu0 0.0
  %1973 = vmatpush1.msra.mxu0 0.0
  %1974 = vmatprep.subr.mxu0 0.0
  %1975 = vmatpush1.msra.mxu0 0.0
  %1976 = vmatprep.subr.mxu0 0.0
  %1977 = vmatpush1.msra.mxu0 0.0
  %1978 = vmatprep.subr.mxu0 0.0
  %1979 = vmatpush1.msra.mxu0 0.0
  %1980 = vmatprep.subr.mxu0 0.0
  %1981 = vmatpush1.msra.mxu0 0.0
  %1982 = vmatprep.subr.mxu0 0.0
  %1983 = vmatpush1.msra.mxu0 0.0
  %1984 = vmatprep.subr.mxu0 0.0
  %1985 = vmatpush1.msra.mxu0 0.0
  %1986 = vmatprep.subr.mxu0 0.0
  %1987 = vmatpush1.msra.mxu0 0.0
  %1988 = vmatprep.subr.mxu0 0.0
  %1989 = vmatpush1.msra.mxu0 0.0
  %1990 = vmatprep.mubr.f32.mxu0 0.0
  %1991 = vmatmul.mubr.f32.gmra.mrb[0].mxu0 %v1698
  %v1992 = vpop.f32.mrb[0].mxu0
  %v1993 = vadd.f32 0.0, %v1992
  %v1994 = vpop.f32.mrb[0].mxu0
  %1995 = vdwg.mxu0
  %v1996 = vadd.f32 %v1668, %v1781
  %v1997 = vadd.f32 %v1669, %v1783
  %v1998 = vadd.f32 %v1670, %v1852
  %v1999 = vadd.f32 %v1671, %v1922
  %v2000 = vadd.f32 %v1672, %v1924
  %v2001 = vadd.f32 %v1673, %v1993
  %s2002 = scalar_lea.vmem %s2, 48
  %v2003 = vld [vmem:[%s2002] sm:$0xff]
  %2004 = vrot.lane.b32.xlu0 %v53, 111
  %v2005 = vpop.permute.xlu0 %2004
  %2006 = vrot.lane.b32.xlu0 %v43, 111
  %v2007 = vpop.permute.xlu0 %2006
  %2008 = vrot.lane.b32.xlu0 %v54, 111
  %v2009 = vpop.permute.xlu0 %2008
  %2010 = vrot.lane.b32.xlu0 %v44, 111
  %v2011 = vpop.permute.xlu0 %2010
  %2012 = vrot.lane.b32.xlu0 %v55, 111
  %v2013 = vpop.permute.xlu0 %2012
  %2014 = vrot.lane.b32.xlu0 %v45, 111
  %v2015 = vpop.permute.xlu0 %2014
  %2016 = vrot.lane.b32.xlu0 %v56, 111
  %v2017 = vpop.permute.xlu0 %2016
  %vm2018 = vcmask 908288
  %v2019 = vsel %vm2018, %v2005, %v2007
  %v2020 = vsel %vm2018, %v2007, %v2009
  %v2021 = vsel %vm2018, %v2009, %v2011
  %v2022 = vsel %vm2018, %v2011, %v2013
  %v2023 = vsel %vm2018, %v2013, %v2015
  %v2024 = vsel %vm2018, %v2015, %v2017
  %v2026 = vsel %vm81, %v2003, 0
  %v2028 = vsel %vm85, %v2019, 0
  %v2030 = vsel %vm85, %v2020, 0
  %v2032 = vsel %vm85, %v2021, 0
  %v2034 = vsel %vm85, %v2022, 0
  %v2036 = vsel %vm85, %v2023, 0
  %v2038 = vsel %vm85, %v2024, 0
  %v2040 = vsel %vm85, %v2017, 0
  %2042 = vmatprep.subr.mxu0 %v2030
  %2043 = vmatpush1.msra.mxu0 %v2028
  %2044 = vmatprep.subr.mxu0 0.0
  %2045 = vmatpush1.msra.mxu0 0.0
  %2046 = vmatprep.subr.mxu0 0.0
  %2047 = vmatpush1.msra.mxu0 0.0
  %2048 = vmatprep.subr.mxu0 0.0
  %2049 = vmatpush1.msra.mxu0 0.0
  %2050 = vmatprep.subr.mxu0 0.0
  %2051 = vmatpush1.msra.mxu0 0.0
  %2052 = vmatprep.subr.mxu0 0.0
  %2053 = vmatpush1.msra.mxu0 0.0
  %2054 = vmatprep.subr.mxu0 0.0
  %2055 = vmatpush1.msra.mxu0 0.0
  %2056 = vmatprep.subr.mxu0 0.0
  %2057 = vmatpush1.msra.mxu0 0.0
  %2058 = vmatprep.subr.mxu0 0.0
  %2059 = vmatpush1.msra.mxu0 0.0
  %2060 = vmatprep.subr.mxu0 0.0
  %2061 = vmatpush1.msra.mxu0 0.0
  %2062 = vmatprep.subr.mxu0 0.0
  %2063 = vmatpush1.msra.mxu0 0.0
  %2064 = vmatprep.subr.mxu0 0.0
  %2065 = vmatpush1.msra.mxu0 0.0
  %2066 = vmatprep.subr.mxu0 0.0
  %2067 = vmatpush1.msra.mxu0 0.0
  %2068 = vmatprep.subr.mxu0 0.0
  %2069 = vmatpush1.msra.mxu0 0.0
  %2070 = vmatprep.subr.mxu0 0.0
  %2071 = vmatpush1.msra.mxu0 0.0
  %2072 = vmatprep.subr.mxu0 0.0
  %2073 = vmatpush1.msra.mxu0 0.0
  %2074 = vmatprep.subr.mxu0 0.0
  %2075 = vmatpush1.msra.mxu0 0.0
  %2076 = vmatprep.subr.mxu0 0.0
  %2077 = vmatpush1.msra.mxu0 0.0
  %2078 = vmatprep.subr.mxu0 0.0
  %2079 = vmatpush1.msra.mxu0 0.0
  %2080 = vmatprep.subr.mxu0 0.0
  %2081 = vmatpush1.msra.mxu0 0.0
  %2082 = vmatprep.subr.mxu0 0.0
  %2083 = vmatpush1.msra.mxu0 0.0
  %2084 = vmatprep.subr.mxu0 0.0
  %2085 = vmatpush1.msra.mxu0 0.0
  %2086 = vmatprep.subr.mxu0 0.0
  %2087 = vmatpush1.msra.mxu0 0.0
  %2088 = vmatprep.subr.mxu0 0.0
  %2089 = vmatpush1.msra.mxu0 0.0
  %2090 = vmatprep.subr.mxu0 0.0
  %2091 = vmatpush1.msra.mxu0 0.0
  %2092 = vmatprep.subr.mxu0 0.0
  %2093 = vmatpush1.msra.mxu0 0.0
  %2094 = vmatprep.subr.mxu0 0.0
  %2095 = vmatpush1.msra.mxu0 0.0
  %2096 = vmatprep.subr.mxu0 0.0
  %2097 = vmatpush1.msra.mxu0 0.0
  %2098 = vmatprep.subr.mxu0 0.0
  %2099 = vmatpush1.msra.mxu0 0.0
  %2100 = vmatprep.subr.mxu0 0.0
  %2101 = vmatpush1.msra.mxu0 0.0
  %2102 = vmatprep.subr.mxu0 0.0
  %2103 = vmatpush1.msra.mxu0 0.0
  %2104 = vmatprep.subr.mxu0 0.0
  %2105 = vmatpush1.msra.mxu0 0.0
  %2106 = vmatprep.mubr.f32.mxu0 0.0
  %2107 = vmatmul.mubr.f32.gmra.mrb[0].mxu0 %v2026
  %v2108 = vpop.f32.mrb[0].mxu0
  %v2109 = vadd.f32 0.0, %v2108
  %v2110 = vpop.f32.mrb[0].mxu0
  %v2111 = vadd.f32 0.0, %v2110
  %2112 = vdwg.mxu0
  %2113 = vmatprep.subr.mxu0 %v2034
  %2114 = vmatpush1.msra.mxu0 %v2032
  %2115 = vmatprep.subr.mxu0 0.0
  %2116 = vmatpush1.msra.mxu0 0.0
  %2117 = vmatprep.subr.mxu0 0.0
  %2118 = vmatpush1.msra.mxu0 0.0
  %2119 = vmatprep.subr.mxu0 0.0
  %2120 = vmatpush1.msra.mxu0 0.0
  %2121 = vmatprep.subr.mxu0 0.0
  %2122 = vmatpush1.msra.mxu0 0.0
  %2123 = vmatprep.subr.mxu0 0.0
  %2124 = vmatpush1.msra.mxu0 0.0
  %2125 = vmatprep.subr.mxu0 0.0
  %2126 = vmatpush1.msra.mxu0 0.0
  %2127 = vmatprep.subr.mxu0 0.0
  %2128 = vmatpush1.msra.mxu0 0.0
  %2129 = vmatprep.subr.mxu0 0.0
  %2130 = vmatpush1.msra.mxu0 0.0
  %2131 = vmatprep.subr.mxu0 0.0
  %2132 = vmatpush1.msra.mxu0 0.0
  %2133 = vmatprep.subr.mxu0 0.0
  %2134 = vmatpush1.msra.mxu0 0.0
  %2135 = vmatprep.subr.mxu0 0.0
  %2136 = vmatpush1.msra.mxu0 0.0
  %2137 = vmatprep.subr.mxu0 0.0
  %2138 = vmatpush1.msra.mxu0 0.0
  %2139 = vmatprep.subr.mxu0 0.0
  %2140 = vmatpush1.msra.mxu0 0.0
  %2141 = vmatprep.subr.mxu0 0.0
  %2142 = vmatpush1.msra.mxu0 0.0
  %2143 = vmatprep.subr.mxu0 0.0
  %2144 = vmatpush1.msra.mxu0 0.0
  %2145 = vmatprep.subr.mxu0 0.0
  %2146 = vmatpush1.msra.mxu0 0.0
  %2147 = vmatprep.subr.mxu0 0.0
  %2148 = vmatpush1.msra.mxu0 0.0
  %2149 = vmatprep.subr.mxu0 0.0
  %2150 = vmatpush1.msra.mxu0 0.0
  %2151 = vmatprep.subr.mxu0 0.0
  %2152 = vmatpush1.msra.mxu0 0.0
  %2153 = vmatprep.subr.mxu0 0.0
  %2154 = vmatpush1.msra.mxu0 0.0
  %2155 = vmatprep.subr.mxu0 0.0
  %2156 = vmatpush1.msra.mxu0 0.0
  %2157 = vmatprep.subr.mxu0 0.0
  %2158 = vmatpush1.msra.mxu0 0.0
  %2159 = vmatprep.subr.mxu0 0.0
  %2160 = vmatpush1.msra.mxu0 0.0
  %2161 = vmatprep.subr.mxu0 0.0
  %2162 = vmatpush1.msra.mxu0 0.0
  %2163 = vmatprep.subr.mxu0 0.0
  %2164 = vmatpush1.msra.mxu0 0.0
  %2165 = vmatprep.subr.mxu0 0.0
  %2166 = vmatpush1.msra.mxu0 0.0
  %2167 = vmatprep.subr.mxu0 0.0
  %2168 = vmatpush1.msra.mxu0 0.0
  %2169 = vmatprep.subr.mxu0 0.0
  %2170 = vmatpush1.msra.mxu0 0.0
  %2171 = vmatprep.subr.mxu0 0.0
  %2172 = vmatpush1.msra.mxu0 0.0
  %2173 = vmatprep.subr.mxu0 0.0
  %2174 = vmatpush1.msra.mxu0 0.0
  %2175 = vmatprep.subr.mxu0 0.0
  %2176 = vmatpush1.msra.mxu0 0.0
  %2177 = vmatprep.mubr.f32.mxu0 0.0
  %2178 = vmatmul.mubr.f32.gmra.mrb[0].mxu0 %v2026
  %v2179 = vpop.f32.mrb[0].mxu0
  %v2180 = vadd.f32 0.0, %v2179
  %v2181 = vpop.f32.mrb[0].mxu0
  %2182 = vdwg.mxu0
  %2183 = vmatprep.subr.mxu0 %v2038
  %2184 = vmatpush1.msra.mxu0 %v2036
  %2185 = vmatprep.subr.mxu0 0.0
  %2186 = vmatpush1.msra.mxu0 0.0
  %2187 = vmatprep.subr.mxu0 0.0
  %2188 = vmatpush1.msra.mxu0 0.0
  %2189 = vmatprep.subr.mxu0 0.0
  %2190 = vmatpush1.msra.mxu0 0.0
  %2191 = vmatprep.subr.mxu0 0.0
  %2192 = vmatpush1.msra.mxu0 0.0
  %2193 = vmatprep.subr.mxu0 0.0
  %2194 = vmatpush1.msra.mxu0 0.0
  %2195 = vmatprep.subr.mxu0 0.0
  %2196 = vmatpush1.msra.mxu0 0.0
  %2197 = vmatprep.subr.mxu0 0.0
  %2198 = vmatpush1.msra.mxu0 0.0
  %2199 = vmatprep.subr.mxu0 0.0
  %2200 = vmatpush1.msra.mxu0 0.0
  %2201 = vmatprep.subr.mxu0 0.0
  %2202 = vmatpush1.msra.mxu0 0.0
  %2203 = vmatprep.subr.mxu0 0.0
  %2204 = vmatpush1.msra.mxu0 0.0
  %2205 = vmatprep.subr.mxu0 0.0
  %2206 = vmatpush1.msra.mxu0 0.0
  %2207 = vmatprep.subr.mxu0 0.0
  %2208 = vmatpush1.msra.mxu0 0.0
  %2209 = vmatprep.subr.mxu0 0.0
  %2210 = vmatpush1.msra.mxu0 0.0
  %2211 = vmatprep.subr.mxu0 0.0
  %2212 = vmatpush1.msra.mxu0 0.0
  %2213 = vmatprep.subr.mxu0 0.0
  %2214 = vmatpush1.msra.mxu0 0.0
  %2215 = vmatprep.subr.mxu0 0.0
  %2216 = vmatpush1.msra.mxu0 0.0
  %2217 = vmatprep.subr.mxu0 0.0
  %2218 = vmatpush1.msra.mxu0 0.0
  %2219 = vmatprep.subr.mxu0 0.0
  %2220 = vmatpush1.msra.mxu0 0.0
  %2221 = vmatprep.subr.mxu0 0.0
  %2222 = vmatpush1.msra.mxu0 0.0
  %2223 = vmatprep.subr.mxu0 0.0
  %2224 = vmatpush1.msra.mxu0 0.0
  %2225 = vmatprep.subr.mxu0 0.0
  %2226 = vmatpush1.msra.mxu0 0.0
  %2227 = vmatprep.subr.mxu0 0.0
  %2228 = vmatpush1.msra.mxu0 0.0
  %2229 = vmatprep.subr.mxu0 0.0
  %2230 = vmatpush1.msra.mxu0 0.0
  %2231 = vmatprep.subr.mxu0 0.0
  %2232 = vmatpush1.msra.mxu0 0.0
  %2233 = vmatprep.subr.mxu0 0.0
  %2234 = vmatpush1.msra.mxu0 0.0
  %2235 = vmatprep.subr.mxu0 0.0
  %2236 = vmatpush1.msra.mxu0 0.0
  %2237 = vmatprep.subr.mxu0 0.0
  %2238 = vmatpush1.msra.mxu0 0.0
  %2239 = vmatprep.subr.mxu0 0.0
  %2240 = vmatpush1.msra.mxu0 0.0
  %2241 = vmatprep.subr.mxu0 0.0
  %2242 = vmatpush1.msra.mxu0 0.0
  %2243 = vmatprep.subr.mxu0 0.0
  %2244 = vmatpush1.msra.mxu0 0.0
  %2245 = vmatprep.subr.mxu0 0.0
  %2246 = vmatpush1.msra.mxu0 0.0
  %2247 = vmatprep.mubr.f32.mxu0 0.0
  %2248 = vmatmul.mubr.f32.gmra.mrb[0].mxu0 %v2026
  %v2249 = vpop.f32.mrb[0].mxu0
  %v2250 = vadd.f32 0.0, %v2249
  %v2251 = vpop.f32.mrb[0].mxu0
  %v2252 = vadd.f32 0.0, %v2251
  %2253 = vdwg.mxu0
  %2254 = vmatprep.subr.mxu0 0.0
  %2255 = vmatpush1.msra.mxu0 %v2040
  %2256 = vmatprep.subr.mxu0 0.0
  %2257 = vmatpush1.msra.mxu0 0.0
  %2258 = vmatprep.subr.mxu0 0.0
  %2259 = vmatpush1.msra.mxu0 0.0
  %2260 = vmatprep.subr.mxu0 0.0
  %2261 = vmatpush1.msra.mxu0 0.0
  %2262 = vmatprep.subr.mxu0 0.0
  %2263 = vmatpush1.msra.mxu0 0.0
  %2264 = vmatprep.subr.mxu0 0.0
  %2265 = vmatpush1.msra.mxu0 0.0
  %2266 = vmatprep.subr.mxu0 0.0
  %2267 = vmatpush1.msra.mxu0 0.0
  %2268 = vmatprep.subr.mxu0 0.0
  %2269 = vmatpush1.msra.mxu0 0.0
  %2270 = vmatprep.subr.mxu0 0.0
  %2271 = vmatpush1.msra.mxu0 0.0
  %2272 = vmatprep.subr.mxu0 0.0
  %2273 = vmatpush1.msra.mxu0 0.0
  %2274 = vmatprep.subr.mxu0 0.0
  %2275 = vmatpush1.msra.mxu0 0.0
  %2276 = vmatprep.subr.mxu0 0.0
  %2277 = vmatpush1.msra.mxu0 0.0
  %2278 = vmatprep.subr.mxu0 0.0
  %2279 = vmatpush1.msra.mxu0 0.0
  %2280 = vmatprep.subr.mxu0 0.0
  %2281 = vmatpush1.msra.mxu0 0.0
  %2282 = vmatprep.subr.mxu0 0.0
  %2283 = vmatpush1.msra.mxu0 0.0
  %2284 = vmatprep.subr.mxu0 0.0
  %2285 = vmatpush1.msra.mxu0 0.0
  %2286 = vmatprep.subr.mxu0 0.0
  %2287 = vmatpush1.msra.mxu0 0.0
  %2288 = vmatprep.subr.mxu0 0.0
  %2289 = vmatpush1.msra.mxu0 0.0
  %2290 = vmatprep.subr.mxu0 0.0
  %2291 = vmatpush1.msra.mxu0 0.0
  %2292 = vmatprep.subr.mxu0 0.0
  %2293 = vmatpush1.msra.mxu0 0.0
  %2294 = vmatprep.subr.mxu0 0.0
  %2295 = vmatpush1.msra.mxu0 0.0
  %2296 = vmatprep.subr.mxu0 0.0
  %2297 = vmatpush1.msra.mxu0 0.0
  %2298 = vmatprep.subr.mxu0 0.0
  %2299 = vmatpush1.msra.mxu0 0.0
  %2300 = vmatprep.subr.mxu0 0.0
  %2301 = vmatpush1.msra.mxu0 0.0
  %2302 = vmatprep.subr.mxu0 0.0
  %2303 = vmatpush1.msra.mxu0 0.0
  %2304 = vmatprep.subr.mxu0 0.0
  %2305 = vmatpush1.msra.mxu0 0.0
  %2306 = vmatprep.subr.mxu0 0.0
  %2307 = vmatpush1.msra.mxu0 0.0
  %2308 = vmatprep.subr.mxu0 0.0
  %2309 = vmatpush1.msra.mxu0 0.0
  %2310 = vmatprep.subr.mxu0 0.0
  %2311 = vmatpush1.msra.mxu0 0.0
  %2312 = vmatprep.subr.mxu0 0.0
  %2313 = vmatpush1.msra.mxu0 0.0
  %2314 = vmatprep.subr.mxu0 0.0
  %2315 = vmatpush1.msra.mxu0 0.0
  %2316 = vmatprep.subr.mxu0 0.0
  %2317 = vmatpush1.msra.mxu0 0.0
  %2318 = vmatprep.mubr.f32.mxu0 0.0
  %2319 = vmatmul.mubr.f32.gmra.mrb[0].mxu0 %v2026
  %v2320 = vpop.f32.mrb[0].mxu0
  %v2321 = vadd.f32 0.0, %v2320
  %v2322 = vpop.f32.mrb[0].mxu0
  %2323 = vdwg.mxu0
  %v2324 = vadd.f32 %v1996, %v2109
  %v2325 = vadd.f32 %v1997, %v2111
  %v2326 = vadd.f32 %v1998, %v2180
  %v2327 = vadd.f32 %v1999, %v2250
  %v2328 = vadd.f32 %v2000, %v2252
  %v2329 = vadd.f32 %v2001, %v2321
  %s2330 = scalar_lea.vmem %s2, 56
  %v2331 = vld [vmem:[%s2330] sm:$0xff]
  %2332 = vrot.lane.b32.xlu0 %v53, 110
  %v2333 = vpop.permute.xlu0 %2332
  %2334 = vrot.lane.b32.xlu0 %v43, 110
  %v2335 = vpop.permute.xlu0 %2334
  %2336 = vrot.lane.b32.xlu0 %v54, 110
  %v2337 = vpop.permute.xlu0 %2336
  %2338 = vrot.lane.b32.xlu0 %v44, 110
  %v2339 = vpop.permute.xlu0 %2338
  %2340 = vrot.lane.b32.xlu0 %v55, 110
  %v2341 = vpop.permute.xlu0 %2340
  %2342 = vrot.lane.b32.xlu0 %v45, 110
  %v2343 = vpop.permute.xlu0 %2342
  %2344 = vrot.lane.b32.xlu0 %v56, 110
  %v2345 = vpop.permute.xlu0 %2344
  %vm2346 = vcmask 900096
  %v2347 = vsel %vm2346, %v2333, %v2335
  %v2348 = vsel %vm2346, %v2335, %v2337
  %v2349 = vsel %vm2346, %v2337, %v2339
  %v2350 = vsel %vm2346, %v2339, %v2341
  %v2351 = vsel %vm2346, %v2341, %v2343
  %v2352 = vsel %vm2346, %v2343, %v2345
  %v2354 = vsel %vm81, %v2331, 0
  %v2356 = vsel %vm85, %v2347, 0
  %v2358 = vsel %vm85, %v2348, 0
  %v2360 = vsel %vm85, %v2349, 0
  %v2362 = vsel %vm85, %v2350, 0
  %v2364 = vsel %vm85, %v2351, 0
  %v2366 = vsel %vm85, %v2352, 0
  %v2368 = vsel %vm85, %v2345, 0
  %2370 = vmatprep.subr.mxu0 %v2358
  %2371 = vmatpush1.msra.mxu0 %v2356
  %2372 = vmatprep.subr.mxu0 0.0
  %2373 = vmatpush1.msra.mxu0 0.0
  %2374 = vmatprep.subr.mxu0 0.0
  %2375 = vmatpush1.msra.mxu0 0.0
  %2376 = vmatprep.subr.mxu0 0.0
  %2377 = vmatpush1.msra.mxu0 0.0
  %2378 = vmatprep.subr.mxu0 0.0
  %2379 = vmatpush1.msra.mxu0 0.0
  %2380 = vmatprep.subr.mxu0 0.0
  %2381 = vmatpush1.msra.mxu0 0.0
  %2382 = vmatprep.subr.mxu0 0.0
  %2383 = vmatpush1.msra.mxu0 0.0
  %2384 = vmatprep.subr.mxu0 0.0
  %2385 = vmatpush1.msra.mxu0 0.0
  %2386 = vmatprep.subr.mxu0 0.0
  %2387 = vmatpush1.msra.mxu0 0.0
  %2388 = vmatprep.subr.mxu0 0.0
  %2389 = vmatpush1.msra.mxu0 0.0
  %2390 = vmatprep.subr.mxu0 0.0
  %2391 = vmatpush1.msra.mxu0 0.0
  %2392 = vmatprep.subr.mxu0 0.0
  %2393 = vmatpush1.msra.mxu0 0.0
  %2394 = vmatprep.subr.mxu0 0.0
  %2395 = vmatpush1.msra.mxu0 0.0
  %2396 = vmatprep.subr.mxu0 0.0
  %2397 = vmatpush1.msra.mxu0 0.0
  %2398 = vmatprep.subr.mxu0 0.0
  %2399 = vmatpush1.msra.mxu0 0.0
  %2400 = vmatprep.subr.mxu0 0.0
  %2401 = vmatpush1.msra.mxu0 0.0
  %2402 = vmatprep.subr.mxu0 0.0
  %2403 = vmatpush1.msra.mxu0 0.0
  %2404 = vmatprep.subr.mxu0 0.0
  %2405 = vmatpush1.msra.mxu0 0.0
  %2406 = vmatprep.subr.mxu0 0.0
  %2407 = vmatpush1.msra.mxu0 0.0
  %2408 = vmatprep.subr.mxu0 0.0
  %2409 = vmatpush1.msra.mxu0 0.0
  %2410 = vmatprep.subr.mxu0 0.0
  %2411 = vmatpush1.msra.mxu0 0.0
  %2412 = vmatprep.subr.mxu0 0.0
  %2413 = vmatpush1.msra.mxu0 0.0
  %2414 = vmatprep.subr.mxu0 0.0
  %2415 = vmatpush1.msra.mxu0 0.0
  %2416 = vmatprep.subr.mxu0 0.0
  %2417 = vmatpush1.msra.mxu0 0.0
  %2418 = vmatprep.subr.mxu0 0.0
  %2419 = vmatpush1.msra.mxu0 0.0
  %2420 = vmatprep.subr.mxu0 0.0
  %2421 = vmatpush1.msra.mxu0 0.0
  %2422 = vmatprep.subr.mxu0 0.0
  %2423 = vmatpush1.msra.mxu0 0.0
  %2424 = vmatprep.subr.mxu0 0.0
  %2425 = vmatpush1.msra.mxu0 0.0
  %2426 = vmatprep.subr.mxu0 0.0
  %2427 = vmatpush1.msra.mxu0 0.0
  %2428 = vmatprep.subr.mxu0 0.0
  %2429 = vmatpush1.msra.mxu0 0.0
  %2430 = vmatprep.subr.mxu0 0.0
  %2431 = vmatpush1.msra.mxu0 0.0
  %2432 = vmatprep.subr.mxu0 0.0
  %2433 = vmatpush1.msra.mxu0 0.0
  %2434 = vmatprep.mubr.f32.mxu0 0.0
  %2435 = vmatmul.mubr.f32.gmra.mrb[0].mxu0 %v2354
  %v2436 = vpop.f32.mrb[0].mxu0
  %v2437 = vadd.f32 0.0, %v2436
  %v2438 = vpop.f32.mrb[0].mxu0
  %v2439 = vadd.f32 0.0, %v2438
  %2440 = vdwg.mxu0
  %2441 = vmatprep.subr.mxu0 %v2362
  %2442 = vmatpush1.msra.mxu0 %v2360
  %2443 = vmatprep.subr.mxu0 0.0
  %2444 = vmatpush1.msra.mxu0 0.0
  %2445 = vmatprep.subr.mxu0 0.0
  %2446 = vmatpush1.msra.mxu0 0.0
  %2447 = vmatprep.subr.mxu0 0.0
  %2448 = vmatpush1.msra.mxu0 0.0
  %2449 = vmatprep.subr.mxu0 0.0
  %2450 = vmatpush1.msra.mxu0 0.0
  %2451 = vmatprep.subr.mxu0 0.0
  %2452 = vmatpush1.msra.mxu0 0.0
  %2453 = vmatprep.subr.mxu0 0.0
  %2454 = vmatpush1.msra.mxu0 0.0
  %2455 = vmatprep.subr.mxu0 0.0
  %2456 = vmatpush1.msra.mxu0 0.0
  %2457 = vmatprep.subr.mxu0 0.0
  %2458 = vmatpush1.msra.mxu0 0.0
  %2459 = vmatprep.subr.mxu0 0.0
  %2460 = vmatpush1.msra.mxu0 0.0
  %2461 = vmatprep.subr.mxu0 0.0
  %2462 = vmatpush1.msra.mxu0 0.0
  %2463 = vmatprep.subr.mxu0 0.0
  %2464 = vmatpush1.msra.mxu0 0.0
  %2465 = vmatprep.subr.mxu0 0.0
  %2466 = vmatpush1.msra.mxu0 0.0
  %2467 = vmatprep.subr.mxu0 0.0
  %2468 = vmatpush1.msra.mxu0 0.0
  %2469 = vmatprep.subr.mxu0 0.0
  %2470 = vmatpush1.msra.mxu0 0.0
  %2471 = vmatprep.subr.mxu0 0.0
  %2472 = vmatpush1.msra.mxu0 0.0
  %2473 = vmatprep.subr.mxu0 0.0
  %2474 = vmatpush1.msra.mxu0 0.0
  %2475 = vmatprep.subr.mxu0 0.0
  %2476 = vmatpush1.msra.mxu0 0.0
  %2477 = vmatprep.subr.mxu0 0.0
  %2478 = vmatpush1.msra.mxu0 0.0
  %2479 = vmatprep.subr.mxu0 0.0
  %2480 = vmatpush1.msra.mxu0 0.0
  %2481 = vmatprep.subr.mxu0 0.0
  %2482 = vmatpush1.msra.mxu0 0.0
  %2483 = vmatprep.subr.mxu0 0.0
  %2484 = vmatpush1.msra.mxu0 0.0
  %2485 = vmatprep.subr.mxu0 0.0
  %2486 = vmatpush1.msra.mxu0 0.0
  %2487 = vmatprep.subr.mxu0 0.0
  %2488 = vmatpush1.msra.mxu0 0.0
  %2489 = vmatprep.subr.mxu0 0.0
  %2490 = vmatpush1.msra.mxu0 0.0
  %2491 = vmatprep.subr.mxu0 0.0
  %2492 = vmatpush1.msra.mxu0 0.0
  %2493 = vmatprep.subr.mxu0 0.0
  %2494 = vmatpush1.msra.mxu0 0.0
  %2495 = vmatprep.subr.mxu0 0.0
  %2496 = vmatpush1.msra.mxu0 0.0
  %2497 = vmatprep.subr.mxu0 0.0
  %2498 = vmatpush1.msra.mxu0 0.0
  %2499 = vmatprep.subr.mxu0 0.0
  %2500 = vmatpush1.msra.mxu0 0.0
  %2501 = vmatprep.subr.mxu0 0.0
  %2502 = vmatpush1.msra.mxu0 0.0
  %2503 = vmatprep.subr.mxu0 0.0
  %2504 = vmatpush1.msra.mxu0 0.0
  %2505 = vmatprep.mubr.f32.mxu0 0.0
  %2506 = vmatmul.mubr.f32.gmra.mrb[0].mxu0 %v2354
  %v2507 = vpop.f32.mrb[0].mxu0
  %v2508 = vadd.f32 0.0, %v2507
  %v2509 = vpop.f32.mrb[0].mxu0
  %2510 = vdwg.mxu0
  %2511 = vmatprep.subr.mxu0 %v2366
  %2512 = vmatpush1.msra.mxu0 %v2364
  %2513 = vmatprep.subr.mxu0 0.0
  %2514 = vmatpush1.msra.mxu0 0.0
  %2515 = vmatprep.subr.mxu0 0.0
  %2516 = vmatpush1.msra.mxu0 0.0
  %2517 = vmatprep.subr.mxu0 0.0
  %2518 = vmatpush1.msra.mxu0 0.0
  %2519 = vmatprep.subr.mxu0 0.0
  %2520 = vmatpush1.msra.mxu0 0.0
  %2521 = vmatprep.subr.mxu0 0.0
  %2522 = vmatpush1.msra.mxu0 0.0
  %2523 = vmatprep.subr.mxu0 0.0
  %2524 = vmatpush1.msra.mxu0 0.0
  %2525 = vmatprep.subr.mxu0 0.0
  %2526 = vmatpush1.msra.mxu0 0.0
  %2527 = vmatprep.subr.mxu0 0.0
  %2528 = vmatpush1.msra.mxu0 0.0
  %2529 = vmatprep.subr.mxu0 0.0
  %2530 = vmatpush1.msra.mxu0 0.0
  %2531 = vmatprep.subr.mxu0 0.0
  %2532 = vmatpush1.msra.mxu0 0.0
  %2533 = vmatprep.subr.mxu0 0.0
  %2534 = vmatpush1.msra.mxu0 0.0
  %2535 = vmatprep.subr.mxu0 0.0
  %2536 = vmatpush1.msra.mxu0 0.0
  %2537 = vmatprep.subr.mxu0 0.0
  %2538 = vmatpush1.msra.mxu0 0.0
  %2539 = vmatprep.subr.mxu0 0.0
  %2540 = vmatpush1.msra.mxu0 0.0
  %2541 = vmatprep.subr.mxu0 0.0
  %2542 = vmatpush1.msra.mxu0 0.0
  %2543 = vmatprep.subr.mxu0 0.0
  %2544 = vmatpush1.msra.mxu0 0.0
  %2545 = vmatprep.subr.mxu0 0.0
  %2546 = vmatpush1.msra.mxu0 0.0
  %2547 = vmatprep.subr.mxu0 0.0
  %2548 = vmatpush1.msra.mxu0 0.0
  %2549 = vmatprep.subr.mxu0 0.0
  %2550 = vmatpush1.msra.mxu0 0.0
  %2551 = vmatprep.subr.mxu0 0.0
  %2552 = vmatpush1.msra.mxu0 0.0
  %2553 = vmatprep.subr.mxu0 0.0
  %2554 = vmatpush1.msra.mxu0 0.0
  %2555 = vmatprep.subr.mxu0 0.0
  %2556 = vmatpush1.msra.mxu0 0.0
  %2557 = vmatprep.subr.mxu0 0.0
  %2558 = vmatpush1.msra.mxu0 0.0
  %2559 = vmatprep.subr.mxu0 0.0
  %2560 = vmatpush1.msra.mxu0 0.0
  %2561 = vmatprep.subr.mxu0 0.0
  %2562 = vmatpush1.msra.mxu0 0.0
  %2563 = vmatprep.subr.mxu0 0.0
  %2564 = vmatpush1.msra.mxu0 0.0
  %2565 = vmatprep.subr.mxu0 0.0
  %2566 = vmatpush1.msra.mxu0 0.0
  %2567 = vmatprep.subr.mxu0 0.0
  %2568 = vmatpush1.msra.mxu0 0.0
  %2569 = vmatprep.subr.mxu0 0.0
  %2570 = vmatpush1.msra.mxu0 0.0
  %2571 = vmatprep.subr.mxu0 0.0
  %2572 = vmatpush1.msra.mxu0 0.0
  %2573 = vmatprep.subr.mxu0 0.0
  %2574 = vmatpush1.msra.mxu0 0.0
  %2575 = vmatprep.mubr.f32.mxu0 0.0
  %2576 = vmatmul.mubr.f32.gmra.mrb[0].mxu0 %v2354
  %v2577 = vpop.f32.mrb[0].mxu0
  %v2578 = vadd.f32 0.0, %v2577
  %v2579 = vpop.f32.mrb[0].mxu0
  %v2580 = vadd.f32 0.0, %v2579
  %2581 = vdwg.mxu0
  %2582 = vmatprep.subr.mxu0 0.0
  %2583 = vmatpush1.msra.mxu0 %v2368
  %2584 = vmatprep.subr.mxu0 0.0
  %2585 = vmatpush1.msra.mxu0 0.0
  %2586 = vmatprep.subr.mxu0 0.0
  %2587 = vmatpush1.msra.mxu0 0.0
  %2588 = vmatprep.subr.mxu0 0.0
  %2589 = vmatpush1.msra.mxu0 0.0
  %2590 = vmatprep.subr.mxu0 0.0
  %2591 = vmatpush1.msra.mxu0 0.0
  %2592 = vmatprep.subr.mxu0 0.0
  %2593 = vmatpush1.msra.mxu0 0.0
  %2594 = vmatprep.subr.mxu0 0.0
  %2595 = vmatpush1.msra.mxu0 0.0
  %2596 = vmatprep.subr.mxu0 0.0
  %2597 = vmatpush1.msra.mxu0 0.0
  %2598 = vmatprep.subr.mxu0 0.0
  %2599 = vmatpush1.msra.mxu0 0.0
  %2600 = vmatprep.subr.mxu0 0.0
  %2601 = vmatpush1.msra.mxu0 0.0
  %2602 = vmatprep.subr.mxu0 0.0
  %2603 = vmatpush1.msra.mxu0 0.0
  %2604 = vmatprep.subr.mxu0 0.0
  %2605 = vmatpush1.msra.mxu0 0.0
  %2606 = vmatprep.subr.mxu0 0.0
  %2607 = vmatpush1.msra.mxu0 0.0
  %2608 = vmatprep.subr.mxu0 0.0
  %2609 = vmatpush1.msra.mxu0 0.0
  %2610 = vmatprep.subr.mxu0 0.0
  %2611 = vmatpush1.msra.mxu0 0.0
  %2612 = vmatprep.subr.mxu0 0.0
  %2613 = vmatpush1.msra.mxu0 0.0
  %2614 = vmatprep.subr.mxu0 0.0
  %2615 = vmatpush1.msra.mxu0 0.0
  %2616 = vmatprep.subr.mxu0 0.0
  %2617 = vmatpush1.msra.mxu0 0.0
  %2618 = vmatprep.subr.mxu0 0.0
  %2619 = vmatpush1.msra.mxu0 0.0
  %2620 = vmatprep.subr.mxu0 0.0
  %2621 = vmatpush1.msra.mxu0 0.0
  %2622 = vmatprep.subr.mxu0 0.0
  %2623 = vmatpush1.msra.mxu0 0.0
  %2624 = vmatprep.subr.mxu0 0.0
  %2625 = vmatpush1.msra.mxu0 0.0
  %2626 = vmatprep.subr.mxu0 0.0
  %2627 = vmatpush1.msra.mxu0 0.0
  %2628 = vmatprep.subr.mxu0 0.0
  %2629 = vmatpush1.msra.mxu0 0.0
  %2630 = vmatprep.subr.mxu0 0.0
  %2631 = vmatpush1.msra.mxu0 0.0
  %2632 = vmatprep.subr.mxu0 0.0
  %2633 = vmatpush1.msra.mxu0 0.0
  %2634 = vmatprep.subr.mxu0 0.0
  %2635 = vmatpush1.msra.mxu0 0.0
  %2636 = vmatprep.subr.mxu0 0.0
  %2637 = vmatpush1.msra.mxu0 0.0
  %2638 = vmatprep.subr.mxu0 0.0
  %2639 = vmatpush1.msra.mxu0 0.0
  %2640 = vmatprep.subr.mxu0 0.0
  %2641 = vmatpush1.msra.mxu0 0.0
  %2642 = vmatprep.subr.mxu0 0.0
  %2643 = vmatpush1.msra.mxu0 0.0
  %2644 = vmatprep.subr.mxu0 0.0
  %2645 = vmatpush1.msra.mxu0 0.0
  %2646 = vmatprep.mubr.f32.mxu0 0.0
  %2647 = vmatmul.mubr.f32.gmra.mrb[0].mxu0 %v2354
  %v2648 = vpop.f32.mrb[0].mxu0
  %v2649 = vadd.f32 0.0, %v2648
  %v2650 = vpop.f32.mrb[0].mxu0
  %2651 = vdwg.mxu0
  %v2652 = vadd.f32 %v2324, %v2437
  %v2653 = vadd.f32 %v2325, %v2439
  %v2654 = vadd.f32 %v2326, %v2508
  %v2655 = vadd.f32 %v2327, %v2578
  %v2656 = vadd.f32 %v2328, %v2580
  %v2657 = vadd.f32 %v2329, %v2649
  %s2658 = scalar_lea.vmem %s2, 64
  %v2659 = vld [vmem:[%s2658] sm:$0xff]
  %2660 = vrot.lane.b32.xlu0 %v53, 109
  %v2661 = vpop.permute.xlu0 %2660
  %2662 = vrot.lane.b32.xlu0 %v43, 109
  %v2663 = vpop.permute.xlu0 %2662
  %2664 = vrot.lane.b32.xlu0 %v54, 109
  %v2665 = vpop.permute.xlu0 %2664
  %2666 = vrot.lane.b32.xlu0 %v44, 109
  %v2667 = vpop.permute.xlu0 %2666
  %2668 = vrot.lane.b32.xlu0 %v55, 109
  %v2669 = vpop.permute.xlu0 %2668
  %2670 = vrot.lane.b32.xlu0 %v45, 109
  %v2671 = vpop.permute.xlu0 %2670
  %2672 = vrot.lane.b32.xlu0 %v56, 109
  %v2673 = vpop.permute.xlu0 %2672
  %vm2674 = vcmask 891904
  %v2675 = vsel %vm2674, %v2661, %v2663
  %v2676 = vsel %vm2674, %v2663, %v2665
  %v2677 = vsel %vm2674, %v2665, %v2667
  %v2678 = vsel %vm2674, %v2667, %v2669
  %v2679 = vsel %vm2674, %v2669, %v2671
  %v2680 = vsel %vm2674, %v2671, %v2673
  %v2682 = vsel %vm81, %v2659, 0
  %v2684 = vsel %vm85, %v2675, 0
  %v2686 = vsel %vm85, %v2676, 0
  %v2688 = vsel %vm85, %v2677, 0
  %v2690 = vsel %vm85, %v2678, 0
  %v2692 = vsel %vm85, %v2679, 0
  %v2694 = vsel %vm85, %v2680, 0
  %v2696 = vsel %vm85, %v2673, 0
  %2698 = vmatprep.subr.mxu0 %v2686
  %2699 = vmatpush1.msra.mxu0 %v2684
  %2700 = vmatprep.subr.mxu0 0.0
  %2701 = vmatpush1.msra.mxu0 0.0
  %2702 = vmatprep.subr.mxu0 0.0
  %2703 = vmatpush1.msra.mxu0 0.0
  %2704 = vmatprep.subr.mxu0 0.0
  %2705 = vmatpush1.msra.mxu0 0.0
  %2706 = vmatprep.subr.mxu0 0.0
  %2707 = vmatpush1.msra.mxu0 0.0
  %2708 = vmatprep.subr.mxu0 0.0
  %2709 = vmatpush1.msra.mxu0 0.0
  %2710 = vmatprep.subr.mxu0 0.0
  %2711 = vmatpush1.msra.mxu0 0.0
  %2712 = vmatprep.subr.mxu0 0.0
  %2713 = vmatpush1.msra.mxu0 0.0
  %2714 = vmatprep.subr.mxu0 0.0
  %2715 = vmatpush1.msra.mxu0 0.0
  %2716 = vmatprep.subr.mxu0 0.0
  %2717 = vmatpush1.msra.mxu0 0.0
  %2718 = vmatprep.subr.mxu0 0.0
  %2719 = vmatpush1.msra.mxu0 0.0
  %2720 = vmatprep.subr.mxu0 0.0
  %2721 = vmatpush1.msra.mxu0 0.0
  %2722 = vmatprep.subr.mxu0 0.0
  %2723 = vmatpush1.msra.mxu0 0.0
  %2724 = vmatprep.subr.mxu0 0.0
  %2725 = vmatpush1.msra.mxu0 0.0
  %2726 = vmatprep.subr.mxu0 0.0
  %2727 = vmatpush1.msra.mxu0 0.0
  %2728 = vmatprep.subr.mxu0 0.0
  %2729 = vmatpush1.msra.mxu0 0.0
  %2730 = vmatprep.subr.mxu0 0.0
  %2731 = vmatpush1.msra.mxu0 0.0
  %2732 = vmatprep.subr.mxu0 0.0
  %2733 = vmatpush1.msra.mxu0 0.0
  %2734 = vmatprep.subr.mxu0 0.0
  %2735 = vmatpush1.msra.mxu0 0.0
  %2736 = vmatprep.subr.mxu0 0.0
  %2737 = vmatpush1.msra.mxu0 0.0
  %2738 = vmatprep.subr.mxu0 0.0
  %2739 = vmatpush1.msra.mxu0 0.0
  %2740 = vmatprep.subr.mxu0 0.0
  %2741 = vmatpush1.msra.mxu0 0.0
  %2742 = vmatprep.subr.mxu0 0.0
  %2743 = vmatpush1.msra.mxu0 0.0
  %2744 = vmatprep.subr.mxu0 0.0
  %2745 = vmatpush1.msra.mxu0 0.0
  %2746 = vmatprep.subr.mxu0 0.0
  %2747 = vmatpush1.msra.mxu0 0.0
  %2748 = vmatprep.subr.mxu0 0.0
  %2749 = vmatpush1.msra.mxu0 0.0
  %2750 = vmatprep.subr.mxu0 0.0
  %2751 = vmatpush1.msra.mxu0 0.0
  %2752 = vmatprep.subr.mxu0 0.0
  %2753 = vmatpush1.msra.mxu0 0.0
  %2754 = vmatprep.subr.mxu0 0.0
  %2755 = vmatpush1.msra.mxu0 0.0
  %2756 = vmatprep.subr.mxu0 0.0
  %2757 = vmatpush1.msra.mxu0 0.0
  %2758 = vmatprep.subr.mxu0 0.0
  %2759 = vmatpush1.msra.mxu0 0.0
  %2760 = vmatprep.subr.mxu0 0.0
  %2761 = vmatpush1.msra.mxu0 0.0
  %2762 = vmatprep.mubr.f32.mxu0 0.0
  %2763 = vmatmul.mubr.f32.gmra.mrb[0].mxu0 %v2682
  %v2764 = vpop.f32.mrb[0].mxu0
  %v2765 = vadd.f32 0.0, %v2764
  %v2766 = vpop.f32.mrb[0].mxu0
  %v2767 = vadd.f32 0.0, %v2766
  %2768 = vdwg.mxu0
  %2769 = vmatprep.subr.mxu0 %v2690
  %2770 = vmatpush1.msra.mxu0 %v2688
  %2771 = vmatprep.subr.mxu0 0.0
  %2772 = vmatpush1.msra.mxu0 0.0
  %2773 = vmatprep.subr.mxu0 0.0
  %2774 = vmatpush1.msra.mxu0 0.0
  %2775 = vmatprep.subr.mxu0 0.0
  %2776 = vmatpush1.msra.mxu0 0.0
  %2777 = vmatprep.subr.mxu0 0.0
  %2778 = vmatpush1.msra.mxu0 0.0
  %2779 = vmatprep.subr.mxu0 0.0
  %2780 = vmatpush1.msra.mxu0 0.0
  %2781 = vmatprep.subr.mxu0 0.0
  %2782 = vmatpush1.msra.mxu0 0.0
  %2783 = vmatprep.subr.mxu0 0.0
  %2784 = vmatpush1.msra.mxu0 0.0
  %2785 = vmatprep.subr.mxu0 0.0
  %2786 = vmatpush1.msra.mxu0 0.0
  %2787 = vmatprep.subr.mxu0 0.0
  %2788 = vmatpush1.msra.mxu0 0.0
  %2789 = vmatprep.subr.mxu0 0.0
  %2790 = vmatpush1.msra.mxu0 0.0
  %2791 = vmatprep.subr.mxu0 0.0
  %2792 = vmatpush1.msra.mxu0 0.0
  %2793 = vmatprep.subr.mxu0 0.0
  %2794 = vmatpush1.msra.mxu0 0.0
  %2795 = vmatprep.subr.mxu0 0.0
  %2796 = vmatpush1.msra.mxu0 0.0
  %2797 = vmatprep.subr.mxu0 0.0
  %2798 = vmatpush1.msra.mxu0 0.0
  %2799 = vmatprep.subr.mxu0 0.0
  %2800 = vmatpush1.msra.mxu0 0.0
  %2801 = vmatprep.subr.mxu0 0.0
  %2802 = vmatpush1.msra.mxu0 0.0
  %2803 = vmatprep.subr.mxu0 0.0
  %2804 = vmatpush1.msra.mxu0 0.0
  %2805 = vmatprep.subr.mxu0 0.0
  %2806 = vmatpush1.msra.mxu0 0.0
  %2807 = vmatprep.subr.mxu0 0.0
  %2808 = vmatpush1.msra.mxu0 0.0
  %2809 = vmatprep.subr.mxu0 0.0
  %2810 = vmatpush1.msra.mxu0 0.0
  %2811 = vmatprep.subr.mxu0 0.0
  %2812 = vmatpush1.msra.mxu0 0.0
  %2813 = vmatprep.subr.mxu0 0.0
  %2814 = vmatpush1.msra.mxu0 0.0
  %2815 = vmatprep.subr.mxu0 0.0
  %2816 = vmatpush1.msra.mxu0 0.0
  %2817 = vmatprep.subr.mxu0 0.0
  %2818 = vmatpush1.msra.mxu0 0.0
  %2819 = vmatprep.subr.mxu0 0.0
  %2820 = vmatpush1.msra.mxu0 0.0
  %2821 = vmatprep.subr.mxu0 0.0
  %2822 = vmatpush1.msra.mxu0 0.0
  %2823 = vmatprep.subr.mxu0 0.0
  %2824 = vmatpush1.msra.mxu0 0.0
  %2825 = vmatprep.subr.mxu0 0.0
  %2826 = vmatpush1.msra.mxu0 0.0
  %2827 = vmatprep.subr.mxu0 0.0
  %2828 = vmatpush1.msra.mxu0 0.0
  %2829 = vmatprep.subr.mxu0 0.0
  %2830 = vmatpush1.msra.mxu0 0.0
  %2831 = vmatprep.subr.mxu0 0.0
  %2832 = vmatpush1.msra.mxu0 0.0
  %2833 = vmatprep.mubr.f32.mxu0 0.0
  %2834 = vmatmul.mubr.f32.gmra.mrb[0].mxu0 %v2682
  %v2835 = vpop.f32.mrb[0].mxu0
  %v2836 = vadd.f32 0.0, %v2835
  %v2837 = vpop.f32.mrb[0].mxu0
  %2838 = vdwg.mxu0
  %2839 = vmatprep.subr.mxu0 %v2694
  %2840 = vmatpush1.msra.mxu0 %v2692
  %2841 = vmatprep.subr.mxu0 0.0
  %2842 = vmatpush1.msra.mxu0 0.0
  %2843 = vmatprep.subr.mxu0 0.0
  %2844 = vmatpush1.msra.mxu0 0.0
  %2845 = vmatprep.subr.mxu0 0.0
  %2846 = vmatpush1.msra.mxu0 0.0
  %2847 = vmatprep.subr.mxu0 0.0
  %2848 = vmatpush1.msra.mxu0 0.0
  %2849 = vmatprep.subr.mxu0 0.0
  %2850 = vmatpush1.msra.mxu0 0.0
  %2851 = vmatprep.subr.mxu0 0.0
  %2852 = vmatpush1.msra.mxu0 0.0
  %2853 = vmatprep.subr.mxu0 0.0
  %2854 = vmatpush1.msra.mxu0 0.0
  %2855 = vmatprep.subr.mxu0 0.0
  %2856 = vmatpush1.msra.mxu0 0.0
  %2857 = vmatprep.subr.mxu0 0.0
  %2858 = vmatpush1.msra.mxu0 0.0
  %2859 = vmatprep.subr.mxu0 0.0
  %2860 = vmatpush1.msra.mxu0 0.0
  %2861 = vmatprep.subr.mxu0 0.0
  %2862 = vmatpush1.msra.mxu0 0.0
  %2863 = vmatprep.subr.mxu0 0.0
  %2864 = vmatpush1.msra.mxu0 0.0
  %2865 = vmatprep.subr.mxu0 0.0
  %2866 = vmatpush1.msra.mxu0 0.0
  %2867 = vmatprep.subr.mxu0 0.0
  %2868 = vmatpush1.msra.mxu0 0.0
  %2869 = vmatprep.subr.mxu0 0.0
  %2870 = vmatpush1.msra.mxu0 0.0
  %2871 = vmatprep.subr.mxu0 0.0
  %2872 = vmatpush1.msra.mxu0 0.0
  %2873 = vmatprep.subr.mxu0 0.0
  %2874 = vmatpush1.msra.mxu0 0.0
  %2875 = vmatprep.subr.mxu0 0.0
  %2876 = vmatpush1.msra.mxu0 0.0
  %2877 = vmatprep.subr.mxu0 0.0
  %2878 = vmatpush1.msra.mxu0 0.0
  %2879 = vmatprep.subr.mxu0 0.0
  %2880 = vmatpush1.msra.mxu0 0.0
  %2881 = vmatprep.subr.mxu0 0.0
  %2882 = vmatpush1.msra.mxu0 0.0
  %2883 = vmatprep.subr.mxu0 0.0
  %2884 = vmatpush1.msra.mxu0 0.0
  %2885 = vmatprep.subr.mxu0 0.0
  %2886 = vmatpush1.msra.mxu0 0.0
  %2887 = vmatprep.subr.mxu0 0.0
  %2888 = vmatpush1.msra.mxu0 0.0
  %2889 = vmatprep.subr.mxu0 0.0
  %2890 = vmatpush1.msra.mxu0 0.0
  %2891 = vmatprep.subr.mxu0 0.0
  %2892 = vmatpush1.msra.mxu0 0.0
  %2893 = vmatprep.subr.mxu0 0.0
  %2894 = vmatpush1.msra.mxu0 0.0
  %2895 = vmatprep.subr.mxu0 0.0
  %2896 = vmatpush1.msra.mxu0 0.0
  %2897 = vmatprep.subr.mxu0 0.0
  %2898 = vmatpush1.msra.mxu0 0.0
  %2899 = vmatprep.subr.mxu0 0.0
  %2900 = vmatpush1.msra.mxu0 0.0
  %2901 = vmatprep.subr.mxu0 0.0
  %2902 = vmatpush1.msra.mxu0 0.0
  %2903 = vmatprep.mubr.f32.mxu0 0.0
  %2904 = vmatmul.mubr.f32.gmra.mrb[0].mxu0 %v2682
  %v2905 = vpop.f32.mrb[0].mxu0
  %v2906 = vadd.f32 0.0, %v2905
  %v2907 = vpop.f32.mrb[0].mxu0
  %v2908 = vadd.f32 0.0, %v2907
  %2909 = vdwg.mxu0
  %2910 = vmatprep.subr.mxu0 0.0
  %2911 = vmatpush1.msra.mxu0 %v2696
  %2912 = vmatprep.subr.mxu0 0.0
  %2913 = vmatpush1.msra.mxu0 0.0
  %2914 = vmatprep.subr.mxu0 0.0
  %2915 = vmatpush1.msra.mxu0 0.0
  %2916 = vmatprep.subr.mxu0 0.0
  %2917 = vmatpush1.msra.mxu0 0.0
  %2918 = vmatprep.subr.mxu0 0.0
  %2919 = vmatpush1.msra.mxu0 0.0
  %2920 = vmatprep.subr.mxu0 0.0
  %2921 = vmatpush1.msra.mxu0 0.0
  %2922 = vmatprep.subr.mxu0 0.0
  %2923 = vmatpush1.msra.mxu0 0.0
  %2924 = vmatprep.subr.mxu0 0.0
  %2925 = vmatpush1.msra.mxu0 0.0
  %2926 = vmatprep.subr.mxu0 0.0
  %2927 = vmatpush1.msra.mxu0 0.0
  %2928 = vmatprep.subr.mxu0 0.0
  %2929 = vmatpush1.msra.mxu0 0.0
  %2930 = vmatprep.subr.mxu0 0.0
  %2931 = vmatpush1.msra.mxu0 0.0
  %2932 = vmatprep.subr.mxu0 0.0
  %2933 = vmatpush1.msra.mxu0 0.0
  %2934 = vmatprep.subr.mxu0 0.0
  %2935 = vmatpush1.msra.mxu0 0.0
  %2936 = vmatprep.subr.mxu0 0.0
  %2937 = vmatpush1.msra.mxu0 0.0
  %2938 = vmatprep.subr.mxu0 0.0
  %2939 = vmatpush1.msra.mxu0 0.0
  %2940 = vmatprep.subr.mxu0 0.0
  %2941 = vmatpush1.msra.mxu0 0.0
  %2942 = vmatprep.subr.mxu0 0.0
  %2943 = vmatpush1.msra.mxu0 0.0
  %2944 = vmatprep.subr.mxu0 0.0
  %2945 = vmatpush1.msra.mxu0 0.0
  %2946 = vmatprep.subr.mxu0 0.0
  %2947 = vmatpush1.msra.mxu0 0.0
  %2948 = vmatprep.subr.mxu0 0.0
  %2949 = vmatpush1.msra.mxu0 0.0
  %2950 = vmatprep.subr.mxu0 0.0
  %2951 = vmatpush1.msra.mxu0 0.0
  %2952 = vmatprep.subr.mxu0 0.0
  %2953 = vmatpush1.msra.mxu0 0.0
  %2954 = vmatprep.subr.mxu0 0.0
  %2955 = vmatpush1.msra.mxu0 0.0
  %2956 = vmatprep.subr.mxu0 0.0
  %2957 = vmatpush1.msra.mxu0 0.0
  %2958 = vmatprep.subr.mxu0 0.0
  %2959 = vmatpush1.msra.mxu0 0.0
  %2960 = vmatprep.subr.mxu0 0.0
  %2961 = vmatpush1.msra.mxu0 0.0
  %2962 = vmatprep.subr.mxu0 0.0
  %2963 = vmatpush1.msra.mxu0 0.0
  %2964 = vmatprep.subr.mxu0 0.0
  %2965 = vmatpush1.msra.mxu0 0.0
  %2966 = vmatprep.subr.mxu0 0.0
  %2967 = vmatpush1.msra.mxu0 0.0
  %2968 = vmatprep.subr.mxu0 0.0
  %2969 = vmatpush1.msra.mxu0 0.0
  %2970 = vmatprep.subr.mxu0 0.0
  %2971 = vmatpush1.msra.mxu0 0.0
  %2972 = vmatprep.subr.mxu0 0.0
  %2973 = vmatpush1.msra.mxu0 0.0
  %2974 = vmatprep.mubr.f32.mxu0 0.0
  %2975 = vmatmul.mubr.f32.gmra.mrb[0].mxu0 %v2682
  %v2976 = vpop.f32.mrb[0].mxu0
  %v2977 = vadd.f32 0.0, %v2976
  %v2978 = vpop.f32.mrb[0].mxu0
  %2979 = vdwg.mxu0
  %v2980 = vadd.f32 %v2652, %v2765
  %v2981 = vadd.f32 %v2653, %v2767
  %v2982 = vadd.f32 %v2654, %v2836
  %v2983 = vadd.f32 %v2655, %v2906
  %v2984 = vadd.f32 %v2656, %v2908
  %v2985 = vadd.f32 %v2657, %v2977
  %v2986 = vmul.f32 %v2980, %v22
  %v2987 = vmul.f32 %v2981, %v26
  %v2988 = vmul.f32 %v2982, %v30
  %v2989 = vadd.f32 %v2986, %v2987
  %vm2990 = vcmask 556032
  %v2991 = vsel %vm2990, %v2988, 0.0
  %v2992 = vadd.f32 %v2989, %v2991
  %2993 = vadd.xlane.f32.xlu0 %v2992
  %v2994 = vpop.xlane.xlu0 %2993
  %v2995 = vmul.f32 %v2994, 0.00390625
  %v2996 = vsub.f32 %v2980, %v2995
  %v2997 = vsub.f32 %v2981, %v2995
  %v2998 = vsub.f32 %v2982, %v2995
  %v2999 = vmul.f32 %v2996, %v22
  %v3000 = vmul.f32 %v2997, %v26
  %v3001 = vmul.f32 %v2998, %v30
  %v3002 = vmul.f32 %v2999, %v2999
  %v3003 = vmul.f32 %v3000, %v3000
  %v3004 = vmul.f32 %v3001, %v3001
  %v3005 = vadd.f32 %v3002, %v3003
  %v3006 = vsel %vm2990, %v3004, 0.0
  %v3007 = vadd.f32 %v3005, %v3006
  %3008 = vadd.xlane.f32.xlu0 %v3007
  %v3009 = vpop.xlane.xlu0 %3008
  %v3010 = vmul.f32 %v3009, 0.00390625
  %v3011 = vadd.f32 %v3010, 1e-05
  %v3012 = vrsqrt.pop %v3011
  %v3013 = vmul.f32 %v2999, %v3012
  %v3014 = vmul.f32 %v3000, %v3012
  %v3015 = vmul.f32 %v3001, %v3012
  %vm3016 = vcmp.ge.f32.partialorder %v3013, 0.0
  %vm3017 = vcmp.ge.f32.partialorder %v3014, 0.0
  %vm3018 = vcmp.ge.f32.partialorder %v3015, 0.0
  %v3019 = vmul.f32 %v3013, 0.2
  %v3020 = vmul.f32 %v3014, 0.2
  %v3021 = vmul.f32 %v3015, 0.2
  %v3022 = vsel %vm3016, %v3013, %v3019
  %v3023 = vsel %vm3017, %v3014, %v3020
  %v3024 = vsel %vm3018, %v3015, %v3021
  %3025 = vst [vmem:[#allocation2 + $0x8] sm:$0xff] %v3022
  %3026 = vst [vmem:[#allocation2 + $0x10] sm:$0xff] %v3023
  %3027 = vst.msk [vmem:[#allocation2 + $0x18] sm:$0xff] %vm2990, %v3024
  %v3028 = vmul.f32 %v2983, %v22
  %v3029 = vmul.f32 %v2984, %v26
  %v3030 = vmul.f32 %v2985, %v30
  %v3031 = vadd.f32 %v3028, %v3029
  %v3032 = vsel %vm2990, %v3030, 0.0
  %v3033 = vadd.f32 %v3031, %v3032
  %3034 = vadd.xlane.f32.xlu0 %v3033
  %v3035 = vpop.xlane.xlu0 %3034
  %v3036 = vmul.f32 %v3035, 0.00390625
  %v3037 = vsub.f32 %v2983, %v3036
  %v3038 = vsub.f32 %v2984, %v3036
  %v3039 = vsub.f32 %v2985, %v3036
  %v3040 = vmul.f32 %v3037, %v22
  %v3041 = vmul.f32 %v3038, %v26
  %v3042 = vmul.f32 %v3039, %v30
  %v3043 = vmul.f32 %v3040, %v3040
  %v3044 = vmul.f32 %v3041, %v3041
  %v3045 = vmul.f32 %v3042, %v3042
  %v3046 = vadd.f32 %v3043, %v3044
  %v3047 = vsel %vm2990, %v3045, 0.0
  %v3048 = vadd.f32 %v3046, %v3047
  %3049 = vadd.xlane.f32.xlu0 %v3048
  %v3050 = vpop.xlane.xlu0 %3049
  %v3051 = vmul.f32 %v3050, 0.00390625
  %v3052 = vadd.f32 %v3051, 1e-05
  %v3053 = vrsqrt.pop %v3052
  %v3054 = vmul.f32 %v3040, %v3053
  %v3055 = vmul.f32 %v3041, %v3053
  %v3056 = vmul.f32 %v3042, %v3053
  %vm3057 = vcmp.ge.f32.partialorder %v3054, 0.0
  %vm3058 = vcmp.ge.f32.partialorder %v3055, 0.0
  %vm3059 = vcmp.ge.f32.partialorder %v3056, 0.0
  %v3060 = vmul.f32 %v3054, 0.2
  %v3061 = vmul.f32 %v3055, 0.2
  %v3062 = vmul.f32 %v3056, 0.2
  %v3063 = vsel %vm3057, %v3054, %v3060
  %v3064 = vsel %vm3058, %v3055, %v3061
  %v3065 = vsel %vm3059, %v3056, %v3062
  %3066 = vst [vmem:[#allocation2 + $0x28] sm:$0xff] %v3063
  %3067 = vst [vmem:[#allocation2 + $0x30] sm:$0xff] %v3064
  %3068 = vst.msk [vmem:[#allocation2 + $0x38] sm:$0xff] %vm2990, %v3065
  %v3069 = vld [vmem:[#allocation2] sm:$0xff]
  %v3070 = vld [vmem:[#allocation2 + $0x8] sm:$0xff]
  %v3071 = vld [vmem:[#allocation2 + $0x10] sm:$0xff]
  %v3072 = vld [vmem:[#allocation2 + $0x18] sm:$0xff]
  %v3073 = vld [vmem:[#allocation2 + $0x20] sm:$0xff]
  %v3074 = vld [vmem:[#allocation2 + $0x28] sm:$0xff]
  %v3075 = vld [vmem:[#allocation2 + $0x30] sm:$0xff]
  %v3076 = vld [vmem:[#allocation2 + $0x38] sm:$0xff]
  %v3077 = vld [vmem:[%s3] sm:$0xff]
  %s3078 = scalar_lea.vmem %s3, 8
  %v3079 = vld [vmem:[%s3078] sm:$0xff]
  %3088 = vrot.lane.b32.xlu0 %v3069, 18
  %v3089 = vpop.permute.xlu0 %3088
  %3090 = vrot.lane.b32.xlu0 %v3070, 18
  %v3091 = vpop.permute.xlu0 %3090
  %3092 = vrot.lane.b32.xlu0 %v3071, 18
  %v3093 = vpop.permute.xlu0 %3092
  %3094 = vrot.lane.b32.xlu0 %v3072, 18
  %v3095 = vpop.permute.xlu0 %3094
  %3096 = vrot.lane.b32.xlu0 %v3073, 18
  %v3097 = vpop.permute.xlu0 %3096
  %3098 = vrot.lane.b32.xlu0 %v3074, 18
  %v3099 = vpop.permute.xlu0 %3098
  %3100 = vrot.lane.b32.xlu0 %v3075, 18
  %v3101 = vpop.permute.xlu0 %3100
  %3102 = vrot.lane.b32.xlu0 %v3076, 18
  %v3103 = vpop.permute.xlu0 %3102
  %v3104 = vsel %vm73, %v3089, %v3091
  %v3105 = vsel %vm73, %v3091, %v3093
  %v3106 = vsel %vm73, %v3093, %v3095
  %v3107 = vsel %vm73, %v3095, %v3097
  %v3108 = vsel %vm73, %v3097, %v3099
  %v3109 = vsel %vm73, %v3099, %v3101
  %v3110 = vsel %vm73, %v3101, %v3103
  %vm3118 = vcmask 64512
  %v3120 = vsel %vm3118, %v3079, 0
  %3122 = vmatprep.subr.mxu0 %v3105
  %3123 = vmatpush1.msra.mxu0 %v3104
  %3124 = vmatprep.subr.mxu0 0.0
  %3125 = vmatpush1.msra.mxu0 0.0
  %3126 = vmatprep.subr.mxu0 0.0
  %3127 = vmatpush1.msra.mxu0 0.0
  %3128 = vmatprep.subr.mxu0 0.0
  %3129 = vmatpush1.msra.mxu0 0.0
  %3130 = vmatprep.subr.mxu0 0.0
  %3131 = vmatpush1.msra.mxu0 0.0
  %3132 = vmatprep.subr.mxu0 0.0
  %3133 = vmatpush1.msra.mxu0 0.0
  %3134 = vmatprep.subr.mxu0 0.0
  %3135 = vmatpush1.msra.mxu0 0.0
  %3136 = vmatprep.subr.mxu0 0.0
  %3137 = vmatpush1.msra.mxu0 0.0
  %3138 = vmatprep.subr.mxu0 0.0
  %3139 = vmatpush1.msra.mxu0 0.0
  %3140 = vmatprep.subr.mxu0 0.0
  %3141 = vmatpush1.msra.mxu0 0.0
  %3142 = vmatprep.subr.mxu0 0.0
  %3143 = vmatpush1.msra.mxu0 0.0
  %3144 = vmatprep.subr.mxu0 0.0
  %3145 = vmatpush1.msra.mxu0 0.0
  %3146 = vmatprep.subr.mxu0 0.0
  %3147 = vmatpush1.msra.mxu0 0.0
  %3148 = vmatprep.subr.mxu0 0.0
  %3149 = vmatpush1.msra.mxu0 0.0
  %3150 = vmatprep.subr.mxu0 0.0
  %3151 = vmatpush1.msra.mxu0 0.0
  %3152 = vmatprep.subr.mxu0 0.0
  %3153 = vmatpush1.msra.mxu0 0.0
  %3154 = vmatprep.subr.mxu0 0.0
  %3155 = vmatpush1.msra.mxu0 0.0
  %3156 = vmatprep.subr.mxu0 0.0
  %3157 = vmatpush1.msra.mxu0 0.0
  %3158 = vmatprep.subr.mxu0 0.0
  %3159 = vmatpush1.msra.mxu0 0.0
  %3160 = vmatprep.subr.mxu0 0.0
  %3161 = vmatpush1.msra.mxu0 0.0
  %3162 = vmatprep.subr.mxu0 0.0
  %3163 = vmatpush1.msra.mxu0 0.0
  %3164 = vmatprep.subr.mxu0 0.0
  %3165 = vmatpush1.msra.mxu0 0.0
  %3166 = vmatprep.subr.mxu0 0.0
  %3167 = vmatpush1.msra.mxu0 0.0
  %3168 = vmatprep.subr.mxu0 0.0
  %3169 = vmatpush1.msra.mxu0 0.0
  %3170 = vmatprep.subr.mxu0 0.0
  %3171 = vmatpush1.msra.mxu0 0.0
  %3172 = vmatprep.subr.mxu0 0.0
  %3173 = vmatpush1.msra.mxu0 0.0
  %3174 = vmatprep.subr.mxu0 0.0
  %3175 = vmatpush1.msra.mxu0 0.0
  %3176 = vmatprep.subr.mxu0 0.0
  %3177 = vmatpush1.msra.mxu0 0.0
  %3178 = vmatprep.subr.mxu0 0.0
  %3179 = vmatpush1.msra.mxu0 0.0
  %3180 = vmatprep.subr.mxu0 0.0
  %3181 = vmatpush1.msra.mxu0 0.0
  %3182 = vmatprep.subr.mxu0 0.0
  %3183 = vmatpush1.msra.mxu0 0.0
  %3184 = vmatprep.subr.mxu0 0.0
  %3185 = vmatpush1.msra.mxu0 0.0
  %3186 = vmatprep.mubr.f32.mxu0 0.0
  %3187 = vmatmul.mubr.f32.gmra.mrb[0].mxu0 %v3120
  %v3188 = vpop.f32.mrb[0].mxu0
  %v3189 = vadd.f32 0.0, %v3188
  %v3190 = vpop.f32.mrb[0].mxu0
  %v3191 = vadd.f32 0.0, %v3190
  %3192 = vdwg.mxu0
  %3193 = vmatprep.subr.mxu0 %v3107
  %3194 = vmatpush1.msra.mxu0 %v3106
  %3195 = vmatprep.subr.mxu0 0.0
  %3196 = vmatpush1.msra.mxu0 0.0
  %3197 = vmatprep.subr.mxu0 0.0
  %3198 = vmatpush1.msra.mxu0 0.0
  %3199 = vmatprep.subr.mxu0 0.0
  %3200 = vmatpush1.msra.mxu0 0.0
  %3201 = vmatprep.subr.mxu0 0.0
  %3202 = vmatpush1.msra.mxu0 0.0
  %3203 = vmatprep.subr.mxu0 0.0
  %3204 = vmatpush1.msra.mxu0 0.0
  %3205 = vmatprep.subr.mxu0 0.0
  %3206 = vmatpush1.msra.mxu0 0.0
  %3207 = vmatprep.subr.mxu0 0.0
  %3208 = vmatpush1.msra.mxu0 0.0
  %3209 = vmatprep.subr.mxu0 0.0
  %3210 = vmatpush1.msra.mxu0 0.0
  %3211 = vmatprep.subr.mxu0 0.0
  %3212 = vmatpush1.msra.mxu0 0.0
  %3213 = vmatprep.subr.mxu0 0.0
  %3214 = vmatpush1.msra.mxu0 0.0
  %3215 = vmatprep.subr.mxu0 0.0
  %3216 = vmatpush1.msra.mxu0 0.0
  %3217 = vmatprep.subr.mxu0 0.0
  %3218 = vmatpush1.msra.mxu0 0.0
  %3219 = vmatprep.subr.mxu0 0.0
  %3220 = vmatpush1.msra.mxu0 0.0
  %3221 = vmatprep.subr.mxu0 0.0
  %3222 = vmatpush1.msra.mxu0 0.0
  %3223 = vmatprep.subr.mxu0 0.0
  %3224 = vmatpush1.msra.mxu0 0.0
  %3225 = vmatprep.subr.mxu0 0.0
  %3226 = vmatpush1.msra.mxu0 0.0
  %3227 = vmatprep.subr.mxu0 0.0
  %3228 = vmatpush1.msra.mxu0 0.0
  %3229 = vmatprep.subr.mxu0 0.0
  %3230 = vmatpush1.msra.mxu0 0.0
  %3231 = vmatprep.subr.mxu0 0.0
  %3232 = vmatpush1.msra.mxu0 0.0
  %3233 = vmatprep.subr.mxu0 0.0
  %3234 = vmatpush1.msra.mxu0 0.0
  %3235 = vmatprep.subr.mxu0 0.0
  %3236 = vmatpush1.msra.mxu0 0.0
  %3237 = vmatprep.subr.mxu0 0.0
  %3238 = vmatpush1.msra.mxu0 0.0
  %3239 = vmatprep.subr.mxu0 0.0
  %3240 = vmatpush1.msra.mxu0 0.0
  %3241 = vmatprep.subr.mxu0 0.0
  %3242 = vmatpush1.msra.mxu0 0.0
  %3243 = vmatprep.subr.mxu0 0.0
  %3244 = vmatpush1.msra.mxu0 0.0
  %3245 = vmatprep.subr.mxu0 0.0
  %3246 = vmatpush1.msra.mxu0 0.0
  %3247 = vmatprep.subr.mxu0 0.0
  %3248 = vmatpush1.msra.mxu0 0.0
  %3249 = vmatprep.subr.mxu0 0.0
  %3250 = vmatpush1.msra.mxu0 0.0
  %3251 = vmatprep.subr.mxu0 0.0
  %3252 = vmatpush1.msra.mxu0 0.0
  %3253 = vmatprep.subr.mxu0 0.0
  %3254 = vmatpush1.msra.mxu0 0.0
  %3255 = vmatprep.subr.mxu0 0.0
  %3256 = vmatpush1.msra.mxu0 0.0
  %3257 = vmatprep.mubr.f32.mxu0 0.0
  %3258 = vmatmul.mubr.f32.gmra.mrb[0].mxu0 %v3120
  %v3259 = vpop.f32.mrb[0].mxu0
  %v3260 = vadd.f32 0.0, %v3259
  %v3261 = vpop.f32.mrb[0].mxu0
  %3262 = vdwg.mxu0
  %3263 = vmatprep.subr.mxu0 %v3109
  %3264 = vmatpush1.msra.mxu0 %v3108
  %3265 = vmatprep.subr.mxu0 0.0
  %3266 = vmatpush1.msra.mxu0 0.0
  %3267 = vmatprep.subr.mxu0 0.0
  %3268 = vmatpush1.msra.mxu0 0.0
  %3269 = vmatprep.subr.mxu0 0.0
  %3270 = vmatpush1.msra.mxu0 0.0
  %3271 = vmatprep.subr.mxu0 0.0
  %3272 = vmatpush1.msra.mxu0 0.0
  %3273 = vmatprep.subr.mxu0 0.0
  %3274 = vmatpush1.msra.mxu0 0.0
  %3275 = vmatprep.subr.mxu0 0.0
  %3276 = vmatpush1.msra.mxu0 0.0
  %3277 = vmatprep.subr.mxu0 0.0
  %3278 = vmatpush1.msra.mxu0 0.0
  %3279 = vmatprep.subr.mxu0 0.0
  %3280 = vmatpush1.msra.mxu0 0.0
  %3281 = vmatprep.subr.mxu0 0.0
  %3282 = vmatpush1.msra.mxu0 0.0
  %3283 = vmatprep.subr.mxu0 0.0
  %3284 = vmatpush1.msra.mxu0 0.0
  %3285 = vmatprep.subr.mxu0 0.0
  %3286 = vmatpush1.msra.mxu0 0.0
  %3287 = vmatprep.subr.mxu0 0.0
  %3288 = vmatpush1.msra.mxu0 0.0
  %3289 = vmatprep.subr.mxu0 0.0
  %3290 = vmatpush1.msra.mxu0 0.0
  %3291 = vmatprep.subr.mxu0 0.0
  %3292 = vmatpush1.msra.mxu0 0.0
  %3293 = vmatprep.subr.mxu0 0.0
  %3294 = vmatpush1.msra.mxu0 0.0
  %3295 = vmatprep.subr.mxu0 0.0
  %3296 = vmatpush1.msra.mxu0 0.0
  %3297 = vmatprep.subr.mxu0 0.0
  %3298 = vmatpush1.msra.mxu0 0.0
  %3299 = vmatprep.subr.mxu0 0.0
  %3300 = vmatpush1.msra.mxu0 0.0
  %3301 = vmatprep.subr.mxu0 0.0
  %3302 = vmatpush1.msra.mxu0 0.0
  %3303 = vmatprep.subr.mxu0 0.0
  %3304 = vmatpush1.msra.mxu0 0.0
  %3305 = vmatprep.subr.mxu0 0.0
  %3306 = vmatpush1.msra.mxu0 0.0
  %3307 = vmatprep.subr.mxu0 0.0
  %3308 = vmatpush1.msra.mxu0 0.0
  %3309 = vmatprep.subr.mxu0 0.0
  %3310 = vmatpush1.msra.mxu0 0.0
  %3311 = vmatprep.subr.mxu0 0.0
  %3312 = vmatpush1.msra.mxu0 0.0
  %3313 = vmatprep.subr.mxu0 0.0
  %3314 = vmatpush1.msra.mxu0 0.0
  %3315 = vmatprep.subr.mxu0 0.0
  %3316 = vmatpush1.msra.mxu0 0.0
  %3317 = vmatprep.subr.mxu0 0.0
  %3318 = vmatpush1.msra.mxu0 0.0
  %3319 = vmatprep.subr.mxu0 0.0
  %3320 = vmatpush1.msra.mxu0 0.0
  %3321 = vmatprep.subr.mxu0 0.0
  %3322 = vmatpush1.msra.mxu0 0.0
  %3323 = vmatprep.subr.mxu0 0.0
  %3324 = vmatpush1.msra.mxu0 0.0
  %3325 = vmatprep.subr.mxu0 0.0
  %3326 = vmatpush1.msra.mxu0 0.0
  %3327 = vmatprep.mubr.f32.mxu0 0.0
  %3328 = vmatmul.mubr.f32.gmra.mrb[0].mxu0 %v3120
  %v3329 = vpop.f32.mrb[0].mxu0
  %v3330 = vadd.f32 0.0, %v3329
  %v3331 = vpop.f32.mrb[0].mxu0
  %v3332 = vadd.f32 0.0, %v3331
  %3333 = vdwg.mxu0
  %3334 = vmatprep.subr.mxu0 0.0
  %3335 = vmatpush1.msra.mxu0 %v3110
  %3336 = vmatprep.subr.mxu0 0.0
  %3337 = vmatpush1.msra.mxu0 0.0
  %3338 = vmatprep.subr.mxu0 0.0
  %3339 = vmatpush1.msra.mxu0 0.0
  %3340 = vmatprep.subr.mxu0 0.0
  %3341 = vmatpush1.msra.mxu0 0.0
  %3342 = vmatprep.subr.mxu0 0.0
  %3343 = vmatpush1.msra.mxu0 0.0
  %3344 = vmatprep.subr.mxu0 0.0
  %3345 = vmatpush1.msra.mxu0 0.0
  %3346 = vmatprep.subr.mxu0 0.0
  %3347 = vmatpush1.msra.mxu0 0.0
  %3348 = vmatprep.subr.mxu0 0.0
  %3349 = vmatpush1.msra.mxu0 0.0
  %3350 = vmatprep.subr.mxu0 0.0
  %3351 = vmatpush1.msra.mxu0 0.0
  %3352 = vmatprep.subr.mxu0 0.0
  %3353 = vmatpush1.msra.mxu0 0.0
  %3354 = vmatprep.subr.mxu0 0.0
  %3355 = vmatpush1.msra.mxu0 0.0
  %3356 = vmatprep.subr.mxu0 0.0
  %3357 = vmatpush1.msra.mxu0 0.0
  %3358 = vmatprep.subr.mxu0 0.0
  %3359 = vmatpush1.msra.mxu0 0.0
  %3360 = vmatprep.subr.mxu0 0.0
  %3361 = vmatpush1.msra.mxu0 0.0
  %3362 = vmatprep.subr.mxu0 0.0
  %3363 = vmatpush1.msra.mxu0 0.0
  %3364 = vmatprep.subr.mxu0 0.0
  %3365 = vmatpush1.msra.mxu0 0.0
  %3366 = vmatprep.subr.mxu0 0.0
  %3367 = vmatpush1.msra.mxu0 0.0
  %3368 = vmatprep.subr.mxu0 0.0
  %3369 = vmatpush1.msra.mxu0 0.0
  %3370 = vmatprep.subr.mxu0 0.0
  %3371 = vmatpush1.msra.mxu0 0.0
  %3372 = vmatprep.subr.mxu0 0.0
  %3373 = vmatpush1.msra.mxu0 0.0
  %3374 = vmatprep.subr.mxu0 0.0
  %3375 = vmatpush1.msra.mxu0 0.0
  %3376 = vmatprep.subr.mxu0 0.0
  %3377 = vmatpush1.msra.mxu0 0.0
  %3378 = vmatprep.subr.mxu0 0.0
  %3379 = vmatpush1.msra.mxu0 0.0
  %3380 = vmatprep.subr.mxu0 0.0
  %3381 = vmatpush1.msra.mxu0 0.0
  %3382 = vmatprep.subr.mxu0 0.0
  %3383 = vmatpush1.msra.mxu0 0.0
  %3384 = vmatprep.subr.mxu0 0.0
  %3385 = vmatpush1.msra.mxu0 0.0
  %3386 = vmatprep.subr.mxu0 0.0
  %3387 = vmatpush1.msra.mxu0 0.0
  %3388 = vmatprep.subr.mxu0 0.0
  %3389 = vmatpush1.msra.mxu0 0.0
  %3390 = vmatprep.subr.mxu0 0.0
  %3391 = vmatpush1.msra.mxu0 0.0
  %3392 = vmatprep.subr.mxu0 0.0
  %3393 = vmatpush1.msra.mxu0 0.0
  %3394 = vmatprep.subr.mxu0 0.0
  %3395 = vmatpush1.msra.mxu0 0.0
  %3396 = vmatprep.subr.mxu0 0.0
  %3397 = vmatpush1.msra.mxu0 0.0
  %3398 = vmatprep.mubr.f32.mxu0 0.0
  %3399 = vmatmul.mubr.f32.gmra.mrb[0].mxu0 %v3120
  %v3400 = vpop.f32.mrb[0].mxu0
  %v3401 = vadd.f32 0.0, %v3400
  %v3402 = vpop.f32.mrb[0].mxu0
  %3403 = vdwg.mxu0
  %3404 = vrot.lane.b32.xlu0 %v3069, 19
  %v3405 = vpop.permute.xlu0 %3404
  %3406 = vrot.lane.b32.xlu0 %v3070, 19
  %v3407 = vpop.permute.xlu0 %3406
  %3408 = vrot.lane.b32.xlu0 %v3071, 19
  %v3409 = vpop.permute.xlu0 %3408
  %3410 = vrot.lane.b32.xlu0 %v3072, 19
  %v3411 = vpop.permute.xlu0 %3410
  %3412 = vrot.lane.b32.xlu0 %v3073, 19
  %v3413 = vpop.permute.xlu0 %3412
  %3414 = vrot.lane.b32.xlu0 %v3074, 19
  %v3415 = vpop.permute.xlu0 %3414
  %3416 = vrot.lane.b32.xlu0 %v3075, 19
  %v3417 = vpop.permute.xlu0 %3416
  %3418 = vrot.lane.b32.xlu0 %v3076, 19
  %v3419 = vpop.permute.xlu0 %3418
  %v3420 = vsel %vm398, %v3405, %v3407
  %v3421 = vsel %vm398, %v3407, %v3409
  %v3422 = vsel %vm398, %v3409, %v3411
  %v3423 = vsel %vm398, %v3411, %v3413
  %v3424 = vsel %vm398, %v3413, %v3415
  %v3425 = vsel %vm398, %v3415, %v3417
  %v3426 = vsel %vm398, %v3417, %v3419
  %v3435 = vsel %vm3118, %v3077, 0
  %3437 = vmatprep.subr.mxu0 %v3421
  %3438 = vmatpush1.msra.mxu0 %v3420
  %3439 = vmatprep.subr.mxu0 0.0
  %3440 = vmatpush1.msra.mxu0 0.0
  %3441 = vmatprep.subr.mxu0 0.0
  %3442 = vmatpush1.msra.mxu0 0.0
  %3443 = vmatprep.subr.mxu0 0.0
  %3444 = vmatpush1.msra.mxu0 0.0
  %3445 = vmatprep.subr.mxu0 0.0
  %3446 = vmatpush1.msra.mxu0 0.0
  %3447 = vmatprep.subr.mxu0 0.0
  %3448 = vmatpush1.msra.mxu0 0.0
  %3449 = vmatprep.subr.mxu0 0.0
  %3450 = vmatpush1.msra.mxu0 0.0
  %3451 = vmatprep.subr.mxu0 0.0
  %3452 = vmatpush1.msra.mxu0 0.0
  %3453 = vmatprep.subr.mxu0 0.0
  %3454 = vmatpush1.msra.mxu0 0.0
  %3455 = vmatprep.subr.mxu0 0.0
  %3456 = vmatpush1.msra.mxu0 0.0
  %3457 = vmatprep.subr.mxu0 0.0
  %3458 = vmatpush1.msra.mxu0 0.0
  %3459 = vmatprep.subr.mxu0 0.0
  %3460 = vmatpush1.msra.mxu0 0.0
  %3461 = vmatprep.subr.mxu0 0.0
  %3462 = vmatpush1.msra.mxu0 0.0
  %3463 = vmatprep.subr.mxu0 0.0
  %3464 = vmatpush1.msra.mxu0 0.0
  %3465 = vmatprep.subr.mxu0 0.0
  %3466 = vmatpush1.msra.mxu0 0.0
  %3467 = vmatprep.subr.mxu0 0.0
  %3468 = vmatpush1.msra.mxu0 0.0
  %3469 = vmatprep.subr.mxu0 0.0
  %3470 = vmatpush1.msra.mxu0 0.0
  %3471 = vmatprep.subr.mxu0 0.0
  %3472 = vmatpush1.msra.mxu0 0.0
  %3473 = vmatprep.subr.mxu0 0.0
  %3474 = vmatpush1.msra.mxu0 0.0
  %3475 = vmatprep.subr.mxu0 0.0
  %3476 = vmatpush1.msra.mxu0 0.0
  %3477 = vmatprep.subr.mxu0 0.0
  %3478 = vmatpush1.msra.mxu0 0.0
  %3479 = vmatprep.subr.mxu0 0.0
  %3480 = vmatpush1.msra.mxu0 0.0
  %3481 = vmatprep.subr.mxu0 0.0
  %3482 = vmatpush1.msra.mxu0 0.0
  %3483 = vmatprep.subr.mxu0 0.0
  %3484 = vmatpush1.msra.mxu0 0.0
  %3485 = vmatprep.subr.mxu0 0.0
  %3486 = vmatpush1.msra.mxu0 0.0
  %3487 = vmatprep.subr.mxu0 0.0
  %3488 = vmatpush1.msra.mxu0 0.0
  %3489 = vmatprep.subr.mxu0 0.0
  %3490 = vmatpush1.msra.mxu0 0.0
  %3491 = vmatprep.subr.mxu0 0.0
  %3492 = vmatpush1.msra.mxu0 0.0
  %3493 = vmatprep.subr.mxu0 0.0
  %3494 = vmatpush1.msra.mxu0 0.0
  %3495 = vmatprep.subr.mxu0 0.0
  %3496 = vmatpush1.msra.mxu0 0.0
  %3497 = vmatprep.subr.mxu0 0.0
  %3498 = vmatpush1.msra.mxu0 0.0
  %3499 = vmatprep.subr.mxu0 0.0
  %3500 = vmatpush1.msra.mxu0 0.0
  %3501 = vmatprep.mubr.f32.mxu0 0.0
  %3502 = vmatmul.mubr.f32.gmra.mrb[0].mxu0 %v3435
  %v3503 = vpop.f32.mrb[0].mxu0
  %v3504 = vadd.f32 %v3189, %v3503
  %v3505 = vpop.f32.mrb[0].mxu0
  %v3506 = vadd.f32 %v3191, %v3505
  %3507 = vdwg.mxu0
  %3508 = vmatprep.subr.mxu0 %v3423
  %3509 = vmatpush1.msra.mxu0 %v3422
  %3510 = vmatprep.subr.mxu0 0.0
  %3511 = vmatpush1.msra.mxu0 0.0
  %3512 = vmatprep.subr.mxu0 0.0
  %3513 = vmatpush1.msra.mxu0 0.0
  %3514 = vmatprep.subr.mxu0 0.0
  %3515 = vmatpush1.msra.mxu0 0.0
  %3516 = vmatprep.subr.mxu0 0.0
  %3517 = vmatpush1.msra.mxu0 0.0
  %3518 = vmatprep.subr.mxu0 0.0
  %3519 = vmatpush1.msra.mxu0 0.0
  %3520 = vmatprep.subr.mxu0 0.0
  %3521 = vmatpush1.msra.mxu0 0.0
  %3522 = vmatprep.subr.mxu0 0.0
  %3523 = vmatpush1.msra.mxu0 0.0
  %3524 = vmatprep.subr.mxu0 0.0
  %3525 = vmatpush1.msra.mxu0 0.0
  %3526 = vmatprep.subr.mxu0 0.0
  %3527 = vmatpush1.msra.mxu0 0.0
  %3528 = vmatprep.subr.mxu0 0.0
  %3529 = vmatpush1.msra.mxu0 0.0
  %3530 = vmatprep.subr.mxu0 0.0
  %3531 = vmatpush1.msra.mxu0 0.0
  %3532 = vmatprep.subr.mxu0 0.0
  %3533 = vmatpush1.msra.mxu0 0.0
  %3534 = vmatprep.subr.mxu0 0.0
  %3535 = vmatpush1.msra.mxu0 0.0
  %3536 = vmatprep.subr.mxu0 0.0
  %3537 = vmatpush1.msra.mxu0 0.0
  %3538 = vmatprep.subr.mxu0 0.0
  %3539 = vmatpush1.msra.mxu0 0.0
  %3540 = vmatprep.subr.mxu0 0.0
  %3541 = vmatpush1.msra.mxu0 0.0
  %3542 = vmatprep.subr.mxu0 0.0
  %3543 = vmatpush1.msra.mxu0 0.0
  %3544 = vmatprep.subr.mxu0 0.0
  %3545 = vmatpush1.msra.mxu0 0.0
  %3546 = vmatprep.subr.mxu0 0.0
  %3547 = vmatpush1.msra.mxu0 0.0
  %3548 = vmatprep.subr.mxu0 0.0
  %3549 = vmatpush1.msra.mxu0 0.0
  %3550 = vmatprep.subr.mxu0 0.0
  %3551 = vmatpush1.msra.mxu0 0.0
  %3552 = vmatprep.subr.mxu0 0.0
  %3553 = vmatpush1.msra.mxu0 0.0
  %3554 = vmatprep.subr.mxu0 0.0
  %3555 = vmatpush1.msra.mxu0 0.0
  %3556 = vmatprep.subr.mxu0 0.0
  %3557 = vmatpush1.msra.mxu0 0.0
  %3558 = vmatprep.subr.mxu0 0.0
  %3559 = vmatpush1.msra.mxu0 0.0
  %3560 = vmatprep.subr.mxu0 0.0
  %3561 = vmatpush1.msra.mxu0 0.0
  %3562 = vmatprep.subr.mxu0 0.0
  %3563 = vmatpush1.msra.mxu0 0.0
  %3564 = vmatprep.subr.mxu0 0.0
  %3565 = vmatpush1.msra.mxu0 0.0
  %3566 = vmatprep.subr.mxu0 0.0
  %3567 = vmatpush1.msra.mxu0 0.0
  %3568 = vmatprep.subr.mxu0 0.0
  %3569 = vmatpush1.msra.mxu0 0.0
  %3570 = vmatprep.subr.mxu0 0.0
  %3571 = vmatpush1.msra.mxu0 0.0
  %3572 = vmatprep.mubr.f32.mxu0 0.0
  %3573 = vmatmul.mubr.f32.gmra.mrb[0].mxu0 %v3435
  %v3574 = vpop.f32.mrb[0].mxu0
  %v3575 = vadd.f32 %v3260, %v3574
  %v3576 = vpop.f32.mrb[0].mxu0
  %3577 = vdwg.mxu0
  %3578 = vmatprep.subr.mxu0 %v3425
  %3579 = vmatpush1.msra.mxu0 %v3424
  %3580 = vmatprep.subr.mxu0 0.0
  %3581 = vmatpush1.msra.mxu0 0.0
  %3582 = vmatprep.subr.mxu0 0.0
  %3583 = vmatpush1.msra.mxu0 0.0
  %3584 = vmatprep.subr.mxu0 0.0
  %3585 = vmatpush1.msra.mxu0 0.0
  %3586 = vmatprep.subr.mxu0 0.0
  %3587 = vmatpush1.msra.mxu0 0.0
  %3588 = vmatprep.subr.mxu0 0.0
  %3589 = vmatpush1.msra.mxu0 0.0
  %3590 = vmatprep.subr.mxu0 0.0
  %3591 = vmatpush1.msra.mxu0 0.0
  %3592 = vmatprep.subr.mxu0 0.0
  %3593 = vmatpush1.msra.mxu0 0.0
  %3594 = vmatprep.subr.mxu0 0.0
  %3595 = vmatpush1.msra.mxu0 0.0
  %3596 = vmatprep.subr.mxu0 0.0
  %3597 = vmatpush1.msra.mxu0 0.0
  %3598 = vmatprep.subr.mxu0 0.0
  %3599 = vmatpush1.msra.mxu0 0.0
  %3600 = vmatprep.subr.mxu0 0.0
  %3601 = vmatpush1.msra.mxu0 0.0
  %3602 = vmatprep.subr.mxu0 0.0
  %3603 = vmatpush1.msra.mxu0 0.0
  %3604 = vmatprep.subr.mxu0 0.0
  %3605 = vmatpush1.msra.mxu0 0.0
  %3606 = vmatprep.subr.mxu0 0.0
  %3607 = vmatpush1.msra.mxu0 0.0
  %3608 = vmatprep.subr.mxu0 0.0
  %3609 = vmatpush1.msra.mxu0 0.0
  %3610 = vmatprep.subr.mxu0 0.0
  %3611 = vmatpush1.msra.mxu0 0.0
  %3612 = vmatprep.subr.mxu0 0.0
  %3613 = vmatpush1.msra.mxu0 0.0
  %3614 = vmatprep.subr.mxu0 0.0
  %3615 = vmatpush1.msra.mxu0 0.0
  %3616 = vmatprep.subr.mxu0 0.0
  %3617 = vmatpush1.msra.mxu0 0.0
  %3618 = vmatprep.subr.mxu0 0.0
  %3619 = vmatpush1.msra.mxu0 0.0
  %3620 = vmatprep.subr.mxu0 0.0
  %3621 = vmatpush1.msra.mxu0 0.0
  %3622 = vmatprep.subr.mxu0 0.0
  %3623 = vmatpush1.msra.mxu0 0.0
  %3624 = vmatprep.subr.mxu0 0.0
  %3625 = vmatpush1.msra.mxu0 0.0
  %3626 = vmatprep.subr.mxu0 0.0
  %3627 = vmatpush1.msra.mxu0 0.0
  %3628 = vmatprep.subr.mxu0 0.0
  %3629 = vmatpush1.msra.mxu0 0.0
  %3630 = vmatprep.subr.mxu0 0.0
  %3631 = vmatpush1.msra.mxu0 0.0
  %3632 = vmatprep.subr.mxu0 0.0
  %3633 = vmatpush1.msra.mxu0 0.0
  %3634 = vmatprep.subr.mxu0 0.0
  %3635 = vmatpush1.msra.mxu0 0.0
  %3636 = vmatprep.subr.mxu0 0.0
  %3637 = vmatpush1.msra.mxu0 0.0
  %3638 = vmatprep.subr.mxu0 0.0
  %3639 = vmatpush1.msra.mxu0 0.0
  %3640 = vmatprep.subr.mxu0 0.0
  %3641 = vmatpush1.msra.mxu0 0.0
  %3642 = vmatprep.mubr.f32.mxu0 0.0
  %3643 = vmatmul.mubr.f32.gmra.mrb[0].mxu0 %v3435
  %v3644 = vpop.f32.mrb[0].mxu0
  %v3645 = vadd.f32 %v3330, %v3644
  %v3646 = vpop.f32.mrb[0].mxu0
  %v3647 = vadd.f32 %v3332, %v3646
  %3648 = vdwg.mxu0
  %3649 = vmatprep.subr.mxu0 0.0
  %3650 = vmatpush1.msra.mxu0 %v3426
  %3651 = vmatprep.subr.mxu0 0.0
  %3652 = vmatpush1.msra.mxu0 0.0
  %3653 = vmatprep.subr.mxu0 0.0
  %3654 = vmatpush1.msra.mxu0 0.0
  %3655 = vmatprep.subr.mxu0 0.0
  %3656 = vmatpush1.msra.mxu0 0.0
  %3657 = vmatprep.subr.mxu0 0.0
  %3658 = vmatpush1.msra.mxu0 0.0
  %3659 = vmatprep.subr.mxu0 0.0
  %3660 = vmatpush1.msra.mxu0 0.0
  %3661 = vmatprep.subr.mxu0 0.0
  %3662 = vmatpush1.msra.mxu0 0.0
  %3663 = vmatprep.subr.mxu0 0.0
  %3664 = vmatpush1.msra.mxu0 0.0
  %3665 = vmatprep.subr.mxu0 0.0
  %3666 = vmatpush1.msra.mxu0 0.0
  %3667 = vmatprep.subr.mxu0 0.0
  %3668 = vmatpush1.msra.mxu0 0.0
  %3669 = vmatprep.subr.mxu0 0.0
  %3670 = vmatpush1.msra.mxu0 0.0
  %3671 = vmatprep.subr.mxu0 0.0
  %3672 = vmatpush1.msra.mxu0 0.0
  %3673 = vmatprep.subr.mxu0 0.0
  %3674 = vmatpush1.msra.mxu0 0.0
  %3675 = vmatprep.subr.mxu0 0.0
  %3676 = vmatpush1.msra.mxu0 0.0
  %3677 = vmatprep.subr.mxu0 0.0
  %3678 = vmatpush1.msra.mxu0 0.0
  %3679 = vmatprep.subr.mxu0 0.0
  %3680 = vmatpush1.msra.mxu0 0.0
  %3681 = vmatprep.subr.mxu0 0.0
  %3682 = vmatpush1.msra.mxu0 0.0
  %3683 = vmatprep.subr.mxu0 0.0
  %3684 = vmatpush1.msra.mxu0 0.0
  %3685 = vmatprep.subr.mxu0 0.0
  %3686 = vmatpush1.msra.mxu0 0.0
  %3687 = vmatprep.subr.mxu0 0.0
  %3688 = vmatpush1.msra.mxu0 0.0
  %3689 = vmatprep.subr.mxu0 0.0
  %3690 = vmatpush1.msra.mxu0 0.0
  %3691 = vmatprep.subr.mxu0 0.0
  %3692 = vmatpush1.msra.mxu0 0.0
  %3693 = vmatprep.subr.mxu0 0.0
  %3694 = vmatpush1.msra.mxu0 0.0
  %3695 = vmatprep.subr.mxu0 0.0
  %3696 = vmatpush1.msra.mxu0 0.0
  %3697 = vmatprep.subr.mxu0 0.0
  %3698 = vmatpush1.msra.mxu0 0.0
  %3699 = vmatprep.subr.mxu0 0.0
  %3700 = vmatpush1.msra.mxu0 0.0
  %3701 = vmatprep.subr.mxu0 0.0
  %3702 = vmatpush1.msra.mxu0 0.0
  %3703 = vmatprep.subr.mxu0 0.0
  %3704 = vmatpush1.msra.mxu0 0.0
  %3705 = vmatprep.subr.mxu0 0.0
  %3706 = vmatpush1.msra.mxu0 0.0
  %3707 = vmatprep.subr.mxu0 0.0
  %3708 = vmatpush1.msra.mxu0 0.0
  %3709 = vmatprep.subr.mxu0 0.0
  %3710 = vmatpush1.msra.mxu0 0.0
  %3711 = vmatprep.subr.mxu0 0.0
  %3712 = vmatpush1.msra.mxu0 0.0
  %3713 = vmatprep.mubr.f32.mxu0 0.0
  %3714 = vmatmul.mubr.f32.gmra.mrb[0].mxu0 %v3435
  %v3715 = vpop.f32.mrb[0].mxu0
  %v3716 = vadd.f32 %v3401, %v3715
  %v3717 = vpop.f32.mrb[0].mxu0
  %3718 = vdwg.mxu0
  %s3719 = scalar_lea.vmem %s3, 16
  %v3720 = vld [vmem:[%s3719] sm:$0xff]
  %3721 = vrot.lane.b32.xlu0 %v3069, 17
  %v3722 = vpop.permute.xlu0 %3721
  %3723 = vrot.lane.b32.xlu0 %v3070, 17
  %v3724 = vpop.permute.xlu0 %3723
  %3725 = vrot.lane.b32.xlu0 %v3071, 17
  %v3726 = vpop.permute.xlu0 %3725
  %3727 = vrot.lane.b32.xlu0 %v3072, 17
  %v3728 = vpop.permute.xlu0 %3727
  %3729 = vrot.lane.b32.xlu0 %v3073, 17
  %v3730 = vpop.permute.xlu0 %3729
  %3731 = vrot.lane.b32.xlu0 %v3074, 17
  %v3732 = vpop.permute.xlu0 %3731
  %3733 = vrot.lane.b32.xlu0 %v3075, 17
  %v3734 = vpop.permute.xlu0 %3733
  %3735 = vrot.lane.b32.xlu0 %v3076, 17
  %v3736 = vpop.permute.xlu0 %3735
  %v3737 = vsel %vm723, %v3722, %v3724
  %v3738 = vsel %vm723, %v3724, %v3726
  %v3739 = vsel %vm723, %v3726, %v3728
  %v3740 = vsel %vm723, %v3728, %v3730
  %v3741 = vsel %vm723, %v3730, %v3732
  %v3742 = vsel %vm723, %v3732, %v3734
  %v3743 = vsel %vm723, %v3734, %v3736
  %v3752 = vsel %vm3118, %v3720, 0
  %3754 = vmatprep.subr.mxu0 %v3738
  %3755 = vmatpush1.msra.mxu0 %v3737
  %3756 = vmatprep.subr.mxu0 0.0
  %3757 = vmatpush1.msra.mxu0 0.0
  %3758 = vmatprep.subr.mxu0 0.0
  %3759 = vmatpush1.msra.mxu0 0.0
  %3760 = vmatprep.subr.mxu0 0.0
  %3761 = vmatpush1.msra.mxu0 0.0
  %3762 = vmatprep.subr.mxu0 0.0
  %3763 = vmatpush1.msra.mxu0 0.0
  %3764 = vmatprep.subr.mxu0 0.0
  %3765 = vmatpush1.msra.mxu0 0.0
  %3766 = vmatprep.subr.mxu0 0.0
  %3767 = vmatpush1.msra.mxu0 0.0
  %3768 = vmatprep.subr.mxu0 0.0
  %3769 = vmatpush1.msra.mxu0 0.0
  %3770 = vmatprep.subr.mxu0 0.0
  %3771 = vmatpush1.msra.mxu0 0.0
  %3772 = vmatprep.subr.mxu0 0.0
  %3773 = vmatpush1.msra.mxu0 0.0
  %3774 = vmatprep.subr.mxu0 0.0
  %3775 = vmatpush1.msra.mxu0 0.0
  %3776 = vmatprep.subr.mxu0 0.0
  %3777 = vmatpush1.msra.mxu0 0.0
  %3778 = vmatprep.subr.mxu0 0.0
  %3779 = vmatpush1.msra.mxu0 0.0
  %3780 = vmatprep.subr.mxu0 0.0
  %3781 = vmatpush1.msra.mxu0 0.0
  %3782 = vmatprep.subr.mxu0 0.0
  %3783 = vmatpush1.msra.mxu0 0.0
  %3784 = vmatprep.subr.mxu0 0.0
  %3785 = vmatpush1.msra.mxu0 0.0
  %3786 = vmatprep.subr.mxu0 0.0
  %3787 = vmatpush1.msra.mxu0 0.0
  %3788 = vmatprep.subr.mxu0 0.0
  %3789 = vmatpush1.msra.mxu0 0.0
  %3790 = vmatprep.subr.mxu0 0.0
  %3791 = vmatpush1.msra.mxu0 0.0
  %3792 = vmatprep.subr.mxu0 0.0
  %3793 = vmatpush1.msra.mxu0 0.0
  %3794 = vmatprep.subr.mxu0 0.0
  %3795 = vmatpush1.msra.mxu0 0.0
  %3796 = vmatprep.subr.mxu0 0.0
  %3797 = vmatpush1.msra.mxu0 0.0
  %3798 = vmatprep.subr.mxu0 0.0
  %3799 = vmatpush1.msra.mxu0 0.0
  %3800 = vmatprep.subr.mxu0 0.0
  %3801 = vmatpush1.msra.mxu0 0.0
  %3802 = vmatprep.subr.mxu0 0.0
  %3803 = vmatpush1.msra.mxu0 0.0
  %3804 = vmatprep.subr.mxu0 0.0
  %3805 = vmatpush1.msra.mxu0 0.0
  %3806 = vmatprep.subr.mxu0 0.0
  %3807 = vmatpush1.msra.mxu0 0.0
  %3808 = vmatprep.subr.mxu0 0.0
  %3809 = vmatpush1.msra.mxu0 0.0
  %3810 = vmatprep.subr.mxu0 0.0
  %3811 = vmatpush1.msra.mxu0 0.0
  %3812 = vmatprep.subr.mxu0 0.0
  %3813 = vmatpush1.msra.mxu0 0.0
  %3814 = vmatprep.subr.mxu0 0.0
  %3815 = vmatpush1.msra.mxu0 0.0
  %3816 = vmatprep.subr.mxu0 0.0
  %3817 = vmatpush1.msra.mxu0 0.0
  %3818 = vmatprep.mubr.f32.mxu0 0.0
  %3819 = vmatmul.mubr.f32.gmra.mrb[0].mxu0 %v3752
  %v3820 = vpop.f32.mrb[0].mxu0
  %v3821 = vadd.f32 0.0, %v3820
  %v3822 = vpop.f32.mrb[0].mxu0
  %v3823 = vadd.f32 0.0, %v3822
  %3824 = vdwg.mxu0
  %3825 = vmatprep.subr.mxu0 %v3740
  %3826 = vmatpush1.msra.mxu0 %v3739
  %3827 = vmatprep.subr.mxu0 0.0
  %3828 = vmatpush1.msra.mxu0 0.0
  %3829 = vmatprep.subr.mxu0 0.0
  %3830 = vmatpush1.msra.mxu0 0.0
  %3831 = vmatprep.subr.mxu0 0.0
  %3832 = vmatpush1.msra.mxu0 0.0
  %3833 = vmatprep.subr.mxu0 0.0
  %3834 = vmatpush1.msra.mxu0 0.0
  %3835 = vmatprep.subr.mxu0 0.0
  %3836 = vmatpush1.msra.mxu0 0.0
  %3837 = vmatprep.subr.mxu0 0.0
  %3838 = vmatpush1.msra.mxu0 0.0
  %3839 = vmatprep.subr.mxu0 0.0
  %3840 = vmatpush1.msra.mxu0 0.0
  %3841 = vmatprep.subr.mxu0 0.0
  %3842 = vmatpush1.msra.mxu0 0.0
  %3843 = vmatprep.subr.mxu0 0.0
  %3844 = vmatpush1.msra.mxu0 0.0
  %3845 = vmatprep.subr.mxu0 0.0
  %3846 = vmatpush1.msra.mxu0 0.0
  %3847 = vmatprep.subr.mxu0 0.0
  %3848 = vmatpush1.msra.mxu0 0.0
  %3849 = vmatprep.subr.mxu0 0.0
  %3850 = vmatpush1.msra.mxu0 0.0
  %3851 = vmatprep.subr.mxu0 0.0
  %3852 = vmatpush1.msra.mxu0 0.0
  %3853 = vmatprep.subr.mxu0 0.0
  %3854 = vmatpush1.msra.mxu0 0.0
  %3855 = vmatprep.subr.mxu0 0.0
  %3856 = vmatpush1.msra.mxu0 0.0
  %3857 = vmatprep.subr.mxu0 0.0
  %3858 = vmatpush1.msra.mxu0 0.0
  %3859 = vmatprep.subr.mxu0 0.0
  %3860 = vmatpush1.msra.mxu0 0.0
  %3861 = vmatprep.subr.mxu0 0.0
  %3862 = vmatpush1.msra.mxu0 0.0
  %3863 = vmatprep.subr.mxu0 0.0
  %3864 = vmatpush1.msra.mxu0 0.0
  %3865 = vmatprep.subr.mxu0 0.0
  %3866 = vmatpush1.msra.mxu0 0.0
  %3867 = vmatprep.subr.mxu0 0.0
  %3868 = vmatpush1.msra.mxu0 0.0
  %3869 = vmatprep.subr.mxu0 0.0
  %3870 = vmatpush1.msra.mxu0 0.0
  %3871 = vmatprep.subr.mxu0 0.0
  %3872 = vmatpush1.msra.mxu0 0.0
  %3873 = vmatprep.subr.mxu0 0.0
  %3874 = vmatpush1.msra.mxu0 0.0
  %3875 = vmatprep.subr.mxu0 0.0
  %3876 = vmatpush1.msra.mxu0 0.0
  %3877 = vmatprep.subr.mxu0 0.0
  %3878 = vmatpush1.msra.mxu0 0.0
  %3879 = vmatprep.subr.mxu0 0.0
  %3880 = vmatpush1.msra.mxu0 0.0
  %3881 = vmatprep.subr.mxu0 0.0
  %3882 = vmatpush1.msra.mxu0 0.0
  %3883 = vmatprep.subr.mxu0 0.0
  %3884 = vmatpush1.msra.mxu0 0.0
  %3885 = vmatprep.subr.mxu0 0.0
  %3886 = vmatpush1.msra.mxu0 0.0
  %3887 = vmatprep.subr.mxu0 0.0
  %3888 = vmatpush1.msra.mxu0 0.0
  %3889 = vmatprep.mubr.f32.mxu0 0.0
  %3890 = vmatmul.mubr.f32.gmra.mrb[0].mxu0 %v3752
  %v3891 = vpop.f32.mrb[0].mxu0
  %v3892 = vadd.f32 0.0, %v3891
  %v3893 = vpop.f32.mrb[0].mxu0
  %3894 = vdwg.mxu0
  %3895 = vmatprep.subr.mxu0 %v3742
  %3896 = vmatpush1.msra.mxu0 %v3741
  %3897 = vmatprep.subr.mxu0 0.0
  %3898 = vmatpush1.msra.mxu0 0.0
  %3899 = vmatprep.subr.mxu0 0.0
  %3900 = vmatpush1.msra.mxu0 0.0
  %3901 = vmatprep.subr.mxu0 0.0
  %3902 = vmatpush1.msra.mxu0 0.0
  %3903 = vmatprep.subr.mxu0 0.0
  %3904 = vmatpush1.msra.mxu0 0.0
  %3905 = vmatprep.subr.mxu0 0.0
  %3906 = vmatpush1.msra.mxu0 0.0
  %3907 = vmatprep.subr.mxu0 0.0
  %3908 = vmatpush1.msra.mxu0 0.0
  %3909 = vmatprep.subr.mxu0 0.0
  %3910 = vmatpush1.msra.mxu0 0.0
  %3911 = vmatprep.subr.mxu0 0.0
  %3912 = vmatpush1.msra.mxu0 0.0
  %3913 = vmatprep.subr.mxu0 0.0
  %3914 = vmatpush1.msra.mxu0 0.0
  %3915 = vmatprep.subr.mxu0 0.0
  %3916 = vmatpush1.msra.mxu0 0.0
  %3917 = vmatprep.subr.mxu0 0.0
  %3918 = vmatpush1.msra.mxu0 0.0
  %3919 = vmatprep.subr.mxu0 0.0
  %3920 = vmatpush1.msra.mxu0 0.0
  %3921 = vmatprep.subr.mxu0 0.0
  %3922 = vmatpush1.msra.mxu0 0.0
  %3923 = vmatprep.subr.mxu0 0.0
  %3924 = vmatpush1.msra.mxu0 0.0
  %3925 = vmatprep.subr.mxu0 0.0
  %3926 = vmatpush1.msra.mxu0 0.0
  %3927 = vmatprep.subr.mxu0 0.0
  %3928 = vmatpush1.msra.mxu0 0.0
  %3929 = vmatprep.subr.mxu0 0.0
  %3930 = vmatpush1.msra.mxu0 0.0
  %3931 = vmatprep.subr.mxu0 0.0
  %3932 = vmatpush1.msra.mxu0 0.0
  %3933 = vmatprep.subr.mxu0 0.0
  %3934 = vmatpush1.msra.mxu0 0.0
  %3935 = vmatprep.subr.mxu0 0.0
  %3936 = vmatpush1.msra.mxu0 0.0
  %3937 = vmatprep.subr.mxu0 0.0
  %3938 = vmatpush1.msra.mxu0 0.0
  %3939 = vmatprep.subr.mxu0 0.0
  %3940 = vmatpush1.msra.mxu0 0.0
  %3941 = vmatprep.subr.mxu0 0.0
  %3942 = vmatpush1.msra.mxu0 0.0
  %3943 = vmatprep.subr.mxu0 0.0
  %3944 = vmatpush1.msra.mxu0 0.0
  %3945 = vmatprep.subr.mxu0 0.0
  %3946 = vmatpush1.msra.mxu0 0.0
  %3947 = vmatprep.subr.mxu0 0.0
  %3948 = vmatpush1.msra.mxu0 0.0
  %3949 = vmatprep.subr.mxu0 0.0
  %3950 = vmatpush1.msra.mxu0 0.0
  %3951 = vmatprep.subr.mxu0 0.0
  %3952 = vmatpush1.msra.mxu0 0.0
  %3953 = vmatprep.subr.mxu0 0.0
  %3954 = vmatpush1.msra.mxu0 0.0
  %3955 = vmatprep.subr.mxu0 0.0
  %3956 = vmatpush1.msra.mxu0 0.0
  %3957 = vmatprep.subr.mxu0 0.0
  %3958 = vmatpush1.msra.mxu0 0.0
  %3959 = vmatprep.mubr.f32.mxu0 0.0
  %3960 = vmatmul.mubr.f32.gmra.mrb[0].mxu0 %v3752
  %v3961 = vpop.f32.mrb[0].mxu0
  %v3962 = vadd.f32 0.0, %v3961
  %v3963 = vpop.f32.mrb[0].mxu0
  %v3964 = vadd.f32 0.0, %v3963
  %3965 = vdwg.mxu0
  %3966 = vmatprep.subr.mxu0 0.0
  %3967 = vmatpush1.msra.mxu0 %v3743
  %3968 = vmatprep.subr.mxu0 0.0
  %3969 = vmatpush1.msra.mxu0 0.0
  %3970 = vmatprep.subr.mxu0 0.0
  %3971 = vmatpush1.msra.mxu0 0.0
  %3972 = vmatprep.subr.mxu0 0.0
  %3973 = vmatpush1.msra.mxu0 0.0
  %3974 = vmatprep.subr.mxu0 0.0
  %3975 = vmatpush1.msra.mxu0 0.0
  %3976 = vmatprep.subr.mxu0 0.0
  %3977 = vmatpush1.msra.mxu0 0.0
  %3978 = vmatprep.subr.mxu0 0.0
  %3979 = vmatpush1.msra.mxu0 0.0
  %3980 = vmatprep.subr.mxu0 0.0
  %3981 = vmatpush1.msra.mxu0 0.0
  %3982 = vmatprep.subr.mxu0 0.0
  %3983 = vmatpush1.msra.mxu0 0.0
  %3984 = vmatprep.subr.mxu0 0.0
  %3985 = vmatpush1.msra.mxu0 0.0
  %3986 = vmatprep.subr.mxu0 0.0
  %3987 = vmatpush1.msra.mxu0 0.0
  %3988 = vmatprep.subr.mxu0 0.0
  %3989 = vmatpush1.msra.mxu0 0.0
  %3990 = vmatprep.subr.mxu0 0.0
  %3991 = vmatpush1.msra.mxu0 0.0
  %3992 = vmatprep.subr.mxu0 0.0
  %3993 = vmatpush1.msra.mxu0 0.0
  %3994 = vmatprep.subr.mxu0 0.0
  %3995 = vmatpush1.msra.mxu0 0.0
  %3996 = vmatprep.subr.mxu0 0.0
  %3997 = vmatpush1.msra.mxu0 0.0
  %3998 = vmatprep.subr.mxu0 0.0
  %3999 = vmatpush1.msra.mxu0 0.0
  %4000 = vmatprep.subr.mxu0 0.0
  %4001 = vmatpush1.msra.mxu0 0.0
  %4002 = vmatprep.subr.mxu0 0.0
  %4003 = vmatpush1.msra.mxu0 0.0
  %4004 = vmatprep.subr.mxu0 0.0
  %4005 = vmatpush1.msra.mxu0 0.0
  %4006 = vmatprep.subr.mxu0 0.0
  %4007 = vmatpush1.msra.mxu0 0.0
  %4008 = vmatprep.subr.mxu0 0.0
  %4009 = vmatpush1.msra.mxu0 0.0
  %4010 = vmatprep.subr.mxu0 0.0
  %4011 = vmatpush1.msra.mxu0 0.0
  %4012 = vmatprep.subr.mxu0 0.0
  %4013 = vmatpush1.msra.mxu0 0.0
  %4014 = vmatprep.subr.mxu0 0.0
  %4015 = vmatpush1.msra.mxu0 0.0
  %4016 = vmatprep.subr.mxu0 0.0
  %4017 = vmatpush1.msra.mxu0 0.0
  %4018 = vmatprep.subr.mxu0 0.0
  %4019 = vmatpush1.msra.mxu0 0.0
  %4020 = vmatprep.subr.mxu0 0.0
  %4021 = vmatpush1.msra.mxu0 0.0
  %4022 = vmatprep.subr.mxu0 0.0
  %4023 = vmatpush1.msra.mxu0 0.0
  %4024 = vmatprep.subr.mxu0 0.0
  %4025 = vmatpush1.msra.mxu0 0.0
  %4026 = vmatprep.subr.mxu0 0.0
  %4027 = vmatpush1.msra.mxu0 0.0
  %4028 = vmatprep.subr.mxu0 0.0
  %4029 = vmatpush1.msra.mxu0 0.0
  %4030 = vmatprep.mubr.f32.mxu0 0.0
  %4031 = vmatmul.mubr.f32.gmra.mrb[0].mxu0 %v3752
  %v4032 = vpop.f32.mrb[0].mxu0
  %v4033 = vadd.f32 0.0, %v4032
  %v4034 = vpop.f32.mrb[0].mxu0
  %4035 = vdwg.mxu0
  %v4036 = vadd.f32 %v3504, %v3821
  %v4037 = vadd.f32 %v3506, %v3823
  %v4038 = vadd.f32 %v3575, %v3892
  %v4039 = vadd.f32 %v3645, %v3962
  %v4040 = vadd.f32 %v3647, %v3964
  %v4041 = vadd.f32 %v3716, %v4033
  %s4042 = scalar_lea.vmem %s3, 24
  %v4043 = vld [vmem:[%s4042] sm:$0xff]
  %4044 = vrot.lane.b32.xlu0 %v3069, 1
  %v4045 = vpop.permute.xlu0 %4044
  %4046 = vrot.lane.b32.xlu0 %v3070, 1
  %v4047 = vpop.permute.xlu0 %4046
  %4048 = vrot.lane.b32.xlu0 %v3071, 1
  %v4049 = vpop.permute.xlu0 %4048
  %4050 = vrot.lane.b32.xlu0 %v3072, 1
  %v4051 = vpop.permute.xlu0 %4050
  %4052 = vrot.lane.b32.xlu0 %v3073, 1
  %v4053 = vpop.permute.xlu0 %4052
  %4054 = vrot.lane.b32.xlu0 %v3074, 1
  %v4055 = vpop.permute.xlu0 %4054
  %4056 = vrot.lane.b32.xlu0 %v3075, 1
  %v4057 = vpop.permute.xlu0 %4056
  %4058 = vrot.lane.b32.xlu0 %v3076, 1
  %v4059 = vpop.permute.xlu0 %4058
  %v4060 = vsel %vm1054, %v4045, %v4047
  %v4061 = vsel %vm1054, %v4047, %v4049
  %v4062 = vsel %vm1054, %v4049, %v4051
  %v4063 = vsel %vm1054, %v4051, %v4053
  %v4064 = vsel %vm1054, %v4053, %v4055
  %v4065 = vsel %vm1054, %v4055, %v4057
  %v4066 = vsel %vm1054, %v4057, %v4059
  %v4075 = vsel %vm3118, %v4043, 0
  %4077 = vmatprep.subr.mxu0 %v4061
  %4078 = vmatpush1.msra.mxu0 %v4060
  %4079 = vmatprep.subr.mxu0 0.0
  %4080 = vmatpush1.msra.mxu0 0.0
  %4081 = vmatprep.subr.mxu0 0.0
  %4082 = vmatpush1.msra.mxu0 0.0
  %4083 = vmatprep.subr.mxu0 0.0
  %4084 = vmatpush1.msra.mxu0 0.0
  %4085 = vmatprep.subr.mxu0 0.0
  %4086 = vmatpush1.msra.mxu0 0.0
  %4087 = vmatprep.subr.mxu0 0.0
  %4088 = vmatpush1.msra.mxu0 0.0
  %4089 = vmatprep.subr.mxu0 0.0
  %4090 = vmatpush1.msra.mxu0 0.0
  %4091 = vmatprep.subr.mxu0 0.0
  %4092 = vmatpush1.msra.mxu0 0.0
  %4093 = vmatprep.subr.mxu0 0.0
  %4094 = vmatpush1.msra.mxu0 0.0
  %4095 = vmatprep.subr.mxu0 0.0
  %4096 = vmatpush1.msra.mxu0 0.0
  %4097 = vmatprep.subr.mxu0 0.0
  %4098 = vmatpush1.msra.mxu0 0.0
  %4099 = vmatprep.subr.mxu0 0.0
  %4100 = vmatpush1.msra.mxu0 0.0
  %4101 = vmatprep.subr.mxu0 0.0
  %4102 = vmatpush1.msra.mxu0 0.0
  %4103 = vmatprep.subr.mxu0 0.0
  %4104 = vmatpush1.msra.mxu0 0.0
  %4105 = vmatprep.subr.mxu0 0.0
  %4106 = vmatpush1.msra.mxu0 0.0
  %4107 = vmatprep.subr.mxu0 0.0
  %4108 = vmatpush1.msra.mxu0 0.0
  %4109 = vmatprep.subr.mxu0 0.0
  %4110 = vmatpush1.msra.mxu0 0.0
  %4111 = vmatprep.subr.mxu0 0.0
  %4112 = vmatpush1.msra.mxu0 0.0
  %4113 = vmatprep.subr.mxu0 0.0
  %4114 = vmatpush1.msra.mxu0 0.0
  %4115 = vmatprep.subr.mxu0 0.0
  %4116 = vmatpush1.msra.mxu0 0.0
  %4117 = vmatprep.subr.mxu0 0.0
  %4118 = vmatpush1.msra.mxu0 0.0
  %4119 = vmatprep.subr.mxu0 0.0
  %4120 = vmatpush1.msra.mxu0 0.0
  %4121 = vmatprep.subr.mxu0 0.0
  %4122 = vmatpush1.msra.mxu0 0.0
  %4123 = vmatprep.subr.mxu0 0.0
  %4124 = vmatpush1.msra.mxu0 0.0
  %4125 = vmatprep.subr.mxu0 0.0
  %4126 = vmatpush1.msra.mxu0 0.0
  %4127 = vmatprep.subr.mxu0 0.0
  %4128 = vmatpush1.msra.mxu0 0.0
  %4129 = vmatprep.subr.mxu0 0.0
  %4130 = vmatpush1.msra.mxu0 0.0
  %4131 = vmatprep.subr.mxu0 0.0
  %4132 = vmatpush1.msra.mxu0 0.0
  %4133 = vmatprep.subr.mxu0 0.0
  %4134 = vmatpush1.msra.mxu0 0.0
  %4135 = vmatprep.subr.mxu0 0.0
  %4136 = vmatpush1.msra.mxu0 0.0
  %4137 = vmatprep.subr.mxu0 0.0
  %4138 = vmatpush1.msra.mxu0 0.0
  %4139 = vmatprep.subr.mxu0 0.0
  %4140 = vmatpush1.msra.mxu0 0.0
  %4141 = vmatprep.mubr.f32.mxu0 0.0
  %4142 = vmatmul.mubr.f32.gmra.mrb[0].mxu0 %v4075
  %v4143 = vpop.f32.mrb[0].mxu0
  %v4144 = vadd.f32 0.0, %v4143
  %v4145 = vpop.f32.mrb[0].mxu0
  %v4146 = vadd.f32 0.0, %v4145
  %4147 = vdwg.mxu0
  %4148 = vmatprep.subr.mxu0 %v4063
  %4149 = vmatpush1.msra.mxu0 %v4062
  %4150 = vmatprep.subr.mxu0 0.0
  %4151 = vmatpush1.msra.mxu0 0.0
  %4152 = vmatprep.subr.mxu0 0.0
  %4153 = vmatpush1.msra.mxu0 0.0
  %4154 = vmatprep.subr.mxu0 0.0
  %4155 = vmatpush1.msra.mxu0 0.0
  %4156 = vmatprep.subr.mxu0 0.0
  %4157 = vmatpush1.msra.mxu0 0.0
  %4158 = vmatprep.subr.mxu0 0.0
  %4159 = vmatpush1.msra.mxu0 0.0
  %4160 = vmatprep.subr.mxu0 0.0
  %4161 = vmatpush1.msra.mxu0 0.0
  %4162 = vmatprep.subr.mxu0 0.0
  %4163 = vmatpush1.msra.mxu0 0.0
  %4164 = vmatprep.subr.mxu0 0.0
  %4165 = vmatpush1.msra.mxu0 0.0
  %4166 = vmatprep.subr.mxu0 0.0
  %4167 = vmatpush1.msra.mxu0 0.0
  %4168 = vmatprep.subr.mxu0 0.0
  %4169 = vmatpush1.msra.mxu0 0.0
  %4170 = vmatprep.subr.mxu0 0.0
  %4171 = vmatpush1.msra.mxu0 0.0
  %4172 = vmatprep.subr.mxu0 0.0
  %4173 = vmatpush1.msra.mxu0 0.0
  %4174 = vmatprep.subr.mxu0 0.0
  %4175 = vmatpush1.msra.mxu0 0.0
  %4176 = vmatprep.subr.mxu0 0.0
  %4177 = vmatpush1.msra.mxu0 0.0
  %4178 = vmatprep.subr.mxu0 0.0
  %4179 = vmatpush1.msra.mxu0 0.0
  %4180 = vmatprep.subr.mxu0 0.0
  %4181 = vmatpush1.msra.mxu0 0.0
  %4182 = vmatprep.subr.mxu0 0.0
  %4183 = vmatpush1.msra.mxu0 0.0
  %4184 = vmatprep.subr.mxu0 0.0
  %4185 = vmatpush1.msra.mxu0 0.0
  %4186 = vmatprep.subr.mxu0 0.0
  %4187 = vmatpush1.msra.mxu0 0.0
  %4188 = vmatprep.subr.mxu0 0.0
  %4189 = vmatpush1.msra.mxu0 0.0
  %4190 = vmatprep.subr.mxu0 0.0
  %4191 = vmatpush1.msra.mxu0 0.0
  %4192 = vmatprep.subr.mxu0 0.0
  %4193 = vmatpush1.msra.mxu0 0.0
  %4194 = vmatprep.subr.mxu0 0.0
  %4195 = vmatpush1.msra.mxu0 0.0
  %4196 = vmatprep.subr.mxu0 0.0
  %4197 = vmatpush1.msra.mxu0 0.0
  %4198 = vmatprep.subr.mxu0 0.0
  %4199 = vmatpush1.msra.mxu0 0.0
  %4200 = vmatprep.subr.mxu0 0.0
  %4201 = vmatpush1.msra.mxu0 0.0
  %4202 = vmatprep.subr.mxu0 0.0
  %4203 = vmatpush1.msra.mxu0 0.0
  %4204 = vmatprep.subr.mxu0 0.0
  %4205 = vmatpush1.msra.mxu0 0.0
  %4206 = vmatprep.subr.mxu0 0.0
  %4207 = vmatpush1.msra.mxu0 0.0
  %4208 = vmatprep.subr.mxu0 0.0
  %4209 = vmatpush1.msra.mxu0 0.0
  %4210 = vmatprep.subr.mxu0 0.0
  %4211 = vmatpush1.msra.mxu0 0.0
  %4212 = vmatprep.mubr.f32.mxu0 0.0
  %4213 = vmatmul.mubr.f32.gmra.mrb[0].mxu0 %v4075
  %v4214 = vpop.f32.mrb[0].mxu0
  %v4215 = vadd.f32 0.0, %v4214
  %v4216 = vpop.f32.mrb[0].mxu0
  %4217 = vdwg.mxu0
  %4218 = vmatprep.subr.mxu0 %v4065
  %4219 = vmatpush1.msra.mxu0 %v4064
  %4220 = vmatprep.subr.mxu0 0.0
  %4221 = vmatpush1.msra.mxu0 0.0
  %4222 = vmatprep.subr.mxu0 0.0
  %4223 = vmatpush1.msra.mxu0 0.0
  %4224 = vmatprep.subr.mxu0 0.0
  %4225 = vmatpush1.msra.mxu0 0.0
  %4226 = vmatprep.subr.mxu0 0.0
  %4227 = vmatpush1.msra.mxu0 0.0
  %4228 = vmatprep.subr.mxu0 0.0
  %4229 = vmatpush1.msra.mxu0 0.0
  %4230 = vmatprep.subr.mxu0 0.0
  %4231 = vmatpush1.msra.mxu0 0.0
  %4232 = vmatprep.subr.mxu0 0.0
  %4233 = vmatpush1.msra.mxu0 0.0
  %4234 = vmatprep.subr.mxu0 0.0
  %4235 = vmatpush1.msra.mxu0 0.0
  %4236 = vmatprep.subr.mxu0 0.0
  %4237 = vmatpush1.msra.mxu0 0.0
  %4238 = vmatprep.subr.mxu0 0.0
  %4239 = vmatpush1.msra.mxu0 0.0
  %4240 = vmatprep.subr.mxu0 0.0
  %4241 = vmatpush1.msra.mxu0 0.0
  %4242 = vmatprep.subr.mxu0 0.0
  %4243 = vmatpush1.msra.mxu0 0.0
  %4244 = vmatprep.subr.mxu0 0.0
  %4245 = vmatpush1.msra.mxu0 0.0
  %4246 = vmatprep.subr.mxu0 0.0
  %4247 = vmatpush1.msra.mxu0 0.0
  %4248 = vmatprep.subr.mxu0 0.0
  %4249 = vmatpush1.msra.mxu0 0.0
  %4250 = vmatprep.subr.mxu0 0.0
  %4251 = vmatpush1.msra.mxu0 0.0
  %4252 = vmatprep.subr.mxu0 0.0
  %4253 = vmatpush1.msra.mxu0 0.0
  %4254 = vmatprep.subr.mxu0 0.0
  %4255 = vmatpush1.msra.mxu0 0.0
  %4256 = vmatprep.subr.mxu0 0.0
  %4257 = vmatpush1.msra.mxu0 0.0
  %4258 = vmatprep.subr.mxu0 0.0
  %4259 = vmatpush1.msra.mxu0 0.0
  %4260 = vmatprep.subr.mxu0 0.0
  %4261 = vmatpush1.msra.mxu0 0.0
  %4262 = vmatprep.subr.mxu0 0.0
  %4263 = vmatpush1.msra.mxu0 0.0
  %4264 = vmatprep.subr.mxu0 0.0
  %4265 = vmatpush1.msra.mxu0 0.0
  %4266 = vmatprep.subr.mxu0 0.0
  %4267 = vmatpush1.msra.mxu0 0.0
  %4268 = vmatprep.subr.mxu0 0.0
  %4269 = vmatpush1.msra.mxu0 0.0
  %4270 = vmatprep.subr.mxu0 0.0
  %4271 = vmatpush1.msra.mxu0 0.0
  %4272 = vmatprep.subr.mxu0 0.0
  %4273 = vmatpush1.msra.mxu0 0.0
  %4274 = vmatprep.subr.mxu0 0.0
  %4275 = vmatpush1.msra.mxu0 0.0
  %4276 = vmatprep.subr.mxu0 0.0
  %4277 = vmatpush1.msra.mxu0 0.0
  %4278 = vmatprep.subr.mxu0 0.0
  %4279 = vmatpush1.msra.mxu0 0.0
  %4280 = vmatprep.subr.mxu0 0.0
  %4281 = vmatpush1.msra.mxu0 0.0
  %4282 = vmatprep.mubr.f32.mxu0 0.0
  %4283 = vmatmul.mubr.f32.gmra.mrb[0].mxu0 %v4075
  %v4284 = vpop.f32.mrb[0].mxu0
  %v4285 = vadd.f32 0.0, %v4284
  %v4286 = vpop.f32.mrb[0].mxu0
  %v4287 = vadd.f32 0.0, %v4286
  %4288 = vdwg.mxu0
  %4289 = vmatprep.subr.mxu0 0.0
  %4290 = vmatpush1.msra.mxu0 %v4066
  %4291 = vmatprep.subr.mxu0 0.0
  %4292 = vmatpush1.msra.mxu0 0.0
  %4293 = vmatprep.subr.mxu0 0.0
  %4294 = vmatpush1.msra.mxu0 0.0
  %4295 = vmatprep.subr.mxu0 0.0
  %4296 = vmatpush1.msra.mxu0 0.0
  %4297 = vmatprep.subr.mxu0 0.0
  %4298 = vmatpush1.msra.mxu0 0.0
  %4299 = vmatprep.subr.mxu0 0.0
  %4300 = vmatpush1.msra.mxu0 0.0
  %4301 = vmatprep.subr.mxu0 0.0
  %4302 = vmatpush1.msra.mxu0 0.0
  %4303 = vmatprep.subr.mxu0 0.0
  %4304 = vmatpush1.msra.mxu0 0.0
  %4305 = vmatprep.subr.mxu0 0.0
  %4306 = vmatpush1.msra.mxu0 0.0
  %4307 = vmatprep.subr.mxu0 0.0
  %4308 = vmatpush1.msra.mxu0 0.0
  %4309 = vmatprep.subr.mxu0 0.0
  %4310 = vmatpush1.msra.mxu0 0.0
  %4311 = vmatprep.subr.mxu0 0.0
  %4312 = vmatpush1.msra.mxu0 0.0
  %4313 = vmatprep.subr.mxu0 0.0
  %4314 = vmatpush1.msra.mxu0 0.0
  %4315 = vmatprep.subr.mxu0 0.0
  %4316 = vmatpush1.msra.mxu0 0.0
  %4317 = vmatprep.subr.mxu0 0.0
  %4318 = vmatpush1.msra.mxu0 0.0
  %4319 = vmatprep.subr.mxu0 0.0
  %4320 = vmatpush1.msra.mxu0 0.0
  %4321 = vmatprep.subr.mxu0 0.0
  %4322 = vmatpush1.msra.mxu0 0.0
  %4323 = vmatprep.subr.mxu0 0.0
  %4324 = vmatpush1.msra.mxu0 0.0
  %4325 = vmatprep.subr.mxu0 0.0
  %4326 = vmatpush1.msra.mxu0 0.0
  %4327 = vmatprep.subr.mxu0 0.0
  %4328 = vmatpush1.msra.mxu0 0.0
  %4329 = vmatprep.subr.mxu0 0.0
  %4330 = vmatpush1.msra.mxu0 0.0
  %4331 = vmatprep.subr.mxu0 0.0
  %4332 = vmatpush1.msra.mxu0 0.0
  %4333 = vmatprep.subr.mxu0 0.0
  %4334 = vmatpush1.msra.mxu0 0.0
  %4335 = vmatprep.subr.mxu0 0.0
  %4336 = vmatpush1.msra.mxu0 0.0
  %4337 = vmatprep.subr.mxu0 0.0
  %4338 = vmatpush1.msra.mxu0 0.0
  %4339 = vmatprep.subr.mxu0 0.0
  %4340 = vmatpush1.msra.mxu0 0.0
  %4341 = vmatprep.subr.mxu0 0.0
  %4342 = vmatpush1.msra.mxu0 0.0
  %4343 = vmatprep.subr.mxu0 0.0
  %4344 = vmatpush1.msra.mxu0 0.0
  %4345 = vmatprep.subr.mxu0 0.0
  %4346 = vmatpush1.msra.mxu0 0.0
  %4347 = vmatprep.subr.mxu0 0.0
  %4348 = vmatpush1.msra.mxu0 0.0
  %4349 = vmatprep.subr.mxu0 0.0
  %4350 = vmatpush1.msra.mxu0 0.0
  %4351 = vmatprep.subr.mxu0 0.0
  %4352 = vmatpush1.msra.mxu0 0.0
  %4353 = vmatprep.mubr.f32.mxu0 0.0
  %4354 = vmatmul.mubr.f32.gmra.mrb[0].mxu0 %v4075
  %v4355 = vpop.f32.mrb[0].mxu0
  %v4356 = vadd.f32 0.0, %v4355
  %v4357 = vpop.f32.mrb[0].mxu0
  %4358 = vdwg.mxu0
  %v4359 = vadd.f32 %v4036, %v4144
  %v4360 = vadd.f32 %v4037, %v4146
  %v4361 = vadd.f32 %v4038, %v4215
  %v4362 = vadd.f32 %v4039, %v4285
  %v4363 = vadd.f32 %v4040, %v4287
  %v4364 = vadd.f32 %v4041, %v4356
  %s4365 = scalar_lea.vmem %s3, 32
  %v4366 = vld [vmem:[%s4365] sm:$0xff]
  %v4368 = vsel %vm3118, %v4366, 0
  %4370 = vmatprep.subr.mxu0 %v3071
  %4371 = vmatpush1.msra.mxu0 %v3070
  %4372 = vmatprep.subr.mxu0 0.0
  %4373 = vmatpush1.msra.mxu0 0.0
  %4374 = vmatprep.subr.mxu0 0.0
  %4375 = vmatpush1.msra.mxu0 0.0
  %4376 = vmatprep.subr.mxu0 0.0
  %4377 = vmatpush1.msra.mxu0 0.0
  %4378 = vmatprep.subr.mxu0 0.0
  %4379 = vmatpush1.msra.mxu0 0.0
  %4380 = vmatprep.subr.mxu0 0.0
  %4381 = vmatpush1.msra.mxu0 0.0
  %4382 = vmatprep.subr.mxu0 0.0
  %4383 = vmatpush1.msra.mxu0 0.0
  %4384 = vmatprep.subr.mxu0 0.0
  %4385 = vmatpush1.msra.mxu0 0.0
  %4386 = vmatprep.subr.mxu0 0.0
  %4387 = vmatpush1.msra.mxu0 0.0
  %4388 = vmatprep.subr.mxu0 0.0
  %4389 = vmatpush1.msra.mxu0 0.0
  %4390 = vmatprep.subr.mxu0 0.0
  %4391 = vmatpush1.msra.mxu0 0.0
  %4392 = vmatprep.subr.mxu0 0.0
  %4393 = vmatpush1.msra.mxu0 0.0
  %4394 = vmatprep.subr.mxu0 0.0
  %4395 = vmatpush1.msra.mxu0 0.0
  %4396 = vmatprep.subr.mxu0 0.0
  %4397 = vmatpush1.msra.mxu0 0.0
  %4398 = vmatprep.subr.mxu0 0.0
  %4399 = vmatpush1.msra.mxu0 0.0
  %4400 = vmatprep.subr.mxu0 0.0
  %4401 = vmatpush1.msra.mxu0 0.0
  %4402 = vmatprep.subr.mxu0 0.0
  %4403 = vmatpush1.msra.mxu0 0.0
  %4404 = vmatprep.subr.mxu0 0.0
  %4405 = vmatpush1.msra.mxu0 0.0
  %4406 = vmatprep.subr.mxu0 0.0
  %4407 = vmatpush1.msra.mxu0 0.0
  %4408 = vmatprep.subr.mxu0 0.0
  %4409 = vmatpush1.msra.mxu0 0.0
  %4410 = vmatprep.subr.mxu0 0.0
  %4411 = vmatpush1.msra.mxu0 0.0
  %4412 = vmatprep.subr.mxu0 0.0
  %4413 = vmatpush1.msra.mxu0 0.0
  %4414 = vmatprep.subr.mxu0 0.0
  %4415 = vmatpush1.msra.mxu0 0.0
  %4416 = vmatprep.subr.mxu0 0.0
  %4417 = vmatpush1.msra.mxu0 0.0
  %4418 = vmatprep.subr.mxu0 0.0
  %4419 = vmatpush1.msra.mxu0 0.0
  %4420 = vmatprep.subr.mxu0 0.0
  %4421 = vmatpush1.msra.mxu0 0.0
  %4422 = vmatprep.subr.mxu0 0.0
  %4423 = vmatpush1.msra.mxu0 0.0
  %4424 = vmatprep.subr.mxu0 0.0
  %4425 = vmatpush1.msra.mxu0 0.0
  %4426 = vmatprep.subr.mxu0 0.0
  %4427 = vmatpush1.msra.mxu0 0.0
  %4428 = vmatprep.subr.mxu0 0.0
  %4429 = vmatpush1.msra.mxu0 0.0
  %4430 = vmatprep.subr.mxu0 0.0
  %4431 = vmatpush1.msra.mxu0 0.0
  %4432 = vmatprep.subr.mxu0 0.0
  %4433 = vmatpush1.msra.mxu0 0.0
  %4434 = vmatprep.mubr.f32.mxu0 0.0
  %4435 = vmatmul.mubr.f32.gmra.mrb[0].mxu0 %v4368
  %v4436 = vpop.f32.mrb[0].mxu0
  %v4437 = vadd.f32 0.0, %v4436
  %v4438 = vpop.f32.mrb[0].mxu0
  %v4439 = vadd.f32 0.0, %v4438
  %4440 = vdwg.mxu0
  %4441 = vmatprep.subr.mxu0 %v3073
  %4442 = vmatpush1.msra.mxu0 %v3072
  %4443 = vmatprep.subr.mxu0 0.0
  %4444 = vmatpush1.msra.mxu0 0.0
  %4445 = vmatprep.subr.mxu0 0.0
  %4446 = vmatpush1.msra.mxu0 0.0
  %4447 = vmatprep.subr.mxu0 0.0
  %4448 = vmatpush1.msra.mxu0 0.0
  %4449 = vmatprep.subr.mxu0 0.0
  %4450 = vmatpush1.msra.mxu0 0.0
  %4451 = vmatprep.subr.mxu0 0.0
  %4452 = vmatpush1.msra.mxu0 0.0
  %4453 = vmatprep.subr.mxu0 0.0
  %4454 = vmatpush1.msra.mxu0 0.0
  %4455 = vmatprep.subr.mxu0 0.0
  %4456 = vmatpush1.msra.mxu0 0.0
  %4457 = vmatprep.subr.mxu0 0.0
  %4458 = vmatpush1.msra.mxu0 0.0
  %4459 = vmatprep.subr.mxu0 0.0
  %4460 = vmatpush1.msra.mxu0 0.0
  %4461 = vmatprep.subr.mxu0 0.0
  %4462 = vmatpush1.msra.mxu0 0.0
  %4463 = vmatprep.subr.mxu0 0.0
  %4464 = vmatpush1.msra.mxu0 0.0
  %4465 = vmatprep.subr.mxu0 0.0
  %4466 = vmatpush1.msra.mxu0 0.0
  %4467 = vmatprep.subr.mxu0 0.0
  %4468 = vmatpush1.msra.mxu0 0.0
  %4469 = vmatprep.subr.mxu0 0.0
  %4470 = vmatpush1.msra.mxu0 0.0
  %4471 = vmatprep.subr.mxu0 0.0
  %4472 = vmatpush1.msra.mxu0 0.0
  %4473 = vmatprep.subr.mxu0 0.0
  %4474 = vmatpush1.msra.mxu0 0.0
  %4475 = vmatprep.subr.mxu0 0.0
  %4476 = vmatpush1.msra.mxu0 0.0
  %4477 = vmatprep.subr.mxu0 0.0
  %4478 = vmatpush1.msra.mxu0 0.0
  %4479 = vmatprep.subr.mxu0 0.0
  %4480 = vmatpush1.msra.mxu0 0.0
  %4481 = vmatprep.subr.mxu0 0.0
  %4482 = vmatpush1.msra.mxu0 0.0
  %4483 = vmatprep.subr.mxu0 0.0
  %4484 = vmatpush1.msra.mxu0 0.0
  %4485 = vmatprep.subr.mxu0 0.0
  %4486 = vmatpush1.msra.mxu0 0.0
  %4487 = vmatprep.subr.mxu0 0.0
  %4488 = vmatpush1.msra.mxu0 0.0
  %4489 = vmatprep.subr.mxu0 0.0
  %4490 = vmatpush1.msra.mxu0 0.0
  %4491 = vmatprep.subr.mxu0 0.0
  %4492 = vmatpush1.msra.mxu0 0.0
  %4493 = vmatprep.subr.mxu0 0.0
  %4494 = vmatpush1.msra.mxu0 0.0
  %4495 = vmatprep.subr.mxu0 0.0
  %4496 = vmatpush1.msra.mxu0 0.0
  %4497 = vmatprep.subr.mxu0 0.0
  %4498 = vmatpush1.msra.mxu0 0.0
  %4499 = vmatprep.subr.mxu0 0.0
  %4500 = vmatpush1.msra.mxu0 0.0
  %4501 = vmatprep.subr.mxu0 0.0
  %4502 = vmatpush1.msra.mxu0 0.0
  %4503 = vmatprep.subr.mxu0 0.0
  %4504 = vmatpush1.msra.mxu0 0.0
  %4505 = vmatprep.mubr.f32.mxu0 0.0
  %4506 = vmatmul.mubr.f32.gmra.mrb[0].mxu0 %v4368
  %v4507 = vpop.f32.mrb[0].mxu0
  %v4508 = vadd.f32 0.0, %v4507
  %v4509 = vpop.f32.mrb[0].mxu0
  %4510 = vdwg.mxu0
  %4511 = vmatprep.subr.mxu0 %v3075
  %4512 = vmatpush1.msra.mxu0 %v3074
  %4513 = vmatprep.subr.mxu0 0.0
  %4514 = vmatpush1.msra.mxu0 0.0
  %4515 = vmatprep.subr.mxu0 0.0
  %4516 = vmatpush1.msra.mxu0 0.0
  %4517 = vmatprep.subr.mxu0 0.0
  %4518 = vmatpush1.msra.mxu0 0.0
  %4519 = vmatprep.subr.mxu0 0.0
  %4520 = vmatpush1.msra.mxu0 0.0
  %4521 = vmatprep.subr.mxu0 0.0
  %4522 = vmatpush1.msra.mxu0 0.0
  %4523 = vmatprep.subr.mxu0 0.0
  %4524 = vmatpush1.msra.mxu0 0.0
  %4525 = vmatprep.subr.mxu0 0.0
  %4526 = vmatpush1.msra.mxu0 0.0
  %4527 = vmatprep.subr.mxu0 0.0
  %4528 = vmatpush1.msra.mxu0 0.0
  %4529 = vmatprep.subr.mxu0 0.0
  %4530 = vmatpush1.msra.mxu0 0.0
  %4531 = vmatprep.subr.mxu0 0.0
  %4532 = vmatpush1.msra.mxu0 0.0
  %4533 = vmatprep.subr.mxu0 0.0
  %4534 = vmatpush1.msra.mxu0 0.0
  %4535 = vmatprep.subr.mxu0 0.0
  %4536 = vmatpush1.msra.mxu0 0.0
  %4537 = vmatprep.subr.mxu0 0.0
  %4538 = vmatpush1.msra.mxu0 0.0
  %4539 = vmatprep.subr.mxu0 0.0
  %4540 = vmatpush1.msra.mxu0 0.0
  %4541 = vmatprep.subr.mxu0 0.0
  %4542 = vmatpush1.msra.mxu0 0.0
  %4543 = vmatprep.subr.mxu0 0.0
  %4544 = vmatpush1.msra.mxu0 0.0
  %4545 = vmatprep.subr.mxu0 0.0
  %4546 = vmatpush1.msra.mxu0 0.0
  %4547 = vmatprep.subr.mxu0 0.0
  %4548 = vmatpush1.msra.mxu0 0.0
  %4549 = vmatprep.subr.mxu0 0.0
  %4550 = vmatpush1.msra.mxu0 0.0
  %4551 = vmatprep.subr.mxu0 0.0
  %4552 = vmatpush1.msra.mxu0 0.0
  %4553 = vmatprep.subr.mxu0 0.0
  %4554 = vmatpush1.msra.mxu0 0.0
  %4555 = vmatprep.subr.mxu0 0.0
  %4556 = vmatpush1.msra.mxu0 0.0
  %4557 = vmatprep.subr.mxu0 0.0
  %4558 = vmatpush1.msra.mxu0 0.0
  %4559 = vmatprep.subr.mxu0 0.0
  %4560 = vmatpush1.msra.mxu0 0.0
  %4561 = vmatprep.subr.mxu0 0.0
  %4562 = vmatpush1.msra.mxu0 0.0
  %4563 = vmatprep.subr.mxu0 0.0
  %4564 = vmatpush1.msra.mxu0 0.0
  %4565 = vmatprep.subr.mxu0 0.0
  %4566 = vmatpush1.msra.mxu0 0.0
  %4567 = vmatprep.subr.mxu0 0.0
  %4568 = vmatpush1.msra.mxu0 0.0
  %4569 = vmatprep.subr.mxu0 0.0
  %4570 = vmatpush1.msra.mxu0 0.0
  %4571 = vmatprep.subr.mxu0 0.0
  %4572 = vmatpush1.msra.mxu0 0.0
  %4573 = vmatprep.subr.mxu0 0.0
  %4574 = vmatpush1.msra.mxu0 0.0
  %4575 = vmatprep.mubr.f32.mxu0 0.0
  %4576 = vmatmul.mubr.f32.gmra.mrb[0].mxu0 %v4368
  %v4577 = vpop.f32.mrb[0].mxu0
  %v4578 = vadd.f32 0.0, %v4577
  %v4579 = vpop.f32.mrb[0].mxu0
  %v4580 = vadd.f32 0.0, %v4579
  %4581 = vdwg.mxu0
  %4582 = vmatprep.subr.mxu0 0.0
  %4583 = vmatpush1.msra.mxu0 %v3076
  %4584 = vmatprep.subr.mxu0 0.0
  %4585 = vmatpush1.msra.mxu0 0.0
  %4586 = vmatprep.subr.mxu0 0.0
  %4587 = vmatpush1.msra.mxu0 0.0
  %4588 = vmatprep.subr.mxu0 0.0
  %4589 = vmatpush1.msra.mxu0 0.0
  %4590 = vmatprep.subr.mxu0 0.0
  %4591 = vmatpush1.msra.mxu0 0.0
  %4592 = vmatprep.subr.mxu0 0.0
  %4593 = vmatpush1.msra.mxu0 0.0
  %4594 = vmatprep.subr.mxu0 0.0
  %4595 = vmatpush1.msra.mxu0 0.0
  %4596 = vmatprep.subr.mxu0 0.0
  %4597 = vmatpush1.msra.mxu0 0.0
  %4598 = vmatprep.subr.mxu0 0.0
  %4599 = vmatpush1.msra.mxu0 0.0
  %4600 = vmatprep.subr.mxu0 0.0
  %4601 = vmatpush1.msra.mxu0 0.0
  %4602 = vmatprep.subr.mxu0 0.0
  %4603 = vmatpush1.msra.mxu0 0.0
  %4604 = vmatprep.subr.mxu0 0.0
  %4605 = vmatpush1.msra.mxu0 0.0
  %4606 = vmatprep.subr.mxu0 0.0
  %4607 = vmatpush1.msra.mxu0 0.0
  %4608 = vmatprep.subr.mxu0 0.0
  %4609 = vmatpush1.msra.mxu0 0.0
  %4610 = vmatprep.subr.mxu0 0.0
  %4611 = vmatpush1.msra.mxu0 0.0
  %4612 = vmatprep.subr.mxu0 0.0
  %4613 = vmatpush1.msra.mxu0 0.0
  %4614 = vmatprep.subr.mxu0 0.0
  %4615 = vmatpush1.msra.mxu0 0.0
  %4616 = vmatprep.subr.mxu0 0.0
  %4617 = vmatpush1.msra.mxu0 0.0
  %4618 = vmatprep.subr.mxu0 0.0
  %4619 = vmatpush1.msra.mxu0 0.0
  %4620 = vmatprep.subr.mxu0 0.0
  %4621 = vmatpush1.msra.mxu0 0.0
  %4622 = vmatprep.subr.mxu0 0.0
  %4623 = vmatpush1.msra.mxu0 0.0
  %4624 = vmatprep.subr.mxu0 0.0
  %4625 = vmatpush1.msra.mxu0 0.0
  %4626 = vmatprep.subr.mxu0 0.0
  %4627 = vmatpush1.msra.mxu0 0.0
  %4628 = vmatprep.subr.mxu0 0.0
  %4629 = vmatpush1.msra.mxu0 0.0
  %4630 = vmatprep.subr.mxu0 0.0
  %4631 = vmatpush1.msra.mxu0 0.0
  %4632 = vmatprep.subr.mxu0 0.0
  %4633 = vmatpush1.msra.mxu0 0.0
  %4634 = vmatprep.subr.mxu0 0.0
  %4635 = vmatpush1.msra.mxu0 0.0
  %4636 = vmatprep.subr.mxu0 0.0
  %4637 = vmatpush1.msra.mxu0 0.0
  %4638 = vmatprep.subr.mxu0 0.0
  %4639 = vmatpush1.msra.mxu0 0.0
  %4640 = vmatprep.subr.mxu0 0.0
  %4641 = vmatpush1.msra.mxu0 0.0
  %4642 = vmatprep.subr.mxu0 0.0
  %4643 = vmatpush1.msra.mxu0 0.0
  %4644 = vmatprep.subr.mxu0 0.0
  %4645 = vmatpush1.msra.mxu0 0.0
  %4646 = vmatprep.mubr.f32.mxu0 0.0
  %4647 = vmatmul.mubr.f32.gmra.mrb[0].mxu0 %v4368
  %v4648 = vpop.f32.mrb[0].mxu0
  %v4649 = vadd.f32 0.0, %v4648
  %v4650 = vpop.f32.mrb[0].mxu0
  %4651 = vdwg.mxu0
  %v4652 = vadd.f32 %v4359, %v4437
  %v4653 = vadd.f32 %v4360, %v4439
  %v4654 = vadd.f32 %v4361, %v4508
  %v4655 = vadd.f32 %v4362, %v4578
  %v4656 = vadd.f32 %v4363, %v4580
  %v4657 = vadd.f32 %v4364, %v4649
  %s4658 = scalar_lea.vmem %s3, 40
  %v4659 = vld [vmem:[%s4658] sm:$0xff]
  %4660 = vrot.lane.b32.xlu0 %v3070, 127
  %v4661 = vpop.permute.xlu0 %4660
  %4662 = vrot.lane.b32.xlu0 %v3071, 127
  %v4663 = vpop.permute.xlu0 %4662
  %4664 = vrot.lane.b32.xlu0 %v3072, 127
  %v4665 = vpop.permute.xlu0 %4664
  %4666 = vrot.lane.b32.xlu0 %v3073, 127
  %v4667 = vpop.permute.xlu0 %4666
  %4668 = vrot.lane.b32.xlu0 %v3074, 127
  %v4669 = vpop.permute.xlu0 %4668
  %4670 = vrot.lane.b32.xlu0 %v3075, 127
  %v4671 = vpop.permute.xlu0 %4670
  %4672 = vrot.lane.b32.xlu0 %v3076, 127
  %v4673 = vpop.permute.xlu0 %4672
  %v4674 = vsel %vm1690, %v4661, %v4663
  %v4675 = vsel %vm1690, %v4663, %v4665
  %v4676 = vsel %vm1690, %v4665, %v4667
  %v4677 = vsel %vm1690, %v4667, %v4669
  %v4678 = vsel %vm1690, %v4669, %v4671
  %v4679 = vsel %vm1690, %v4671, %v4673
  %v4688 = vsel %vm3118, %v4659, 0
  %4690 = vmatprep.subr.mxu0 %v4675
  %4691 = vmatpush1.msra.mxu0 %v4674
  %4692 = vmatprep.subr.mxu0 0.0
  %4693 = vmatpush1.msra.mxu0 0.0
  %4694 = vmatprep.subr.mxu0 0.0
  %4695 = vmatpush1.msra.mxu0 0.0
  %4696 = vmatprep.subr.mxu0 0.0
  %4697 = vmatpush1.msra.mxu0 0.0
  %4698 = vmatprep.subr.mxu0 0.0
  %4699 = vmatpush1.msra.mxu0 0.0
  %4700 = vmatprep.subr.mxu0 0.0
  %4701 = vmatpush1.msra.mxu0 0.0
  %4702 = vmatprep.subr.mxu0 0.0
  %4703 = vmatpush1.msra.mxu0 0.0
  %4704 = vmatprep.subr.mxu0 0.0
  %4705 = vmatpush1.msra.mxu0 0.0
  %4706 = vmatprep.subr.mxu0 0.0
  %4707 = vmatpush1.msra.mxu0 0.0
  %4708 = vmatprep.subr.mxu0 0.0
  %4709 = vmatpush1.msra.mxu0 0.0
  %4710 = vmatprep.subr.mxu0 0.0
  %4711 = vmatpush1.msra.mxu0 0.0
  %4712 = vmatprep.subr.mxu0 0.0
  %4713 = vmatpush1.msra.mxu0 0.0
  %4714 = vmatprep.subr.mxu0 0.0
  %4715 = vmatpush1.msra.mxu0 0.0
  %4716 = vmatprep.subr.mxu0 0.0
  %4717 = vmatpush1.msra.mxu0 0.0
  %4718 = vmatprep.subr.mxu0 0.0
  %4719 = vmatpush1.msra.mxu0 0.0
  %4720 = vmatprep.subr.mxu0 0.0
  %4721 = vmatpush1.msra.mxu0 0.0
  %4722 = vmatprep.subr.mxu0 0.0
  %4723 = vmatpush1.msra.mxu0 0.0
  %4724 = vmatprep.subr.mxu0 0.0
  %4725 = vmatpush1.msra.mxu0 0.0
  %4726 = vmatprep.subr.mxu0 0.0
  %4727 = vmatpush1.msra.mxu0 0.0
  %4728 = vmatprep.subr.mxu0 0.0
  %4729 = vmatpush1.msra.mxu0 0.0
  %4730 = vmatprep.subr.mxu0 0.0
  %4731 = vmatpush1.msra.mxu0 0.0
  %4732 = vmatprep.subr.mxu0 0.0
  %4733 = vmatpush1.msra.mxu0 0.0
  %4734 = vmatprep.subr.mxu0 0.0
  %4735 = vmatpush1.msra.mxu0 0.0
  %4736 = vmatprep.subr.mxu0 0.0
  %4737 = vmatpush1.msra.mxu0 0.0
  %4738 = vmatprep.subr.mxu0 0.0
  %4739 = vmatpush1.msra.mxu0 0.0
  %4740 = vmatprep.subr.mxu0 0.0
  %4741 = vmatpush1.msra.mxu0 0.0
  %4742 = vmatprep.subr.mxu0 0.0
  %4743 = vmatpush1.msra.mxu0 0.0
  %4744 = vmatprep.subr.mxu0 0.0
  %4745 = vmatpush1.msra.mxu0 0.0
  %4746 = vmatprep.subr.mxu0 0.0
  %4747 = vmatpush1.msra.mxu0 0.0
  %4748 = vmatprep.subr.mxu0 0.0
  %4749 = vmatpush1.msra.mxu0 0.0
  %4750 = vmatprep.subr.mxu0 0.0
  %4751 = vmatpush1.msra.mxu0 0.0
  %4752 = vmatprep.subr.mxu0 0.0
  %4753 = vmatpush1.msra.mxu0 0.0
  %4754 = vmatprep.mubr.f32.mxu0 0.0
  %4755 = vmatmul.mubr.f32.gmra.mrb[0].mxu0 %v4688
  %v4756 = vpop.f32.mrb[0].mxu0
  %v4757 = vadd.f32 0.0, %v4756
  %v4758 = vpop.f32.mrb[0].mxu0
  %v4759 = vadd.f32 0.0, %v4758
  %4760 = vdwg.mxu0
  %4761 = vmatprep.subr.mxu0 %v4677
  %4762 = vmatpush1.msra.mxu0 %v4676
  %4763 = vmatprep.subr.mxu0 0.0
  %4764 = vmatpush1.msra.mxu0 0.0
  %4765 = vmatprep.subr.mxu0 0.0
  %4766 = vmatpush1.msra.mxu0 0.0
  %4767 = vmatprep.subr.mxu0 0.0
  %4768 = vmatpush1.msra.mxu0 0.0
  %4769 = vmatprep.subr.mxu0 0.0
  %4770 = vmatpush1.msra.mxu0 0.0
  %4771 = vmatprep.subr.mxu0 0.0
  %4772 = vmatpush1.msra.mxu0 0.0
  %4773 = vmatprep.subr.mxu0 0.0
  %4774 = vmatpush1.msra.mxu0 0.0
  %4775 = vmatprep.subr.mxu0 0.0
  %4776 = vmatpush1.msra.mxu0 0.0
  %4777 = vmatprep.subr.mxu0 0.0
  %4778 = vmatpush1.msra.mxu0 0.0
  %4779 = vmatprep.subr.mxu0 0.0
  %4780 = vmatpush1.msra.mxu0 0.0
  %4781 = vmatprep.subr.mxu0 0.0
  %4782 = vmatpush1.msra.mxu0 0.0
  %4783 = vmatprep.subr.mxu0 0.0
  %4784 = vmatpush1.msra.mxu0 0.0
  %4785 = vmatprep.subr.mxu0 0.0
  %4786 = vmatpush1.msra.mxu0 0.0
  %4787 = vmatprep.subr.mxu0 0.0
  %4788 = vmatpush1.msra.mxu0 0.0
  %4789 = vmatprep.subr.mxu0 0.0
  %4790 = vmatpush1.msra.mxu0 0.0
  %4791 = vmatprep.subr.mxu0 0.0
  %4792 = vmatpush1.msra.mxu0 0.0
  %4793 = vmatprep.subr.mxu0 0.0
  %4794 = vmatpush1.msra.mxu0 0.0
  %4795 = vmatprep.subr.mxu0 0.0
  %4796 = vmatpush1.msra.mxu0 0.0
  %4797 = vmatprep.subr.mxu0 0.0
  %4798 = vmatpush1.msra.mxu0 0.0
  %4799 = vmatprep.subr.mxu0 0.0
  %4800 = vmatpush1.msra.mxu0 0.0
  %4801 = vmatprep.subr.mxu0 0.0
  %4802 = vmatpush1.msra.mxu0 0.0
  %4803 = vmatprep.subr.mxu0 0.0
  %4804 = vmatpush1.msra.mxu0 0.0
  %4805 = vmatprep.subr.mxu0 0.0
  %4806 = vmatpush1.msra.mxu0 0.0
  %4807 = vmatprep.subr.mxu0 0.0
  %4808 = vmatpush1.msra.mxu0 0.0
  %4809 = vmatprep.subr.mxu0 0.0
  %4810 = vmatpush1.msra.mxu0 0.0
  %4811 = vmatprep.subr.mxu0 0.0
  %4812 = vmatpush1.msra.mxu0 0.0
  %4813 = vmatprep.subr.mxu0 0.0
  %4814 = vmatpush1.msra.mxu0 0.0
  %4815 = vmatprep.subr.mxu0 0.0
  %4816 = vmatpush1.msra.mxu0 0.0
  %4817 = vmatprep.subr.mxu0 0.0
  %4818 = vmatpush1.msra.mxu0 0.0
  %4819 = vmatprep.subr.mxu0 0.0
  %4820 = vmatpush1.msra.mxu0 0.0
  %4821 = vmatprep.subr.mxu0 0.0
  %4822 = vmatpush1.msra.mxu0 0.0
  %4823 = vmatprep.subr.mxu0 0.0
  %4824 = vmatpush1.msra.mxu0 0.0
  %4825 = vmatprep.mubr.f32.mxu0 0.0
  %4826 = vmatmul.mubr.f32.gmra.mrb[0].mxu0 %v4688
  %v4827 = vpop.f32.mrb[0].mxu0
  %v4828 = vadd.f32 0.0, %v4827
  %v4829 = vpop.f32.mrb[0].mxu0
  %4830 = vdwg.mxu0
  %4831 = vmatprep.subr.mxu0 %v4679
  %4832 = vmatpush1.msra.mxu0 %v4678
  %4833 = vmatprep.subr.mxu0 0.0
  %4834 = vmatpush1.msra.mxu0 0.0
  %4835 = vmatprep.subr.mxu0 0.0
  %4836 = vmatpush1.msra.mxu0 0.0
  %4837 = vmatprep.subr.mxu0 0.0
  %4838 = vmatpush1.msra.mxu0 0.0
  %4839 = vmatprep.subr.mxu0 0.0
  %4840 = vmatpush1.msra.mxu0 0.0
  %4841 = vmatprep.subr.mxu0 0.0
  %4842 = vmatpush1.msra.mxu0 0.0
  %4843 = vmatprep.subr.mxu0 0.0
  %4844 = vmatpush1.msra.mxu0 0.0
  %4845 = vmatprep.subr.mxu0 0.0
  %4846 = vmatpush1.msra.mxu0 0.0
  %4847 = vmatprep.subr.mxu0 0.0
  %4848 = vmatpush1.msra.mxu0 0.0
  %4849 = vmatprep.subr.mxu0 0.0
  %4850 = vmatpush1.msra.mxu0 0.0
  %4851 = vmatprep.subr.mxu0 0.0
  %4852 = vmatpush1.msra.mxu0 0.0
  %4853 = vmatprep.subr.mxu0 0.0
  %4854 = vmatpush1.msra.mxu0 0.0
  %4855 = vmatprep.subr.mxu0 0.0
  %4856 = vmatpush1.msra.mxu0 0.0
  %4857 = vmatprep.subr.mxu0 0.0
  %4858 = vmatpush1.msra.mxu0 0.0
  %4859 = vmatprep.subr.mxu0 0.0
  %4860 = vmatpush1.msra.mxu0 0.0
  %4861 = vmatprep.subr.mxu0 0.0
  %4862 = vmatpush1.msra.mxu0 0.0
  %4863 = vmatprep.subr.mxu0 0.0
  %4864 = vmatpush1.msra.mxu0 0.0
  %4865 = vmatprep.subr.mxu0 0.0
  %4866 = vmatpush1.msra.mxu0 0.0
  %4867 = vmatprep.subr.mxu0 0.0
  %4868 = vmatpush1.msra.mxu0 0.0
  %4869 = vmatprep.subr.mxu0 0.0
  %4870 = vmatpush1.msra.mxu0 0.0
  %4871 = vmatprep.subr.mxu0 0.0
  %4872 = vmatpush1.msra.mxu0 0.0
  %4873 = vmatprep.subr.mxu0 0.0
  %4874 = vmatpush1.msra.mxu0 0.0
  %4875 = vmatprep.subr.mxu0 0.0
  %4876 = vmatpush1.msra.mxu0 0.0
  %4877 = vmatprep.subr.mxu0 0.0
  %4878 = vmatpush1.msra.mxu0 0.0
  %4879 = vmatprep.subr.mxu0 0.0
  %4880 = vmatpush1.msra.mxu0 0.0
  %4881 = vmatprep.subr.mxu0 0.0
  %4882 = vmatpush1.msra.mxu0 0.0
  %4883 = vmatprep.subr.mxu0 0.0
  %4884 = vmatpush1.msra.mxu0 0.0
  %4885 = vmatprep.subr.mxu0 0.0
  %4886 = vmatpush1.msra.mxu0 0.0
  %4887 = vmatprep.subr.mxu0 0.0
  %4888 = vmatpush1.msra.mxu0 0.0
  %4889 = vmatprep.subr.mxu0 0.0
  %4890 = vmatpush1.msra.mxu0 0.0
  %4891 = vmatprep.subr.mxu0 0.0
  %4892 = vmatpush1.msra.mxu0 0.0
  %4893 = vmatprep.subr.mxu0 0.0
  %4894 = vmatpush1.msra.mxu0 0.0
  %4895 = vmatprep.mubr.f32.mxu0 0.0
  %4896 = vmatmul.mubr.f32.gmra.mrb[0].mxu0 %v4688
  %v4897 = vpop.f32.mrb[0].mxu0
  %v4898 = vadd.f32 0.0, %v4897
  %v4899 = vpop.f32.mrb[0].mxu0
  %v4900 = vadd.f32 0.0, %v4899
  %4901 = vdwg.mxu0
  %4902 = vmatprep.subr.mxu0 0.0
  %4903 = vmatpush1.msra.mxu0 %v4673
  %4904 = vmatprep.subr.mxu0 0.0
  %4905 = vmatpush1.msra.mxu0 0.0
  %4906 = vmatprep.subr.mxu0 0.0
  %4907 = vmatpush1.msra.mxu0 0.0
  %4908 = vmatprep.subr.mxu0 0.0
  %4909 = vmatpush1.msra.mxu0 0.0
  %4910 = vmatprep.subr.mxu0 0.0
  %4911 = vmatpush1.msra.mxu0 0.0
  %4912 = vmatprep.subr.mxu0 0.0
  %4913 = vmatpush1.msra.mxu0 0.0
  %4914 = vmatprep.subr.mxu0 0.0
  %4915 = vmatpush1.msra.mxu0 0.0
  %4916 = vmatprep.subr.mxu0 0.0
  %4917 = vmatpush1.msra.mxu0 0.0
  %4918 = vmatprep.subr.mxu0 0.0
  %4919 = vmatpush1.msra.mxu0 0.0
  %4920 = vmatprep.subr.mxu0 0.0
  %4921 = vmatpush1.msra.mxu0 0.0
  %4922 = vmatprep.subr.mxu0 0.0
  %4923 = vmatpush1.msra.mxu0 0.0
  %4924 = vmatprep.subr.mxu0 0.0
  %4925 = vmatpush1.msra.mxu0 0.0
  %4926 = vmatprep.subr.mxu0 0.0
  %4927 = vmatpush1.msra.mxu0 0.0
  %4928 = vmatprep.subr.mxu0 0.0
  %4929 = vmatpush1.msra.mxu0 0.0
  %4930 = vmatprep.subr.mxu0 0.0
  %4931 = vmatpush1.msra.mxu0 0.0
  %4932 = vmatprep.subr.mxu0 0.0
  %4933 = vmatpush1.msra.mxu0 0.0
  %4934 = vmatprep.subr.mxu0 0.0
  %4935 = vmatpush1.msra.mxu0 0.0
  %4936 = vmatprep.subr.mxu0 0.0
  %4937 = vmatpush1.msra.mxu0 0.0
  %4938 = vmatprep.subr.mxu0 0.0
  %4939 = vmatpush1.msra.mxu0 0.0
  %4940 = vmatprep.subr.mxu0 0.0
  %4941 = vmatpush1.msra.mxu0 0.0
  %4942 = vmatprep.subr.mxu0 0.0
  %4943 = vmatpush1.msra.mxu0 0.0
  %4944 = vmatprep.subr.mxu0 0.0
  %4945 = vmatpush1.msra.mxu0 0.0
  %4946 = vmatprep.subr.mxu0 0.0
  %4947 = vmatpush1.msra.mxu0 0.0
  %4948 = vmatprep.subr.mxu0 0.0
  %4949 = vmatpush1.msra.mxu0 0.0
  %4950 = vmatprep.subr.mxu0 0.0
  %4951 = vmatpush1.msra.mxu0 0.0
  %4952 = vmatprep.subr.mxu0 0.0
  %4953 = vmatpush1.msra.mxu0 0.0
  %4954 = vmatprep.subr.mxu0 0.0
  %4955 = vmatpush1.msra.mxu0 0.0
  %4956 = vmatprep.subr.mxu0 0.0
  %4957 = vmatpush1.msra.mxu0 0.0
  %4958 = vmatprep.subr.mxu0 0.0
  %4959 = vmatpush1.msra.mxu0 0.0
  %4960 = vmatprep.subr.mxu0 0.0
  %4961 = vmatpush1.msra.mxu0 0.0
  %4962 = vmatprep.subr.mxu0 0.0
  %4963 = vmatpush1.msra.mxu0 0.0
  %4964 = vmatprep.subr.mxu0 0.0
  %4965 = vmatpush1.msra.mxu0 0.0
  %4966 = vmatprep.mubr.f32.mxu0 0.0
  %4967 = vmatmul.mubr.f32.gmra.mrb[0].mxu0 %v4688
  %v4968 = vpop.f32.mrb[0].mxu0
  %v4969 = vadd.f32 0.0, %v4968
  %v4970 = vpop.f32.mrb[0].mxu0
  %4971 = vdwg.mxu0
  %v4972 = vadd.f32 %v4652, %v4757
  %v4973 = vadd.f32 %v4653, %v4759
  %v4974 = vadd.f32 %v4654, %v4828
  %v4975 = vadd.f32 %v4655, %v4898
  %v4976 = vadd.f32 %v4656, %v4900
  %v4977 = vadd.f32 %v4657, %v4969
  %s4978 = scalar_lea.vmem %s3, 48
  %v4979 = vld [vmem:[%s4978] sm:$0xff]
  %4980 = vrot.lane.b32.xlu0 %v3070, 111
  %v4981 = vpop.permute.xlu0 %4980
  %4982 = vrot.lane.b32.xlu0 %v3071, 111
  %v4983 = vpop.permute.xlu0 %4982
  %4984 = vrot.lane.b32.xlu0 %v3072, 111
  %v4985 = vpop.permute.xlu0 %4984
  %4986 = vrot.lane.b32.xlu0 %v3073, 111
  %v4987 = vpop.permute.xlu0 %4986
  %4988 = vrot.lane.b32.xlu0 %v3074, 111
  %v4989 = vpop.permute.xlu0 %4988
  %4990 = vrot.lane.b32.xlu0 %v3075, 111
  %v4991 = vpop.permute.xlu0 %4990
  %4992 = vrot.lane.b32.xlu0 %v3076, 111
  %v4993 = vpop.permute.xlu0 %4992
  %v4994 = vsel %vm2018, %v4981, %v4983
  %v4995 = vsel %vm2018, %v4983, %v4985
  %v4996 = vsel %vm2018, %v4985, %v4987
  %v4997 = vsel %vm2018, %v4987, %v4989
  %v4998 = vsel %vm2018, %v4989, %v4991
  %v4999 = vsel %vm2018, %v4991, %v4993
  %v5008 = vsel %vm3118, %v4979, 0
  %5010 = vmatprep.subr.mxu0 %v4995
  %5011 = vmatpush1.msra.mxu0 %v4994
  %5012 = vmatprep.subr.mxu0 0.0
  %5013 = vmatpush1.msra.mxu0 0.0
  %5014 = vmatprep.subr.mxu0 0.0
  %5015 = vmatpush1.msra.mxu0 0.0
  %5016 = vmatprep.subr.mxu0 0.0
  %5017 = vmatpush1.msra.mxu0 0.0
  %5018 = vmatprep.subr.mxu0 0.0
  %5019 = vmatpush1.msra.mxu0 0.0
  %5020 = vmatprep.subr.mxu0 0.0
  %5021 = vmatpush1.msra.mxu0 0.0
  %5022 = vmatprep.subr.mxu0 0.0
  %5023 = vmatpush1.msra.mxu0 0.0
  %5024 = vmatprep.subr.mxu0 0.0
  %5025 = vmatpush1.msra.mxu0 0.0
  %5026 = vmatprep.subr.mxu0 0.0
  %5027 = vmatpush1.msra.mxu0 0.0
  %5028 = vmatprep.subr.mxu0 0.0
  %5029 = vmatpush1.msra.mxu0 0.0
  %5030 = vmatprep.subr.mxu0 0.0
  %5031 = vmatpush1.msra.mxu0 0.0
  %5032 = vmatprep.subr.mxu0 0.0
  %5033 = vmatpush1.msra.mxu0 0.0
  %5034 = vmatprep.subr.mxu0 0.0
  %5035 = vmatpush1.msra.mxu0 0.0
  %5036 = vmatprep.subr.mxu0 0.0
  %5037 = vmatpush1.msra.mxu0 0.0
  %5038 = vmatprep.subr.mxu0 0.0
  %5039 = vmatpush1.msra.mxu0 0.0
  %5040 = vmatprep.subr.mxu0 0.0
  %5041 = vmatpush1.msra.mxu0 0.0
  %5042 = vmatprep.subr.mxu0 0.0
  %5043 = vmatpush1.msra.mxu0 0.0
  %5044 = vmatprep.subr.mxu0 0.0
  %5045 = vmatpush1.msra.mxu0 0.0
  %5046 = vmatprep.subr.mxu0 0.0
  %5047 = vmatpush1.msra.mxu0 0.0
  %5048 = vmatprep.subr.mxu0 0.0
  %5049 = vmatpush1.msra.mxu0 0.0
  %5050 = vmatprep.subr.mxu0 0.0
  %5051 = vmatpush1.msra.mxu0 0.0
  %5052 = vmatprep.subr.mxu0 0.0
  %5053 = vmatpush1.msra.mxu0 0.0
  %5054 = vmatprep.subr.mxu0 0.0
  %5055 = vmatpush1.msra.mxu0 0.0
  %5056 = vmatprep.subr.mxu0 0.0
  %5057 = vmatpush1.msra.mxu0 0.0
  %5058 = vmatprep.subr.mxu0 0.0
  %5059 = vmatpush1.msra.mxu0 0.0
  %5060 = vmatprep.subr.mxu0 0.0
  %5061 = vmatpush1.msra.mxu0 0.0
  %5062 = vmatprep.subr.mxu0 0.0
  %5063 = vmatpush1.msra.mxu0 0.0
  %5064 = vmatprep.subr.mxu0 0.0
  %5065 = vmatpush1.msra.mxu0 0.0
  %5066 = vmatprep.subr.mxu0 0.0
  %5067 = vmatpush1.msra.mxu0 0.0
  %5068 = vmatprep.subr.mxu0 0.0
  %5069 = vmatpush1.msra.mxu0 0.0
  %5070 = vmatprep.subr.mxu0 0.0
  %5071 = vmatpush1.msra.mxu0 0.0
  %5072 = vmatprep.subr.mxu0 0.0
  %5073 = vmatpush1.msra.mxu0 0.0
  %5074 = vmatprep.mubr.f32.mxu0 0.0
  %5075 = vmatmul.mubr.f32.gmra.mrb[0].mxu0 %v5008
  %v5076 = vpop.f32.mrb[0].mxu0
  %v5077 = vadd.f32 0.0, %v5076
  %v5078 = vpop.f32.mrb[0].mxu0
  %v5079 = vadd.f32 0.0, %v5078
  %5080 = vdwg.mxu0
  %5081 = vmatprep.subr.mxu0 %v4997
  %5082 = vmatpush1.msra.mxu0 %v4996
  %5083 = vmatprep.subr.mxu0 0.0
  %5084 = vmatpush1.msra.mxu0 0.0
  %5085 = vmatprep.subr.mxu0 0.0
  %5086 = vmatpush1.msra.mxu0 0.0
  %5087 = vmatprep.subr.mxu0 0.0
  %5088 = vmatpush1.msra.mxu0 0.0
  %5089 = vmatprep.subr.mxu0 0.0
  %5090 = vmatpush1.msra.mxu0 0.0
  %5091 = vmatprep.subr.mxu0 0.0
  %5092 = vmatpush1.msra.mxu0 0.0
  %5093 = vmatprep.subr.mxu0 0.0
  %5094 = vmatpush1.msra.mxu0 0.0
  %5095 = vmatprep.subr.mxu0 0.0
  %5096 = vmatpush1.msra.mxu0 0.0
  %5097 = vmatprep.subr.mxu0 0.0
  %5098 = vmatpush1.msra.mxu0 0.0
  %5099 = vmatprep.subr.mxu0 0.0
  %5100 = vmatpush1.msra.mxu0 0.0
  %5101 = vmatprep.subr.mxu0 0.0
  %5102 = vmatpush1.msra.mxu0 0.0
  %5103 = vmatprep.subr.mxu0 0.0
  %5104 = vmatpush1.msra.mxu0 0.0
  %5105 = vmatprep.subr.mxu0 0.0
  %5106 = vmatpush1.msra.mxu0 0.0
  %5107 = vmatprep.subr.mxu0 0.0
  %5108 = vmatpush1.msra.mxu0 0.0
  %5109 = vmatprep.subr.mxu0 0.0
  %5110 = vmatpush1.msra.mxu0 0.0
  %5111 = vmatprep.subr.mxu0 0.0
  %5112 = vmatpush1.msra.mxu0 0.0
  %5113 = vmatprep.subr.mxu0 0.0
  %5114 = vmatpush1.msra.mxu0 0.0
  %5115 = vmatprep.subr.mxu0 0.0
  %5116 = vmatpush1.msra.mxu0 0.0
  %5117 = vmatprep.subr.mxu0 0.0
  %5118 = vmatpush1.msra.mxu0 0.0
  %5119 = vmatprep.subr.mxu0 0.0
  %5120 = vmatpush1.msra.mxu0 0.0
  %5121 = vmatprep.subr.mxu0 0.0
  %5122 = vmatpush1.msra.mxu0 0.0
  %5123 = vmatprep.subr.mxu0 0.0
  %5124 = vmatpush1.msra.mxu0 0.0
  %5125 = vmatprep.subr.mxu0 0.0
  %5126 = vmatpush1.msra.mxu0 0.0
  %5127 = vmatprep.subr.mxu0 0.0
  %5128 = vmatpush1.msra.mxu0 0.0
  %5129 = vmatprep.subr.mxu0 0.0
  %5130 = vmatpush1.msra.mxu0 0.0
  %5131 = vmatprep.subr.mxu0 0.0
  %5132 = vmatpush1.msra.mxu0 0.0
  %5133 = vmatprep.subr.mxu0 0.0
  %5134 = vmatpush1.msra.mxu0 0.0
  %5135 = vmatprep.subr.mxu0 0.0
  %5136 = vmatpush1.msra.mxu0 0.0
  %5137 = vmatprep.subr.mxu0 0.0
  %5138 = vmatpush1.msra.mxu0 0.0
  %5139 = vmatprep.subr.mxu0 0.0
  %5140 = vmatpush1.msra.mxu0 0.0
  %5141 = vmatprep.subr.mxu0 0.0
  %5142 = vmatpush1.msra.mxu0 0.0
  %5143 = vmatprep.subr.mxu0 0.0
  %5144 = vmatpush1.msra.mxu0 0.0
  %5145 = vmatprep.mubr.f32.mxu0 0.0
  %5146 = vmatmul.mubr.f32.gmra.mrb[0].mxu0 %v5008
  %v5147 = vpop.f32.mrb[0].mxu0
  %v5148 = vadd.f32 0.0, %v5147
  %v5149 = vpop.f32.mrb[0].mxu0
  %5150 = vdwg.mxu0
  %5151 = vmatprep.subr.mxu0 %v4999
  %5152 = vmatpush1.msra.mxu0 %v4998
  %5153 = vmatprep.subr.mxu0 0.0
  %5154 = vmatpush1.msra.mxu0 0.0
  %5155 = vmatprep.subr.mxu0 0.0
  %5156 = vmatpush1.msra.mxu0 0.0
  %5157 = vmatprep.subr.mxu0 0.0
  %5158 = vmatpush1.msra.mxu0 0.0
  %5159 = vmatprep.subr.mxu0 0.0
  %5160 = vmatpush1.msra.mxu0 0.0
  %5161 = vmatprep.subr.mxu0 0.0
  %5162 = vmatpush1.msra.mxu0 0.0
  %5163 = vmatprep.subr.mxu0 0.0
  %5164 = vmatpush1.msra.mxu0 0.0
  %5165 = vmatprep.subr.mxu0 0.0
  %5166 = vmatpush1.msra.mxu0 0.0
  %5167 = vmatprep.subr.mxu0 0.0
  %5168 = vmatpush1.msra.mxu0 0.0
  %5169 = vmatprep.subr.mxu0 0.0
  %5170 = vmatpush1.msra.mxu0 0.0
  %5171 = vmatprep.subr.mxu0 0.0
  %5172 = vmatpush1.msra.mxu0 0.0
  %5173 = vmatprep.subr.mxu0 0.0
  %5174 = vmatpush1.msra.mxu0 0.0
  %5175 = vmatprep.subr.mxu0 0.0
  %5176 = vmatpush1.msra.mxu0 0.0
  %5177 = vmatprep.subr.mxu0 0.0
  %5178 = vmatpush1.msra.mxu0 0.0
  %5179 = vmatprep.subr.mxu0 0.0
  %5180 = vmatpush1.msra.mxu0 0.0
  %5181 = vmatprep.subr.mxu0 0.0
  %5182 = vmatpush1.msra.mxu0 0.0
  %5183 = vmatprep.subr.mxu0 0.0
  %5184 = vmatpush1.msra.mxu0 0.0
  %5185 = vmatprep.subr.mxu0 0.0
  %5186 = vmatpush1.msra.mxu0 0.0
  %5187 = vmatprep.subr.mxu0 0.0
  %5188 = vmatpush1.msra.mxu0 0.0
  %5189 = vmatprep.subr.mxu0 0.0
  %5190 = vmatpush1.msra.mxu0 0.0
  %5191 = vmatprep.subr.mxu0 0.0
  %5192 = vmatpush1.msra.mxu0 0.0
  %5193 = vmatprep.subr.mxu0 0.0
  %5194 = vmatpush1.msra.mxu0 0.0
  %5195 = vmatprep.subr.mxu0 0.0
  %5196 = vmatpush1.msra.mxu0 0.0
  %5197 = vmatprep.subr.mxu0 0.0
  %5198 = vmatpush1.msra.mxu0 0.0
  %5199 = vmatprep.subr.mxu0 0.0
  %5200 = vmatpush1.msra.mxu0 0.0
  %5201 = vmatprep.subr.mxu0 0.0
  %5202 = vmatpush1.msra.mxu0 0.0
  %5203 = vmatprep.subr.mxu0 0.0
  %5204 = vmatpush1.msra.mxu0 0.0
  %5205 = vmatprep.subr.mxu0 0.0
  %5206 = vmatpush1.msra.mxu0 0.0
  %5207 = vmatprep.subr.mxu0 0.0
  %5208 = vmatpush1.msra.mxu0 0.0
  %5209 = vmatprep.subr.mxu0 0.0
  %5210 = vmatpush1.msra.mxu0 0.0
  %5211 = vmatprep.subr.mxu0 0.0
  %5212 = vmatpush1.msra.mxu0 0.0
  %5213 = vmatprep.subr.mxu0 0.0
  %5214 = vmatpush1.msra.mxu0 0.0
  %5215 = vmatprep.mubr.f32.mxu0 0.0
  %5216 = vmatmul.mubr.f32.gmra.mrb[0].mxu0 %v5008
  %v5217 = vpop.f32.mrb[0].mxu0
  %v5218 = vadd.f32 0.0, %v5217
  %v5219 = vpop.f32.mrb[0].mxu0
  %v5220 = vadd.f32 0.0, %v5219
  %5221 = vdwg.mxu0
  %5222 = vmatprep.subr.mxu0 0.0
  %5223 = vmatpush1.msra.mxu0 %v4993
  %5224 = vmatprep.subr.mxu0 0.0
  %5225 = vmatpush1.msra.mxu0 0.0
  %5226 = vmatprep.subr.mxu0 0.0
  %5227 = vmatpush1.msra.mxu0 0.0
  %5228 = vmatprep.subr.mxu0 0.0
  %5229 = vmatpush1.msra.mxu0 0.0
  %5230 = vmatprep.subr.mxu0 0.0
  %5231 = vmatpush1.msra.mxu0 0.0
  %5232 = vmatprep.subr.mxu0 0.0
  %5233 = vmatpush1.msra.mxu0 0.0
  %5234 = vmatprep.subr.mxu0 0.0
  %5235 = vmatpush1.msra.mxu0 0.0
  %5236 = vmatprep.subr.mxu0 0.0
  %5237 = vmatpush1.msra.mxu0 0.0
  %5238 = vmatprep.subr.mxu0 0.0
  %5239 = vmatpush1.msra.mxu0 0.0
  %5240 = vmatprep.subr.mxu0 0.0
  %5241 = vmatpush1.msra.mxu0 0.0
  %5242 = vmatprep.subr.mxu0 0.0
  %5243 = vmatpush1.msra.mxu0 0.0
  %5244 = vmatprep.subr.mxu0 0.0
  %5245 = vmatpush1.msra.mxu0 0.0
  %5246 = vmatprep.subr.mxu0 0.0
  %5247 = vmatpush1.msra.mxu0 0.0
  %5248 = vmatprep.subr.mxu0 0.0
  %5249 = vmatpush1.msra.mxu0 0.0
  %5250 = vmatprep.subr.mxu0 0.0
  %5251 = vmatpush1.msra.mxu0 0.0
  %5252 = vmatprep.subr.mxu0 0.0
  %5253 = vmatpush1.msra.mxu0 0.0
  %5254 = vmatprep.subr.mxu0 0.0
  %5255 = vmatpush1.msra.mxu0 0.0
  %5256 = vmatprep.subr.mxu0 0.0
  %5257 = vmatpush1.msra.mxu0 0.0
  %5258 = vmatprep.subr.mxu0 0.0
  %5259 = vmatpush1.msra.mxu0 0.0
  %5260 = vmatprep.subr.mxu0 0.0
  %5261 = vmatpush1.msra.mxu0 0.0
  %5262 = vmatprep.subr.mxu0 0.0
  %5263 = vmatpush1.msra.mxu0 0.0
  %5264 = vmatprep.subr.mxu0 0.0
  %5265 = vmatpush1.msra.mxu0 0.0
  %5266 = vmatprep.subr.mxu0 0.0
  %5267 = vmatpush1.msra.mxu0 0.0
  %5268 = vmatprep.subr.mxu0 0.0
  %5269 = vmatpush1.msra.mxu0 0.0
  %5270 = vmatprep.subr.mxu0 0.0
  %5271 = vmatpush1.msra.mxu0 0.0
  %5272 = vmatprep.subr.mxu0 0.0
  %5273 = vmatpush1.msra.mxu0 0.0
  %5274 = vmatprep.subr.mxu0 0.0
  %5275 = vmatpush1.msra.mxu0 0.0
  %5276 = vmatprep.subr.mxu0 0.0
  %5277 = vmatpush1.msra.mxu0 0.0
  %5278 = vmatprep.subr.mxu0 0.0
  %5279 = vmatpush1.msra.mxu0 0.0
  %5280 = vmatprep.subr.mxu0 0.0
  %5281 = vmatpush1.msra.mxu0 0.0
  %5282 = vmatprep.subr.mxu0 0.0
  %5283 = vmatpush1.msra.mxu0 0.0
  %5284 = vmatprep.subr.mxu0 0.0
  %5285 = vmatpush1.msra.mxu0 0.0
  %5286 = vmatprep.mubr.f32.mxu0 0.0
  %5287 = vmatmul.mubr.f32.gmra.mrb[0].mxu0 %v5008
  %v5288 = vpop.f32.mrb[0].mxu0
  %v5289 = vadd.f32 0.0, %v5288
  %v5290 = vpop.f32.mrb[0].mxu0
  %5291 = vdwg.mxu0
  %v5292 = vadd.f32 %v4972, %v5077
  %v5293 = vadd.f32 %v4973, %v5079
  %v5294 = vadd.f32 %v4974, %v5148
  %v5295 = vadd.f32 %v4975, %v5218
  %v5296 = vadd.f32 %v4976, %v5220
  %v5297 = vadd.f32 %v4977, %v5289
  %s5298 = scalar_lea.vmem %s3, 56
  %v5299 = vld [vmem:[%s5298] sm:$0xff]
  %5300 = vrot.lane.b32.xlu0 %v3070, 110
  %v5301 = vpop.permute.xlu0 %5300
  %5302 = vrot.lane.b32.xlu0 %v3071, 110
  %v5303 = vpop.permute.xlu0 %5302
  %5304 = vrot.lane.b32.xlu0 %v3072, 110
  %v5305 = vpop.permute.xlu0 %5304
  %5306 = vrot.lane.b32.xlu0 %v3073, 110
  %v5307 = vpop.permute.xlu0 %5306
  %5308 = vrot.lane.b32.xlu0 %v3074, 110
  %v5309 = vpop.permute.xlu0 %5308
  %5310 = vrot.lane.b32.xlu0 %v3075, 110
  %v5311 = vpop.permute.xlu0 %5310
  %5312 = vrot.lane.b32.xlu0 %v3076, 110
  %v5313 = vpop.permute.xlu0 %5312
  %v5314 = vsel %vm2346, %v5301, %v5303
  %v5315 = vsel %vm2346, %v5303, %v5305
  %v5316 = vsel %vm2346, %v5305, %v5307
  %v5317 = vsel %vm2346, %v5307, %v5309
  %v5318 = vsel %vm2346, %v5309, %v5311
  %v5319 = vsel %vm2346, %v5311, %v5313
  %v5328 = vsel %vm3118, %v5299, 0
  %5330 = vmatprep.subr.mxu0 %v5315
  %5331 = vmatpush1.msra.mxu0 %v5314
  %5332 = vmatprep.subr.mxu0 0.0
  %5333 = vmatpush1.msra.mxu0 0.0
  %5334 = vmatprep.subr.mxu0 0.0
  %5335 = vmatpush1.msra.mxu0 0.0
  %5336 = vmatprep.subr.mxu0 0.0
  %5337 = vmatpush1.msra.mxu0 0.0
  %5338 = vmatprep.subr.mxu0 0.0
  %5339 = vmatpush1.msra.mxu0 0.0
  %5340 = vmatprep.subr.mxu0 0.0
  %5341 = vmatpush1.msra.mxu0 0.0
  %5342 = vmatprep.subr.mxu0 0.0
  %5343 = vmatpush1.msra.mxu0 0.0
  %5344 = vmatprep.subr.mxu0 0.0
  %5345 = vmatpush1.msra.mxu0 0.0
  %5346 = vmatprep.subr.mxu0 0.0
  %5347 = vmatpush1.msra.mxu0 0.0
  %5348 = vmatprep.subr.mxu0 0.0
  %5349 = vmatpush1.msra.mxu0 0.0
  %5350 = vmatprep.subr.mxu0 0.0
  %5351 = vmatpush1.msra.mxu0 0.0
  %5352 = vmatprep.subr.mxu0 0.0
  %5353 = vmatpush1.msra.mxu0 0.0
  %5354 = vmatprep.subr.mxu0 0.0
  %5355 = vmatpush1.msra.mxu0 0.0
  %5356 = vmatprep.subr.mxu0 0.0
  %5357 = vmatpush1.msra.mxu0 0.0
  %5358 = vmatprep.subr.mxu0 0.0
  %5359 = vmatpush1.msra.mxu0 0.0
  %5360 = vmatprep.subr.mxu0 0.0
  %5361 = vmatpush1.msra.mxu0 0.0
  %5362 = vmatprep.subr.mxu0 0.0
  %5363 = vmatpush1.msra.mxu0 0.0
  %5364 = vmatprep.subr.mxu0 0.0
  %5365 = vmatpush1.msra.mxu0 0.0
  %5366 = vmatprep.subr.mxu0 0.0
  %5367 = vmatpush1.msra.mxu0 0.0
  %5368 = vmatprep.subr.mxu0 0.0
  %5369 = vmatpush1.msra.mxu0 0.0
  %5370 = vmatprep.subr.mxu0 0.0
  %5371 = vmatpush1.msra.mxu0 0.0
  %5372 = vmatprep.subr.mxu0 0.0
  %5373 = vmatpush1.msra.mxu0 0.0
  %5374 = vmatprep.subr.mxu0 0.0
  %5375 = vmatpush1.msra.mxu0 0.0
  %5376 = vmatprep.subr.mxu0 0.0
  %5377 = vmatpush1.msra.mxu0 0.0
  %5378 = vmatprep.subr.mxu0 0.0
  %5379 = vmatpush1.msra.mxu0 0.0
  %5380 = vmatprep.subr.mxu0 0.0
  %5381 = vmatpush1.msra.mxu0 0.0
  %5382 = vmatprep.subr.mxu0 0.0
  %5383 = vmatpush1.msra.mxu0 0.0
  %5384 = vmatprep.subr.mxu0 0.0
  %5385 = vmatpush1.msra.mxu0 0.0
  %5386 = vmatprep.subr.mxu0 0.0
  %5387 = vmatpush1.msra.mxu0 0.0
  %5388 = vmatprep.subr.mxu0 0.0
  %5389 = vmatpush1.msra.mxu0 0.0
  %5390 = vmatprep.subr.mxu0 0.0
  %5391 = vmatpush1.msra.mxu0 0.0
  %5392 = vmatprep.subr.mxu0 0.0
  %5393 = vmatpush1.msra.mxu0 0.0
  %5394 = vmatprep.mubr.f32.mxu0 0.0
  %5395 = vmatmul.mubr.f32.gmra.mrb[0].mxu0 %v5328
  %v5396 = vpop.f32.mrb[0].mxu0
  %v5397 = vadd.f32 0.0, %v5396
  %v5398 = vpop.f32.mrb[0].mxu0
  %v5399 = vadd.f32 0.0, %v5398
  %5400 = vdwg.mxu0
  %5401 = vmatprep.subr.mxu0 %v5317
  %5402 = vmatpush1.msra.mxu0 %v5316
  %5403 = vmatprep.subr.mxu0 0.0
  %5404 = vmatpush1.msra.mxu0 0.0
  %5405 = vmatprep.subr.mxu0 0.0
  %5406 = vmatpush1.msra.mxu0 0.0
  %5407 = vmatprep.subr.mxu0 0.0
  %5408 = vmatpush1.msra.mxu0 0.0
  %5409 = vmatprep.subr.mxu0 0.0
  %5410 = vmatpush1.msra.mxu0 0.0
  %5411 = vmatprep.subr.mxu0 0.0
  %5412 = vmatpush1.msra.mxu0 0.0
  %5413 = vmatprep.subr.mxu0 0.0
  %5414 = vmatpush1.msra.mxu0 0.0
  %5415 = vmatprep.subr.mxu0 0.0
  %5416 = vmatpush1.msra.mxu0 0.0
  %5417 = vmatprep.subr.mxu0 0.0
  %5418 = vmatpush1.msra.mxu0 0.0
  %5419 = vmatprep.subr.mxu0 0.0
  %5420 = vmatpush1.msra.mxu0 0.0
  %5421 = vmatprep.subr.mxu0 0.0
  %5422 = vmatpush1.msra.mxu0 0.0
  %5423 = vmatprep.subr.mxu0 0.0
  %5424 = vmatpush1.msra.mxu0 0.0
  %5425 = vmatprep.subr.mxu0 0.0
  %5426 = vmatpush1.msra.mxu0 0.0
  %5427 = vmatprep.subr.mxu0 0.0
  %5428 = vmatpush1.msra.mxu0 0.0
  %5429 = vmatprep.subr.mxu0 0.0
  %5430 = vmatpush1.msra.mxu0 0.0
  %5431 = vmatprep.subr.mxu0 0.0
  %5432 = vmatpush1.msra.mxu0 0.0
  %5433 = vmatprep.subr.mxu0 0.0
  %5434 = vmatpush1.msra.mxu0 0.0
  %5435 = vmatprep.subr.mxu0 0.0
  %5436 = vmatpush1.msra.mxu0 0.0
  %5437 = vmatprep.subr.mxu0 0.0
  %5438 = vmatpush1.msra.mxu0 0.0
  %5439 = vmatprep.subr.mxu0 0.0
  %5440 = vmatpush1.msra.mxu0 0.0
  %5441 = vmatprep.subr.mxu0 0.0
  %5442 = vmatpush1.msra.mxu0 0.0
  %5443 = vmatprep.subr.mxu0 0.0
  %5444 = vmatpush1.msra.mxu0 0.0
  %5445 = vmatprep.subr.mxu0 0.0
  %5446 = vmatpush1.msra.mxu0 0.0
  %5447 = vmatprep.subr.mxu0 0.0
  %5448 = vmatpush1.msra.mxu0 0.0
  %5449 = vmatprep.subr.mxu0 0.0
  %5450 = vmatpush1.msra.mxu0 0.0
  %5451 = vmatprep.subr.mxu0 0.0
  %5452 = vmatpush1.msra.mxu0 0.0
  %5453 = vmatprep.subr.mxu0 0.0
  %5454 = vmatpush1.msra.mxu0 0.0
  %5455 = vmatprep.subr.mxu0 0.0
  %5456 = vmatpush1.msra.mxu0 0.0
  %5457 = vmatprep.subr.mxu0 0.0
  %5458 = vmatpush1.msra.mxu0 0.0
  %5459 = vmatprep.subr.mxu0 0.0
  %5460 = vmatpush1.msra.mxu0 0.0
  %5461 = vmatprep.subr.mxu0 0.0
  %5462 = vmatpush1.msra.mxu0 0.0
  %5463 = vmatprep.subr.mxu0 0.0
  %5464 = vmatpush1.msra.mxu0 0.0
  %5465 = vmatprep.mubr.f32.mxu0 0.0
  %5466 = vmatmul.mubr.f32.gmra.mrb[0].mxu0 %v5328
  %v5467 = vpop.f32.mrb[0].mxu0
  %v5468 = vadd.f32 0.0, %v5467
  %v5469 = vpop.f32.mrb[0].mxu0
  %5470 = vdwg.mxu0
  %5471 = vmatprep.subr.mxu0 %v5319
  %5472 = vmatpush1.msra.mxu0 %v5318
  %5473 = vmatprep.subr.mxu0 0.0
  %5474 = vmatpush1.msra.mxu0 0.0
  %5475 = vmatprep.subr.mxu0 0.0
  %5476 = vmatpush1.msra.mxu0 0.0
  %5477 = vmatprep.subr.mxu0 0.0
  %5478 = vmatpush1.msra.mxu0 0.0
  %5479 = vmatprep.subr.mxu0 0.0
  %5480 = vmatpush1.msra.mxu0 0.0
  %5481 = vmatprep.subr.mxu0 0.0
  %5482 = vmatpush1.msra.mxu0 0.0
  %5483 = vmatprep.subr.mxu0 0.0
  %5484 = vmatpush1.msra.mxu0 0.0
  %5485 = vmatprep.subr.mxu0 0.0
  %5486 = vmatpush1.msra.mxu0 0.0
  %5487 = vmatprep.subr.mxu0 0.0
  %5488 = vmatpush1.msra.mxu0 0.0
  %5489 = vmatprep.subr.mxu0 0.0
  %5490 = vmatpush1.msra.mxu0 0.0
  %5491 = vmatprep.subr.mxu0 0.0
  %5492 = vmatpush1.msra.mxu0 0.0
  %5493 = vmatprep.subr.mxu0 0.0
  %5494 = vmatpush1.msra.mxu0 0.0
  %5495 = vmatprep.subr.mxu0 0.0
  %5496 = vmatpush1.msra.mxu0 0.0
  %5497 = vmatprep.subr.mxu0 0.0
  %5498 = vmatpush1.msra.mxu0 0.0
  %5499 = vmatprep.subr.mxu0 0.0
  %5500 = vmatpush1.msra.mxu0 0.0
  %5501 = vmatprep.subr.mxu0 0.0
  %5502 = vmatpush1.msra.mxu0 0.0
  %5503 = vmatprep.subr.mxu0 0.0
  %5504 = vmatpush1.msra.mxu0 0.0
  %5505 = vmatprep.subr.mxu0 0.0
  %5506 = vmatpush1.msra.mxu0 0.0
  %5507 = vmatprep.subr.mxu0 0.0
  %5508 = vmatpush1.msra.mxu0 0.0
  %5509 = vmatprep.subr.mxu0 0.0
  %5510 = vmatpush1.msra.mxu0 0.0
  %5511 = vmatprep.subr.mxu0 0.0
  %5512 = vmatpush1.msra.mxu0 0.0
  %5513 = vmatprep.subr.mxu0 0.0
  %5514 = vmatpush1.msra.mxu0 0.0
  %5515 = vmatprep.subr.mxu0 0.0
  %5516 = vmatpush1.msra.mxu0 0.0
  %5517 = vmatprep.subr.mxu0 0.0
  %5518 = vmatpush1.msra.mxu0 0.0
  %5519 = vmatprep.subr.mxu0 0.0
  %5520 = vmatpush1.msra.mxu0 0.0
  %5521 = vmatprep.subr.mxu0 0.0
  %5522 = vmatpush1.msra.mxu0 0.0
  %5523 = vmatprep.subr.mxu0 0.0
  %5524 = vmatpush1.msra.mxu0 0.0
  %5525 = vmatprep.subr.mxu0 0.0
  %5526 = vmatpush1.msra.mxu0 0.0
  %5527 = vmatprep.subr.mxu0 0.0
  %5528 = vmatpush1.msra.mxu0 0.0
  %5529 = vmatprep.subr.mxu0 0.0
  %5530 = vmatpush1.msra.mxu0 0.0
  %5531 = vmatprep.subr.mxu0 0.0
  %5532 = vmatpush1.msra.mxu0 0.0
  %5533 = vmatprep.subr.mxu0 0.0
  %5534 = vmatpush1.msra.mxu0 0.0
  %5535 = vmatprep.mubr.f32.mxu0 0.0
  %5536 = vmatmul.mubr.f32.gmra.mrb[0].mxu0 %v5328
  %v5537 = vpop.f32.mrb[0].mxu0
  %v5538 = vadd.f32 0.0, %v5537
  %v5539 = vpop.f32.mrb[0].mxu0
  %v5540 = vadd.f32 0.0, %v5539
  %5541 = vdwg.mxu0
  %5542 = vmatprep.subr.mxu0 0.0
  %5543 = vmatpush1.msra.mxu0 %v5313
  %5544 = vmatprep.subr.mxu0 0.0
  %5545 = vmatpush1.msra.mxu0 0.0
  %5546 = vmatprep.subr.mxu0 0.0
  %5547 = vmatpush1.msra.mxu0 0.0
  %5548 = vmatprep.subr.mxu0 0.0
  %5549 = vmatpush1.msra.mxu0 0.0
  %5550 = vmatprep.subr.mxu0 0.0
  %5551 = vmatpush1.msra.mxu0 0.0
  %5552 = vmatprep.subr.mxu0 0.0
  %5553 = vmatpush1.msra.mxu0 0.0
  %5554 = vmatprep.subr.mxu0 0.0
  %5555 = vmatpush1.msra.mxu0 0.0
  %5556 = vmatprep.subr.mxu0 0.0
  %5557 = vmatpush1.msra.mxu0 0.0
  %5558 = vmatprep.subr.mxu0 0.0
  %5559 = vmatpush1.msra.mxu0 0.0
  %5560 = vmatprep.subr.mxu0 0.0
  %5561 = vmatpush1.msra.mxu0 0.0
  %5562 = vmatprep.subr.mxu0 0.0
  %5563 = vmatpush1.msra.mxu0 0.0
  %5564 = vmatprep.subr.mxu0 0.0
  %5565 = vmatpush1.msra.mxu0 0.0
  %5566 = vmatprep.subr.mxu0 0.0
  %5567 = vmatpush1.msra.mxu0 0.0
  %5568 = vmatprep.subr.mxu0 0.0
  %5569 = vmatpush1.msra.mxu0 0.0
  %5570 = vmatprep.subr.mxu0 0.0
  %5571 = vmatpush1.msra.mxu0 0.0
  %5572 = vmatprep.subr.mxu0 0.0
  %5573 = vmatpush1.msra.mxu0 0.0
  %5574 = vmatprep.subr.mxu0 0.0
  %5575 = vmatpush1.msra.mxu0 0.0
  %5576 = vmatprep.subr.mxu0 0.0
  %5577 = vmatpush1.msra.mxu0 0.0
  %5578 = vmatprep.subr.mxu0 0.0
  %5579 = vmatpush1.msra.mxu0 0.0
  %5580 = vmatprep.subr.mxu0 0.0
  %5581 = vmatpush1.msra.mxu0 0.0
  %5582 = vmatprep.subr.mxu0 0.0
  %5583 = vmatpush1.msra.mxu0 0.0
  %5584 = vmatprep.subr.mxu0 0.0
  %5585 = vmatpush1.msra.mxu0 0.0
  %5586 = vmatprep.subr.mxu0 0.0
  %5587 = vmatpush1.msra.mxu0 0.0
  %5588 = vmatprep.subr.mxu0 0.0
  %5589 = vmatpush1.msra.mxu0 0.0
  %5590 = vmatprep.subr.mxu0 0.0
  %5591 = vmatpush1.msra.mxu0 0.0
  %5592 = vmatprep.subr.mxu0 0.0
  %5593 = vmatpush1.msra.mxu0 0.0
  %5594 = vmatprep.subr.mxu0 0.0
  %5595 = vmatpush1.msra.mxu0 0.0
  %5596 = vmatprep.subr.mxu0 0.0
  %5597 = vmatpush1.msra.mxu0 0.0
  %5598 = vmatprep.subr.mxu0 0.0
  %5599 = vmatpush1.msra.mxu0 0.0
  %5600 = vmatprep.subr.mxu0 0.0
  %5601 = vmatpush1.msra.mxu0 0.0
  %5602 = vmatprep.subr.mxu0 0.0
  %5603 = vmatpush1.msra.mxu0 0.0
  %5604 = vmatprep.subr.mxu0 0.0
  %5605 = vmatpush1.msra.mxu0 0.0
  %5606 = vmatprep.mubr.f32.mxu0 0.0
  %5607 = vmatmul.mubr.f32.gmra.mrb[0].mxu0 %v5328
  %v5608 = vpop.f32.mrb[0].mxu0
  %v5609 = vadd.f32 0.0, %v5608
  %v5610 = vpop.f32.mrb[0].mxu0
  %5611 = vdwg.mxu0
  %v5612 = vadd.f32 %v5292, %v5397
  %v5613 = vadd.f32 %v5293, %v5399
  %v5614 = vadd.f32 %v5294, %v5468
  %v5615 = vadd.f32 %v5295, %v5538
  %v5616 = vadd.f32 %v5296, %v5540
  %v5617 = vadd.f32 %v5297, %v5609
  %s5618 = scalar_lea.vmem %s3, 64
  %v5619 = vld [vmem:[%s5618] sm:$0xff]
  %5620 = vrot.lane.b32.xlu0 %v3070, 109
  %v5621 = vpop.permute.xlu0 %5620
  %5622 = vrot.lane.b32.xlu0 %v3071, 109
  %v5623 = vpop.permute.xlu0 %5622
  %5624 = vrot.lane.b32.xlu0 %v3072, 109
  %v5625 = vpop.permute.xlu0 %5624
  %5626 = vrot.lane.b32.xlu0 %v3073, 109
  %v5627 = vpop.permute.xlu0 %5626
  %5628 = vrot.lane.b32.xlu0 %v3074, 109
  %v5629 = vpop.permute.xlu0 %5628
  %5630 = vrot.lane.b32.xlu0 %v3075, 109
  %v5631 = vpop.permute.xlu0 %5630
  %5632 = vrot.lane.b32.xlu0 %v3076, 109
  %v5633 = vpop.permute.xlu0 %5632
  %v5634 = vsel %vm2674, %v5621, %v5623
  %v5635 = vsel %vm2674, %v5623, %v5625
  %v5636 = vsel %vm2674, %v5625, %v5627
  %v5637 = vsel %vm2674, %v5627, %v5629
  %v5638 = vsel %vm2674, %v5629, %v5631
  %v5639 = vsel %vm2674, %v5631, %v5633
  %v5648 = vsel %vm3118, %v5619, 0
  %5650 = vmatprep.subr.mxu0 %v5635
  %5651 = vmatpush1.msra.mxu0 %v5634
  %5652 = vmatprep.subr.mxu0 0.0
  %5653 = vmatpush1.msra.mxu0 0.0
  %5654 = vmatprep.subr.mxu0 0.0
  %5655 = vmatpush1.msra.mxu0 0.0
  %5656 = vmatprep.subr.mxu0 0.0
  %5657 = vmatpush1.msra.mxu0 0.0
  %5658 = vmatprep.subr.mxu0 0.0
  %5659 = vmatpush1.msra.mxu0 0.0
  %5660 = vmatprep.subr.mxu0 0.0
  %5661 = vmatpush1.msra.mxu0 0.0
  %5662 = vmatprep.subr.mxu0 0.0
  %5663 = vmatpush1.msra.mxu0 0.0
  %5664 = vmatprep.subr.mxu0 0.0
  %5665 = vmatpush1.msra.mxu0 0.0
  %5666 = vmatprep.subr.mxu0 0.0
  %5667 = vmatpush1.msra.mxu0 0.0
  %5668 = vmatprep.subr.mxu0 0.0
  %5669 = vmatpush1.msra.mxu0 0.0
  %5670 = vmatprep.subr.mxu0 0.0
  %5671 = vmatpush1.msra.mxu0 0.0
  %5672 = vmatprep.subr.mxu0 0.0
  %5673 = vmatpush1.msra.mxu0 0.0
  %5674 = vmatprep.subr.mxu0 0.0
  %5675 = vmatpush1.msra.mxu0 0.0
  %5676 = vmatprep.subr.mxu0 0.0
  %5677 = vmatpush1.msra.mxu0 0.0
  %5678 = vmatprep.subr.mxu0 0.0
  %5679 = vmatpush1.msra.mxu0 0.0
  %5680 = vmatprep.subr.mxu0 0.0
  %5681 = vmatpush1.msra.mxu0 0.0
  %5682 = vmatprep.subr.mxu0 0.0
  %5683 = vmatpush1.msra.mxu0 0.0
  %5684 = vmatprep.subr.mxu0 0.0
  %5685 = vmatpush1.msra.mxu0 0.0
  %5686 = vmatprep.subr.mxu0 0.0
  %5687 = vmatpush1.msra.mxu0 0.0
  %5688 = vmatprep.subr.mxu0 0.0
  %5689 = vmatpush1.msra.mxu0 0.0
  %5690 = vmatprep.subr.mxu0 0.0
  %5691 = vmatpush1.msra.mxu0 0.0
  %5692 = vmatprep.subr.mxu0 0.0
  %5693 = vmatpush1.msra.mxu0 0.0
  %5694 = vmatprep.subr.mxu0 0.0
  %5695 = vmatpush1.msra.mxu0 0.0
  %5696 = vmatprep.subr.mxu0 0.0
  %5697 = vmatpush1.msra.mxu0 0.0
  %5698 = vmatprep.subr.mxu0 0.0
  %5699 = vmatpush1.msra.mxu0 0.0
  %5700 = vmatprep.subr.mxu0 0.0
  %5701 = vmatpush1.msra.mxu0 0.0
  %5702 = vmatprep.subr.mxu0 0.0
  %5703 = vmatpush1.msra.mxu0 0.0
  %5704 = vmatprep.subr.mxu0 0.0
  %5705 = vmatpush1.msra.mxu0 0.0
  %5706 = vmatprep.subr.mxu0 0.0
  %5707 = vmatpush1.msra.mxu0 0.0
  %5708 = vmatprep.subr.mxu0 0.0
  %5709 = vmatpush1.msra.mxu0 0.0
  %5710 = vmatprep.subr.mxu0 0.0
  %5711 = vmatpush1.msra.mxu0 0.0
  %5712 = vmatprep.subr.mxu0 0.0
  %5713 = vmatpush1.msra.mxu0 0.0
  %5714 = vmatprep.mubr.f32.mxu0 0.0
  %5715 = vmatmul.mubr.f32.gmra.mrb[0].mxu0 %v5648
  %v5716 = vpop.f32.mrb[0].mxu0
  %v5717 = vadd.f32 0.0, %v5716
  %v5718 = vpop.f32.mrb[0].mxu0
  %v5719 = vadd.f32 0.0, %v5718
  %5720 = vdwg.mxu0
  %5721 = vmatprep.subr.mxu0 %v5637
  %5722 = vmatpush1.msra.mxu0 %v5636
  %5723 = vmatprep.subr.mxu0 0.0
  %5724 = vmatpush1.msra.mxu0 0.0
  %5725 = vmatprep.subr.mxu0 0.0
  %5726 = vmatpush1.msra.mxu0 0.0
  %5727 = vmatprep.subr.mxu0 0.0
  %5728 = vmatpush1.msra.mxu0 0.0
  %5729 = vmatprep.subr.mxu0 0.0
  %5730 = vmatpush1.msra.mxu0 0.0
  %5731 = vmatprep.subr.mxu0 0.0
  %5732 = vmatpush1.msra.mxu0 0.0
  %5733 = vmatprep.subr.mxu0 0.0
  %5734 = vmatpush1.msra.mxu0 0.0
  %5735 = vmatprep.subr.mxu0 0.0
  %5736 = vmatpush1.msra.mxu0 0.0
  %5737 = vmatprep.subr.mxu0 0.0
  %5738 = vmatpush1.msra.mxu0 0.0
  %5739 = vmatprep.subr.mxu0 0.0
  %5740 = vmatpush1.msra.mxu0 0.0
  %5741 = vmatprep.subr.mxu0 0.0
  %5742 = vmatpush1.msra.mxu0 0.0
  %5743 = vmatprep.subr.mxu0 0.0
  %5744 = vmatpush1.msra.mxu0 0.0
  %5745 = vmatprep.subr.mxu0 0.0
  %5746 = vmatpush1.msra.mxu0 0.0
  %5747 = vmatprep.subr.mxu0 0.0
  %5748 = vmatpush1.msra.mxu0 0.0
  %5749 = vmatprep.subr.mxu0 0.0
  %5750 = vmatpush1.msra.mxu0 0.0
  %5751 = vmatprep.subr.mxu0 0.0
  %5752 = vmatpush1.msra.mxu0 0.0
  %5753 = vmatprep.subr.mxu0 0.0
  %5754 = vmatpush1.msra.mxu0 0.0
  %5755 = vmatprep.subr.mxu0 0.0
  %5756 = vmatpush1.msra.mxu0 0.0
  %5757 = vmatprep.subr.mxu0 0.0
  %5758 = vmatpush1.msra.mxu0 0.0
  %5759 = vmatprep.subr.mxu0 0.0
  %5760 = vmatpush1.msra.mxu0 0.0
  %5761 = vmatprep.subr.mxu0 0.0
  %5762 = vmatpush1.msra.mxu0 0.0
  %5763 = vmatprep.subr.mxu0 0.0
  %5764 = vmatpush1.msra.mxu0 0.0
  %5765 = vmatprep.subr.mxu0 0.0
  %5766 = vmatpush1.msra.mxu0 0.0
  %5767 = vmatprep.subr.mxu0 0.0
  %5768 = vmatpush1.msra.mxu0 0.0
  %5769 = vmatprep.subr.mxu0 0.0
  %5770 = vmatpush1.msra.mxu0 0.0
  %5771 = vmatprep.subr.mxu0 0.0
  %5772 = vmatpush1.msra.mxu0 0.0
  %5773 = vmatprep.subr.mxu0 0.0
  %5774 = vmatpush1.msra.mxu0 0.0
  %5775 = vmatprep.subr.mxu0 0.0
  %5776 = vmatpush1.msra.mxu0 0.0
  %5777 = vmatprep.subr.mxu0 0.0
  %5778 = vmatpush1.msra.mxu0 0.0
  %5779 = vmatprep.subr.mxu0 0.0
  %5780 = vmatpush1.msra.mxu0 0.0
  %5781 = vmatprep.subr.mxu0 0.0
  %5782 = vmatpush1.msra.mxu0 0.0
  %5783 = vmatprep.subr.mxu0 0.0
  %5784 = vmatpush1.msra.mxu0 0.0
  %5785 = vmatprep.mubr.f32.mxu0 0.0
  %5786 = vmatmul.mubr.f32.gmra.mrb[0].mxu0 %v5648
  %v5787 = vpop.f32.mrb[0].mxu0
  %v5788 = vadd.f32 0.0, %v5787
  %v5789 = vpop.f32.mrb[0].mxu0
  %5790 = vdwg.mxu0
  %5791 = vmatprep.subr.mxu0 %v5639
  %5792 = vmatpush1.msra.mxu0 %v5638
  %5793 = vmatprep.subr.mxu0 0.0
  %5794 = vmatpush1.msra.mxu0 0.0
  %5795 = vmatprep.subr.mxu0 0.0
  %5796 = vmatpush1.msra.mxu0 0.0
  %5797 = vmatprep.subr.mxu0 0.0
  %5798 = vmatpush1.msra.mxu0 0.0
  %5799 = vmatprep.subr.mxu0 0.0
  %5800 = vmatpush1.msra.mxu0 0.0
  %5801 = vmatprep.subr.mxu0 0.0
  %5802 = vmatpush1.msra.mxu0 0.0
  %5803 = vmatprep.subr.mxu0 0.0
  %5804 = vmatpush1.msra.mxu0 0.0
  %5805 = vmatprep.subr.mxu0 0.0
  %5806 = vmatpush1.msra.mxu0 0.0
  %5807 = vmatprep.subr.mxu0 0.0
  %5808 = vmatpush1.msra.mxu0 0.0
  %5809 = vmatprep.subr.mxu0 0.0
  %5810 = vmatpush1.msra.mxu0 0.0
  %5811 = vmatprep.subr.mxu0 0.0
  %5812 = vmatpush1.msra.mxu0 0.0
  %5813 = vmatprep.subr.mxu0 0.0
  %5814 = vmatpush1.msra.mxu0 0.0
  %5815 = vmatprep.subr.mxu0 0.0
  %5816 = vmatpush1.msra.mxu0 0.0
  %5817 = vmatprep.subr.mxu0 0.0
  %5818 = vmatpush1.msra.mxu0 0.0
  %5819 = vmatprep.subr.mxu0 0.0
  %5820 = vmatpush1.msra.mxu0 0.0
  %5821 = vmatprep.subr.mxu0 0.0
  %5822 = vmatpush1.msra.mxu0 0.0
  %5823 = vmatprep.subr.mxu0 0.0
  %5824 = vmatpush1.msra.mxu0 0.0
  %5825 = vmatprep.subr.mxu0 0.0
  %5826 = vmatpush1.msra.mxu0 0.0
  %5827 = vmatprep.subr.mxu0 0.0
  %5828 = vmatpush1.msra.mxu0 0.0
  %5829 = vmatprep.subr.mxu0 0.0
  %5830 = vmatpush1.msra.mxu0 0.0
  %5831 = vmatprep.subr.mxu0 0.0
  %5832 = vmatpush1.msra.mxu0 0.0
  %5833 = vmatprep.subr.mxu0 0.0
  %5834 = vmatpush1.msra.mxu0 0.0
  %5835 = vmatprep.subr.mxu0 0.0
  %5836 = vmatpush1.msra.mxu0 0.0
  %5837 = vmatprep.subr.mxu0 0.0
  %5838 = vmatpush1.msra.mxu0 0.0
  %5839 = vmatprep.subr.mxu0 0.0
  %5840 = vmatpush1.msra.mxu0 0.0
  %5841 = vmatprep.subr.mxu0 0.0
  %5842 = vmatpush1.msra.mxu0 0.0
  %5843 = vmatprep.subr.mxu0 0.0
  %5844 = vmatpush1.msra.mxu0 0.0
  %5845 = vmatprep.subr.mxu0 0.0
  %5846 = vmatpush1.msra.mxu0 0.0
  %5847 = vmatprep.subr.mxu0 0.0
  %5848 = vmatpush1.msra.mxu0 0.0
  %5849 = vmatprep.subr.mxu0 0.0
  %5850 = vmatpush1.msra.mxu0 0.0
  %5851 = vmatprep.subr.mxu0 0.0
  %5852 = vmatpush1.msra.mxu0 0.0
  %5853 = vmatprep.subr.mxu0 0.0
  %5854 = vmatpush1.msra.mxu0 0.0
  %5855 = vmatprep.mubr.f32.mxu0 0.0
  %5856 = vmatmul.mubr.f32.gmra.mrb[0].mxu0 %v5648
  %v5857 = vpop.f32.mrb[0].mxu0
  %v5858 = vadd.f32 0.0, %v5857
  %v5859 = vpop.f32.mrb[0].mxu0
  %v5860 = vadd.f32 0.0, %v5859
  %5861 = vdwg.mxu0
  %5862 = vmatprep.subr.mxu0 0.0
  %5863 = vmatpush1.msra.mxu0 %v5633
  %5864 = vmatprep.subr.mxu0 0.0
  %5865 = vmatpush1.msra.mxu0 0.0
  %5866 = vmatprep.subr.mxu0 0.0
  %5867 = vmatpush1.msra.mxu0 0.0
  %5868 = vmatprep.subr.mxu0 0.0
  %5869 = vmatpush1.msra.mxu0 0.0
  %5870 = vmatprep.subr.mxu0 0.0
  %5871 = vmatpush1.msra.mxu0 0.0
  %5872 = vmatprep.subr.mxu0 0.0
  %5873 = vmatpush1.msra.mxu0 0.0
  %5874 = vmatprep.subr.mxu0 0.0
  %5875 = vmatpush1.msra.mxu0 0.0
  %5876 = vmatprep.subr.mxu0 0.0
  %5877 = vmatpush1.msra.mxu0 0.0
  %5878 = vmatprep.subr.mxu0 0.0
  %5879 = vmatpush1.msra.mxu0 0.0
  %5880 = vmatprep.subr.mxu0 0.0
  %5881 = vmatpush1.msra.mxu0 0.0
  %5882 = vmatprep.subr.mxu0 0.0
  %5883 = vmatpush1.msra.mxu0 0.0
  %5884 = vmatprep.subr.mxu0 0.0
  %5885 = vmatpush1.msra.mxu0 0.0
  %5886 = vmatprep.subr.mxu0 0.0
  %5887 = vmatpush1.msra.mxu0 0.0
  %5888 = vmatprep.subr.mxu0 0.0
  %5889 = vmatpush1.msra.mxu0 0.0
  %5890 = vmatprep.subr.mxu0 0.0
  %5891 = vmatpush1.msra.mxu0 0.0
  %5892 = vmatprep.subr.mxu0 0.0
  %5893 = vmatpush1.msra.mxu0 0.0
  %5894 = vmatprep.subr.mxu0 0.0
  %5895 = vmatpush1.msra.mxu0 0.0
  %5896 = vmatprep.subr.mxu0 0.0
  %5897 = vmatpush1.msra.mxu0 0.0
  %5898 = vmatprep.subr.mxu0 0.0
  %5899 = vmatpush1.msra.mxu0 0.0
  %5900 = vmatprep.subr.mxu0 0.0
  %5901 = vmatpush1.msra.mxu0 0.0
  %5902 = vmatprep.subr.mxu0 0.0
  %5903 = vmatpush1.msra.mxu0 0.0
  %5904 = vmatprep.subr.mxu0 0.0
  %5905 = vmatpush1.msra.mxu0 0.0
  %5906 = vmatprep.subr.mxu0 0.0
  %5907 = vmatpush1.msra.mxu0 0.0
  %5908 = vmatprep.subr.mxu0 0.0
  %5909 = vmatpush1.msra.mxu0 0.0
  %5910 = vmatprep.subr.mxu0 0.0
  %5911 = vmatpush1.msra.mxu0 0.0
  %5912 = vmatprep.subr.mxu0 0.0
  %5913 = vmatpush1.msra.mxu0 0.0
  %5914 = vmatprep.subr.mxu0 0.0
  %5915 = vmatpush1.msra.mxu0 0.0
  %5916 = vmatprep.subr.mxu0 0.0
  %5917 = vmatpush1.msra.mxu0 0.0
  %5918 = vmatprep.subr.mxu0 0.0
  %5919 = vmatpush1.msra.mxu0 0.0
  %5920 = vmatprep.subr.mxu0 0.0
  %5921 = vmatpush1.msra.mxu0 0.0
  %5922 = vmatprep.subr.mxu0 0.0
  %5923 = vmatpush1.msra.mxu0 0.0
  %5924 = vmatprep.subr.mxu0 0.0
  %5925 = vmatpush1.msra.mxu0 0.0
  %5926 = vmatprep.mubr.f32.mxu0 0.0
  %5927 = vmatmul.mubr.f32.gmra.mrb[0].mxu0 %v5648
  %v5928 = vpop.f32.mrb[0].mxu0
  %v5929 = vadd.f32 0.0, %v5928
  %v5930 = vpop.f32.mrb[0].mxu0
  %5931 = vdwg.mxu0
  %v5932 = vadd.f32 %v5612, %v5717
  %v5933 = vadd.f32 %v5613, %v5719
  %v5934 = vadd.f32 %v5614, %v5788
  %v5935 = vadd.f32 %v5615, %v5858
  %v5936 = vadd.f32 %v5616, %v5860
  %v5937 = vadd.f32 %v5617, %v5929
  %v5938 = vmul.f32 %v5932, %v22
  %v5939 = vmul.f32 %v5933, %v26
  %v5940 = vmul.f32 %v5934, %v30
  %v5941 = vadd.f32 %v5938, %v5939
  %v5942 = vsel %vm2990, %v5940, 0.0
  %v5943 = vadd.f32 %v5941, %v5942
  %5944 = vadd.xlane.f32.xlu0 %v5943
  %v5945 = vpop.xlane.xlu0 %5944
  %v5946 = vmul.f32 %v5945, 0.00390625
  %v5947 = vsub.f32 %v5932, %v5946
  %v5948 = vsub.f32 %v5933, %v5946
  %v5949 = vsub.f32 %v5934, %v5946
  %v5950 = vmul.f32 %v5947, %v22
  %v5951 = vmul.f32 %v5948, %v26
  %v5952 = vmul.f32 %v5949, %v30
  %v5953 = vmul.f32 %v5950, %v5950
  %v5954 = vmul.f32 %v5951, %v5951
  %v5955 = vmul.f32 %v5952, %v5952
  %v5956 = vadd.f32 %v5953, %v5954
  %v5957 = vsel %vm2990, %v5955, 0.0
  %v5958 = vadd.f32 %v5956, %v5957
  %5959 = vadd.xlane.f32.xlu0 %v5958
  %v5960 = vpop.xlane.xlu0 %5959
  %v5961 = vmul.f32 %v5960, 0.00390625
  %v5962 = vadd.f32 %v5961, 1e-05
  %v5963 = vrsqrt.pop %v5962
  %v5964 = vmul.f32 %v5950, %v5963
  %v5965 = vmul.f32 %v5951, %v5963
  %v5966 = vmul.f32 %v5952, %v5963
  %vm5967 = vcmp.ge.f32.partialorder %v5964, 0.0
  %vm5968 = vcmp.ge.f32.partialorder %v5965, 0.0
  %vm5969 = vcmp.ge.f32.partialorder %v5966, 0.0
  %v5970 = vmul.f32 %v5964, 0.2
  %v5971 = vmul.f32 %v5965, 0.2
  %v5972 = vmul.f32 %v5966, 0.2
  %v5973 = vsel %vm5967, %v5964, %v5970
  %v5974 = vsel %vm5968, %v5965, %v5971
  %v5975 = vsel %vm5969, %v5966, %v5972
  %5976 = vst [vmem:[%s4] sm:$0xff] %v5973
  %5977 = vst [vmem:[%s4 + $0x8] sm:$0xff] %v5974
  %5978 = vst.msk [vmem:[%s4 + $0x10] sm:$0xff] %vm2990, %v5975
  %v5979 = vmul.f32 %v5935, %v22
  %v5980 = vmul.f32 %v5936, %v26
  %v5981 = vmul.f32 %v5937, %v30
  %v5982 = vadd.f32 %v5979, %v5980
  %v5983 = vsel %vm2990, %v5981, 0.0
  %v5984 = vadd.f32 %v5982, %v5983
  %5985 = vadd.xlane.f32.xlu0 %v5984
  %v5986 = vpop.xlane.xlu0 %5985
  %v5987 = vmul.f32 %v5986, 0.00390625
  %v5988 = vsub.f32 %v5935, %v5987
  %v5989 = vsub.f32 %v5936, %v5987
  %v5990 = vsub.f32 %v5937, %v5987
  %v5991 = vmul.f32 %v5988, %v22
  %v5992 = vmul.f32 %v5989, %v26
  %v5993 = vmul.f32 %v5990, %v30
  %v5994 = vmul.f32 %v5991, %v5991
  %v5995 = vmul.f32 %v5992, %v5992
  %v5996 = vmul.f32 %v5993, %v5993
  %v5997 = vadd.f32 %v5994, %v5995
  %v5998 = vsel %vm2990, %v5996, 0.0
  %v5999 = vadd.f32 %v5997, %v5998
  %6000 = vadd.xlane.f32.xlu0 %v5999
  %v6001 = vpop.xlane.xlu0 %6000
  %v6002 = vmul.f32 %v6001, 0.00390625
  %v6003 = vadd.f32 %v6002, 1e-05
  %v6004 = vrsqrt.pop %v6003
  %v6005 = vmul.f32 %v5991, %v6004
  %v6006 = vmul.f32 %v5992, %v6004
  %v6007 = vmul.f32 %v5993, %v6004
  %vm6008 = vcmp.ge.f32.partialorder %v6005, 0.0
  %vm6009 = vcmp.ge.f32.partialorder %v6006, 0.0
  %vm6010 = vcmp.ge.f32.partialorder %v6007, 0.0
  %v6011 = vmul.f32 %v6005, 0.2
  %v6012 = vmul.f32 %v6006, 0.2
  %v6013 = vmul.f32 %v6007, 0.2
  %v6014 = vsel %vm6008, %v6005, %v6011
  %v6015 = vsel %vm6009, %v6006, %v6012
  %v6016 = vsel %vm6010, %v6007, %v6013
  %s6017 = scalar_lea.vmem %s4, 24
  %6018 = vst [vmem:[%s6017] sm:$0xff] %v6014
  %6019 = vst [vmem:[%s6017 + $0x8] sm:$0xff] %v6015
  %6020 = vst.msk [vmem:[%s6017 + $0x10] sm:$0xff] %vm2990, %v6016
  // Predicated region
  $region18: #{conv_block.1} parent=0 // pred_check
    _
  $region19: #{conv_block.1} parent=0 // pred_check_branch
    %6022 = sbr.rel (0) target = $region21
  $region20: #{conv_block.1} parent=0 // pred_region
    _
  $region21: #{conv_block.1} parent=0 // pred_fallthru
    _
  // Predicated region
  $region22: #{conv_block.1} parent=0 // pred_check
    _
  $region23: #{conv_block.1} parent=0 // pred_check_branch
    %6024 = sbr.rel (0) target = $region25
  $region24: #{conv_block.1} parent=0 // pred_region
    _
  $region25: #{conv_block.1} parent=0 // pred_fallthru
    _

</llo_original>
